<compile_context>
chip_gen: v6e
topology: v6e:2x2x1
jax: 0.10.0
libtpu: 0.0.40
codegen_flags: <defaults>
</compile_context>

<pallas_src>
import functools

import jax
import jax.numpy as jnp
from jax.experimental import pallas as pl
from jax.experimental.pallas import tpu as pltpu

LN_EPS = 1e-5


def _vq_kernel(x_ref, cb_ref, csq_ref, q_ref, idx_ref, sse_ref, xn_ref, rmin_ref,
               *, n_valid, tm, k_blk):
    i = pl.program_id(0)        # row tile (parallel)
    kk = pl.program_id(1)       # codebook block (arbitrary, innermost)
    nk = pl.num_programs(1)

    # ---- once per row tile (first K block): LayerNorm + running-state init ----
    @pl.when(kk == 0)
    def _init():
        x = x_ref[...].astype(jnp.float32)
        mean = jnp.mean(x, axis=-1, keepdims=True)
        var = jnp.mean((x - mean) ** 2, axis=-1, keepdims=True)
        xn_ref[...] = (x - mean) * jax.lax.rsqrt(var + LN_EPS)
        rmin_ref[...] = jnp.full_like(rmin_ref, jnp.inf)

    xn = xn_ref[...]                                   # (tm, D) f32
    cb = cb_ref[...]                                   # (k_blk, D) f32 or bf16
    c_sq = csq_ref[...]                                # (1, k_blk) f32; padded entries = 1e30

    # ---- squared-L2 distances for this codebook block, bf16 on the MXU ----
    # Contract D of both operands (attention-style A.B^T) -> (tm, k_blk), no transposes.
    dots = jax.lax.dot_general(
        xn.astype(jnp.bfloat16), cb.astype(jnp.bfloat16),
        (((1,), (1,)), ((), ())),
        preferred_element_type=jnp.float32)            # (tm, k_blk) f32 accumulate
    # ||xn||^2 is row-constant -> dropping it leaves the argmin unchanged.
    dist = c_sq - 2.0 * dots                           # (tm, k_blk) f32

    # ---- block-local first-min argmin, then streaming running-argmin update ----
    blk_min = jnp.min(dist, axis=-1, keepdims=True)                   # (tm, 1)
    kiota = jax.lax.broadcasted_iota(jnp.int32, dist.shape, 1)        # lane iota
    big = jnp.iinfo(jnp.int32).max
    blk_arg = jnp.min(jnp.where(dist == blk_min, kiota, big),
                      axis=-1, keepdims=True)                         # (tm, 1) first-min
    improved = blk_min < rmin_ref[...]        # strict < keeps the global first-min tie-break
    idx_ref[...] = jnp.where(improved, blk_arg + kk * k_blk, idx_ref[...])
    rmin_ref[...] = jnp.where(improved, blk_min, rmin_ref[...])

    # ---- gather this block's winners (natural (tm,Kb)x(Kb,D) one-hot matmul) and
    #      overwrite improved rows of the running quantized output (resident across K) ----
    one_hot = (kiota == blk_arg).astype(cb.dtype)                     # (tm, k_blk)
    blk_q = jnp.dot(one_hot, cb, preferred_element_type=jnp.float32)  # (tm, D) f32
    q_new = jnp.where(improved, blk_q, q_ref[...].astype(jnp.float32))
    q_ref[...] = q_new.astype(q_ref.dtype)

    # ---- commitment-loss partial sums (padded rows masked), finalized in the wrapper ----
    @pl.when(kk == nk - 1)
    def _finalize():
        row = jax.lax.broadcasted_iota(jnp.int32, (tm, 1), 0) + i * tm
        err = (q_new - xn) * (row < n_valid).astype(jnp.float32)
        err2 = err * err
        acc = err2[0:8, :]                       # reduce to an (8, D) tile-aligned partial
        for j in range(1, tm // 8):
            acc = acc + err2[j * 8:(j + 1) * 8, :]
        sse_ref[...] = acc[None]


def vquantizer_forward(x, codebook, *, commitment_weight=1.0, tm=256, k_blk=1024,
                       exact_codewords=True):
    """x: (B, N, D) float, codebook: (K, D) float. Returns (quantize, indices, loss).

    exact_codewords=True  -> codebook streamed in f32, gather matmul in f32 (exact codewords).
    exact_codewords=False -> codebook streamed in bf16, both matmuls bf16 (fastest, rounded q).
    """
    b, n, d = x.shape
    k, d2 = codebook.shape
    assert d == d2
    assert tm % 8 == 0, "row tile must be a multiple of 8 sublanes"
    assert k_blk % 128 == 0, "codebook block must be a multiple of 128 lanes"
    bn = b * n

    # Pad rows up to a tile multiple (arbitrary B*N supported).
    num_tiles = int(pl.cdiv(bn, tm))
    bn_pad = num_tiles * tm
    xf = x.reshape(bn, d)
    if bn_pad != bn:
        xf = jnp.pad(xf, ((0, bn_pad - bn), (0, 0)))

    # Pad K up to a multiple of the codebook block; hoist ||c_k||^2 as a lane-dense (1, Kp)
    # row.  Padded codewords get a 1e30 sentinel norm so they can never win the argmin.
    kp0 = ((k + 127) // 128) * 128
    kb = min(k_blk, kp0)
    num_k = int(pl.cdiv(kp0, kb))
    kp = num_k * kb
    cb32 = codebook.astype(jnp.float32)
    c_sq = jnp.sum(cb32 * cb32, axis=-1)[None, :]                  # (1, K) f32
    if kp != k:
        cb32 = jnp.pad(cb32, ((0, kp - k), (0, 0)))
        c_sq = jnp.pad(c_sq, ((0, 0), (0, kp - k)), constant_values=1e30)
    cb_in = cb32 if exact_codewords else cb32.astype(jnp.bfloat16)

    kernel = functools.partial(_vq_kernel, n_valid=bn, tm=tm, k_blk=kb)

    # Explicit scoped-VMEM budget (defaults are only 16/32 MiB); clamp to 64 MiB (v7x).
    x_elt = jnp.dtype(x.dtype).itemsize
    cb_elt = jnp.dtype(cb_in.dtype).itemsize
    vmem_bytes = (
        2 * tm * d * x_elt            # x blocks (double-buffered)
        + 2 * kb * d * cb_elt         # streamed codebook blocks
        + 2 * 8 * kb * 4              # c_sq blocks (sublane-padded)
        + 2 * tm * d * x_elt          # q output blocks
        + 2 * tm * 128 * 4            # idx output blocks (lane-padded)
        + 2 * 8 * d * 4               # sse output blocks
        + tm * d * 4 + tm * 128 * 4   # xn + running-min scratch
        + 6 * tm * kb * 4             # dist / iota / one-hot temporaries
    )
    vmem_limit = int(min(64 * 1024 * 1024, max(32 * 1024 * 1024, vmem_bytes * 3 // 2)))

    q, idx, sse = pl.pallas_call(
        kernel,
        out_shape=(
            jax.ShapeDtypeStruct((bn_pad, d), x.dtype),          # quantized rows
            jax.ShapeDtypeStruct((bn_pad, 1), jnp.int32),        # indices
            jax.ShapeDtypeStruct((num_tiles, 8, d), jnp.float32),  # per-tile SSE partials
        ),
        grid_spec=pltpu.PrefetchScalarGridSpec(
            num_scalar_prefetch=0,
            grid=(num_tiles, num_k),
            in_specs=[
                pl.BlockSpec((tm, d), lambda i, kk: (i, 0)),     # x rows (resident across K)
                pl.BlockSpec((kb, d), lambda i, kk: (kk, 0)),    # streamed codebook block
                pl.BlockSpec((1, kb), lambda i, kk: (0, kk)),    # ||c_k||^2 row (hoisted)
            ],
            out_specs=[
                pl.BlockSpec((tm, d), lambda i, kk: (i, 0)),     # running quantized output
                pl.BlockSpec((tm, 1), lambda i, kk: (i, 0)),     # running argmin indices
                pl.BlockSpec((1, 8, d), lambda i, kk: (i, 0, 0)),
            ],
            scratch_shapes=[
                pltpu.VMEM((tm, d), jnp.float32),                # xn (LayerNorm output)
                pltpu.VMEM((tm, 1), jnp.float32),                # running min distance
            ],
        ),
        compiler_params=pltpu.CompilerParams(
            dimension_semantics=("parallel", "arbitrary"),
            vmem_limit_bytes=vmem_limit),
    )(xf, cb_in, c_sq)

    quantize = q[:bn].reshape(b, n, d)
    indices = idx[:bn, 0].reshape(b, n)
    loss = jnp.sum(sse) * (commitment_weight / float(bn * d))
    return quantize, indices, loss


if __name__ == "__main__":
    key = jax.random.PRNGKey(0)
    kx, kc = jax.random.split(key)

    B, N, D, K = 2, 8, 32, 192            # batch, seq, codebook_dim, codebook_size
    x = jax.random.normal(kx, (B, N, D), dtype=jnp.float32)
    codebook = jax.random.normal(kc, (K, D), dtype=jnp.float32)   # nn.Embedding ~ N(0,1)

    # ---- pure-JAX f32 reference ----
    mean = jnp.mean(x, -1, keepdims=True)
    var = jnp.mean((x - mean) ** 2, -1, keepdims=True)
    xn = (x - mean) * jax.lax.rsqrt(var + LN_EPS)
    dist = (jnp.sum(xn * xn, -1, keepdims=True)
            - 2.0 * jnp.einsum("bnd,kd->bnk", xn, codebook)
            + jnp.sum(codebook * codebook, -1)[None, None, :])
    d_best = jnp.min(dist, axis=-1)
    loss_ref = jnp.mean((codebook[jnp.argmin(dist, -1)] - xn) ** 2)

    def check(q, idx, loss, *, q_atol, loss_atol):
        idx = idx.astype(jnp.int32)
        assert bool(jnp.all((idx >= 0) & (idx < K))), "index out of range"
        # bf16 MXU distances may flip exact near-ties; require near-optimal selections.
        d_sel = jnp.take_along_axis(dist, idx[..., None], axis=-1)[..., 0]
        assert bool(jnp.all(d_sel <= d_best + 0.5)), "selected codeword not (near-)optimal"
        assert jnp.allclose(q, codebook[idx], atol=q_atol), "quantize != selected codeword"
        loss_self = jnp.mean((codebook[idx] - xn) ** 2)
        assert jnp.allclose(loss, loss_self, atol=loss_atol), "loss mismatch"
        assert jnp.allclose(loss, loss_ref, atol=1e-2), "loss far from reference"

    # 1) default tiling (single K block, single row tile, exercises row/codebook padding)
    out = vquantizer_forward(x, codebook)
    jax.block_until_ready(out)
    check(*out, q_atol=1e-4, loss_atol=1e-4)

    # 2) small tiles: exercises streaming running-argmin across 2 K blocks and 2 row tiles
    out = vquantizer_forward(x, codebook, tm=8, k_blk=128)
    jax.block_until_ready(out)
    check(*out, q_atol=1e-4, loss_atol=1e-4)

    # 3) all-bf16 fast path (rounded codeword outputs)
    out = vquantizer_forward(x, codebook, tm=8, k_blk=128, exact_codewords=False)
    jax.block_until_ready(out)
    check(*out, q_atol=5e-2, loss_atol=5e-2)

    print("KERNEL_OK")
</pallas_src>

<mosaic_0001>
module attributes {stable_mosaic.version = 11 : i64} {
  func.func @_vq_kernel(%arg0: i32, %arg1: i32, %arg2: memref<256x32xf32, #tpu.memory_space<vmem>>, %arg3: memref<256x32xf32, #tpu.memory_space<vmem>>, %arg4: memref<1x256xf32, #tpu.memory_space<vmem>>, %arg5: memref<256x32xf32, #tpu.memory_space<vmem>>, %arg6: memref<256x1xi32, #tpu.memory_space<vmem>>, %arg7: memref<1x8x32xf32, #tpu.memory_space<vmem>>, %arg8: memref<256x32xf32, #tpu.memory_space<vmem>>, %arg9: memref<256x1xf32, #tpu.memory_space<vmem>>) attributes {dimension_semantics = [#tpu.dimension_semantics<parallel>, #tpu.dimension_semantics<arbitrary>], iteration_bounds = array<i64: 1, 1>, scalar_prefetch = 0 : i64, scratch_operands = 2 : i64, tpu.core_type = #tpu.core_type<tc>, window_params = [{transform_indices = @transform_0, window_bounds = array<i64: 256, 32>}, {transform_indices = @transform_1, window_bounds = array<i64: 256, 32>}, {transform_indices = @transform_2, window_bounds = array<i64: 1, 256>}, {transform_indices = @transform_3, window_bounds = array<i64: 256, 32>}, {transform_indices = @transform_4, window_bounds = array<i64: 256, 1>}, {transform_indices = @transform_5, window_bounds = array<i64: 1, 8, 32>}]} {
    %c0_i32 = arith.constant 0 : i32
    %0 = arith.cmpi eq, %arg1, %c0_i32 : i32
    %1 = arith.extui %0 : i1 to i32
    %c0_i32_0 = arith.constant 0 : i32
    %2 = arith.cmpi ne, %1, %c0_i32_0 : i32
    scf.if %2 {
      %c0_26 = arith.constant 0 : index
      %c0_27 = arith.constant 0 : index
      %46 = vector.load %arg2[%c0_26, %c0_27] : memref<256x32xf32, #tpu.memory_space<vmem>>, vector<256x32xf32>
      %cst_28 = arith.constant dense<0.000000e+00> : vector<256xf32>
      %47 = vector.multi_reduction <add>, %46, %cst_28 [1] : vector<256x32xf32> to vector<256xf32>
      %48 = vector.shape_cast %47 : vector<256xf32> to vector<256x1xf32>
      %cst_29 = arith.constant 3.200000e+01 : f32
      %49 = vector.broadcast %cst_29 : f32 to vector<256x1xf32>
      %50 = arith.divf %48, %49 : vector<256x1xf32>
      %51 = vector.broadcast %50 : vector<256x1xf32> to vector<256x32xf32>
      %52 = arith.subf %46, %51 : vector<256x32xf32>
      %53 = arith.mulf %52, %52 : vector<256x32xf32>
      %cst_30 = arith.constant dense<0.000000e+00> : vector<256xf32>
      %54 = vector.multi_reduction <add>, %53, %cst_30 [1] : vector<256x32xf32> to vector<256xf32>
      %55 = vector.shape_cast %54 : vector<256xf32> to vector<256x1xf32>
      %cst_31 = arith.constant 3.200000e+01 : f32
      %56 = vector.broadcast %cst_31 : f32 to vector<256x1xf32>
      %57 = arith.divf %55, %56 : vector<256x1xf32>
      %58 = vector.broadcast %50 : vector<256x1xf32> to vector<256x32xf32>
      %59 = arith.subf %46, %58 : vector<256x32xf32>
      %cst_32 = arith.constant 9.99999974E-6 : f32
      %60 = vector.broadcast %cst_32 : f32 to vector<256x1xf32>
      %61 = arith.addf %57, %60 : vector<256x1xf32>
      %62 = math.rsqrt %61 : vector<256x1xf32>
      %63 = vector.broadcast %62 : vector<256x1xf32> to vector<256x32xf32>
      %64 = arith.mulf %59, %63 : vector<256x32xf32>
      %c0_33 = arith.constant 0 : index
      %c0_34 = arith.constant 0 : index
      %65 = vector.load %arg8[%c0_33, %c0_34] : memref<256x32xf32, #tpu.memory_space<vmem>>, vector<256x32xf32>
      tpu.vector_store %arg8[%c0_33, %c0_34], %64 {strides = array<i32>} : memref<256x32xf32, #tpu.memory_space<vmem>>, vector<256x32xf32>,
      %cst_35 = arith.constant 0x7F800000 : f32
      %66 = vector.broadcast %cst_35 : f32 to vector<256x1xf32>
      %c0_36 = arith.constant 0 : index
      %c0_37 = arith.constant 0 : index
      %67 = vector.load %arg9[%c0_36, %c0_37] : memref<256x1xf32, #tpu.memory_space<vmem>>, vector<256x1xf32>
      tpu.vector_store %arg9[%c0_36, %c0_37], %66 {strides = array<i32>} : memref<256x1xf32, #tpu.memory_space<vmem>>, vector<256x1xf32>,
    } else {
    }
    %c0 = arith.constant 0 : index
    %c0_1 = arith.constant 0 : index
    %3 = vector.load %arg8[%c0, %c0_1] : memref<256x32xf32, #tpu.memory_space<vmem>>, vector<256x32xf32>
    %c0_2 = arith.constant 0 : index
    %c0_3 = arith.constant 0 : index
    %4 = vector.load %arg3[%c0_2, %c0_3] : memref<256x32xf32, #tpu.memory_space<vmem>>, vector<256x32xf32>
    %c0_4 = arith.constant 0 : index
    %c0_5 = arith.constant 0 : index
    %5 = vector.load %arg4[%c0_4, %c0_5] : memref<1x256xf32, #tpu.memory_space<vmem>>, vector<1x256xf32>
    %6 = arith.truncf %3 : vector<256x32xf32> to vector<256x32xbf16>
    %7 = arith.truncf %4 : vector<256x32xf32> to vector<256x32xbf16>
    %cst = arith.constant dense<0.000000e+00> : vector<256x256xf32>
    %8 = tpu.matmul %6, %7, %cst {dimension_numbers = #tpu.dot_dimension_numbers<[1], [1], [0], [0], [0, 0, 1, 0], [], []>} : vector<256x32xbf16>, vector<256x32xbf16>, vector<256x256xf32> -> vector<256x256xf32>
    %cst_6 = arith.constant 2.000000e+00 : f32
    %9 = vector.broadcast %cst_6 : f32 to vector<256x256xf32>
    %10 = arith.mulf %9, %8 : vector<256x256xf32>
    %11 = vector.broadcast %5 : vector<1x256xf32> to vector<256x256xf32>
    %12 = arith.subf %11, %10 : vector<256x256xf32>
    %cst_7 = arith.constant dense<0x7F800000> : vector<256xf32>
    %13 = vector.multi_reduction <minimumf>, %12, %cst_7 [1] : vector<256x256xf32> to vector<256xf32>
    %14 = vector.shape_cast %13 : vector<256xf32> to vector<256x1xf32>
    %15 = tpu.iota {dimensions = array<i32: 1>} : vector<256x256xi32>
    %16 = vector.broadcast %14 : vector<256x1xf32> to vector<256x256xf32>
    %17 = arith.cmpf oeq, %12, %16 : vector<256x256xf32>
    %c2147483647_i32 = arith.constant 2147483647 : i32
    %18 = vector.broadcast %c2147483647_i32 : i32 to vector<256x256xi32>
    %19 = arith.select %17, %15, %18 : vector<256x256xi1>, vector<256x256xi32>
    %cst_8 = arith.constant dense<2147483647> : vector<256xi32>
    %20 = vector.multi_reduction <minsi>, %19, %cst_8 [1] : vector<256x256xi32> to vector<256xi32>
    %21 = vector.shape_cast %20 : vector<256xi32> to vector<256x1xi32>
    %c0_9 = arith.constant 0 : index
    %c0_10 = arith.constant 0 : index
    %22 = vector.load %arg9[%c0_9, %c0_10] : memref<256x1xf32, #tpu.memory_space<vmem>>, vector<256x1xf32>
    %23 = arith.cmpf olt, %14, %22 : vector<256x1xf32>
    %c256_i32 = arith.constant 256 : i32
    %24 = arith.muli %arg1, %c256_i32 : i32
    %25 = vector.broadcast %24 : i32 to vector<256x1xi32>
    %26 = arith.addi %21, %25 : vector<256x1xi32>
    %c0_11 = arith.constant 0 : index
    %c0_12 = arith.constant 0 : index
    %27 = vector.load %arg6[%c0_11, %c0_12] : memref<256x1xi32, #tpu.memory_space<vmem>>, vector<256x1xi32>
    %28 = arith.select %23, %26, %27 : vector<256x1xi1>, vector<256x1xi32>
    %c0_13 = arith.constant 0 : index
    %c0_14 = arith.constant 0 : index
    %29 = vector.load %arg6[%c0_13, %c0_14] : memref<256x1xi32, #tpu.memory_space<vmem>>, vector<256x1xi32>
    tpu.vector_store %arg6[%c0_13, %c0_14], %28 {strides = array<i32>} : memref<256x1xi32, #tpu.memory_space<vmem>>, vector<256x1xi32>,
    %c0_15 = arith.constant 0 : index
    %c0_16 = arith.constant 0 : index
    %30 = vector.load %arg9[%c0_15, %c0_16] : memref<256x1xf32, #tpu.memory_space<vmem>>, vector<256x1xf32>
    %31 = arith.select %23, %14, %30 : vector<256x1xi1>, vector<256x1xf32>
    %c0_17 = arith.constant 0 : index
    %c0_18 = arith.constant 0 : index
    %32 = vector.load %arg9[%c0_17, %c0_18] : memref<256x1xf32, #tpu.memory_space<vmem>>, vector<256x1xf32>
    tpu.vector_store %arg9[%c0_17, %c0_18], %31 {strides = array<i32>} : memref<256x1xf32, #tpu.memory_space<vmem>>, vector<256x1xf32>,
    %33 = vector.broadcast %21 : vector<256x1xi32> to vector<256x256xi32>
    %34 = arith.cmpi eq, %15, %33 : vector<256x256xi32>
    %35 = arith.extui %34 : vector<256x256xi1> to vector<256x256xi32>
    %36 = arith.sitofp %35 : vector<256x256xi32> to vector<256x256xf32>
    %cst_19 = arith.constant dense<0.000000e+00> : vector<256x32xf32>
    %37 = tpu.matmul %36, %4, %cst_19 {dimension_numbers = #tpu.dot_dimension_numbers<[1], [0], [0], [1], [0, 0, 1, 1], [], []>} : vector<256x256xf32>, vector<256x32xf32>, vector<256x32xf32> -> vector<256x32xf32>
    %c0_20 = arith.constant 0 : index
    %c0_21 = arith.constant 0 : index
    %38 = vector.load %arg5[%c0_20, %c0_21] : memref<256x32xf32, #tpu.memory_space<vmem>>, vector<256x32xf32>
    %39 = vector.shape_cast %23 : vector<256x1xi1> to vector<256x1xi1>
    %40 = vector.broadcast %39 : vector<256x1xi1> to vector<256x32xi1>
    %41 = arith.select %40, %37, %38 : vector<256x32xi1>, vector<256x32xf32>
    %c0_22 = arith.constant 0 : index
    %c0_23 = arith.constant 0 : index
    %42 = vector.load %arg5[%c0_22, %c0_23] : memref<256x32xf32, #tpu.memory_space<vmem>>, vector<256x32xf32>
    tpu.vector_store %arg5[%c0_22, %c0_23], %41 {strides = array<i32>} : memref<256x32xf32, #tpu.memory_space<vmem>>, vector<256x32xf32>,
    %c0_i32_24 = arith.constant 0 : i32
    %43 = arith.cmpi eq, %arg1, %c0_i32_24 : i32
    %44 = arith.extui %43 : i1 to i32
    %c0_i32_25 = arith.constant 0 : i32
    %45 = arith.cmpi ne, %44, %c0_i32_25 : i32
    scf.if %45 {
      %46 = tpu.iota {dimensions = array<i32: 0>} : vector<256x1xi32>
      %c256_i32_26 = arith.constant 256 : i32
      %47 = arith.muli %arg0, %c256_i32_26 : i32
      %48 = vector.broadcast %47 : i32 to vector<256x1xi32>
      %49 = arith.addi %46, %48 : vector<256x1xi32>
      %50 = arith.subf %41, %3 : vector<256x32xf32>
      %c16_i32 = arith.constant 16 : i32
      %51 = vector.broadcast %c16_i32 : i32 to vector<256x1xi32>
      %52 = arith.cmpi slt, %49, %51 : vector<256x1xi32>
      %53 = arith.extui %52 : vector<256x1xi1> to vector<256x1xi32>
      %54 = arith.sitofp %53 : vector<256x1xi32> to vector<256x1xf32>
      %55 = vector.broadcast %54 : vector<256x1xf32> to vector<256x32xf32>
      %56 = arith.mulf %50, %55 : vector<256x32xf32>
      %57 = arith.mulf %56, %56 : vector<256x32xf32>
      %58 = vector.extract_strided_slice %57 {offsets = [0, 0], sizes = [8, 32], strides = [1, 1]} : vector<256x32xf32> to vector<8x32xf32>
      %59 = vector.extract_strided_slice %57 {offsets = [8, 0], sizes = [8, 32], strides = [1, 1]} : vector<256x32xf32> to vector<8x32xf32>
      %60 = arith.addf %58, %59 : vector<8x32xf32>
      %61 = vector.extract_strided_slice %57 {offsets = [16, 0], sizes = [8, 32], strides = [1, 1]} : vector<256x32xf32> to vector<8x32xf32>
      %62 = arith.addf %60, %61 : vector<8x32xf32>
      %63 = vector.extract_strided_slice %57 {offsets = [24, 0], sizes = [8, 32], strides = [1, 1]} : vector<256x32xf32> to vector<8x32xf32>
      %64 = arith.addf %62, %63 : vector<8x32xf32>
      %65 = vector.extract_strided_slice %57 {offsets = [32, 0], sizes = [8, 32], strides = [1, 1]} : vector<256x32xf32> to vector<8x32xf32>
      %66 = arith.addf %64, %65 : vector<8x32xf32>
      %67 = vector.extract_strided_slice %57 {offsets = [40, 0], sizes = [8, 32], strides = [1, 1]} : vector<256x32xf32> to vector<8x32xf32>
      %68 = arith.addf %66, %67 : vector<8x32xf32>
      %69 = vector.extract_strided_slice %57 {offsets = [48, 0], sizes = [8, 32], strides = [1, 1]} : vector<256x32xf32> to vector<8x32xf32>
      %70 = arith.addf %68, %69 : vector<8x32xf32>
      %71 = vector.extract_strided_slice %57 {offsets = [56, 0], sizes = [8, 32], strides = [1, 1]} : vector<256x32xf32> to vector<8x32xf32>
      %72 = arith.addf %70, %71 : vector<8x32xf32>
      %73 = vector.extract_strided_slice %57 {offsets = [64, 0], sizes = [8, 32], strides = [1, 1]} : vector<256x32xf32> to vector<8x32xf32>
      %74 = arith.addf %72, %73 : vector<8x32xf32>
      %75 = vector.extract_strided_slice %57 {offsets = [72, 0], sizes = [8, 32], strides = [1, 1]} : vector<256x32xf32> to vector<8x32xf32>
      %76 = arith.addf %74, %75 : vector<8x32xf32>
      %77 = vector.extract_strided_slice %57 {offsets = [80, 0], sizes = [8, 32], strides = [1, 1]} : vector<256x32xf32> to vector<8x32xf32>
      %78 = arith.addf %76, %77 : vector<8x32xf32>
      %79 = vector.extract_strided_slice %57 {offsets = [88, 0], sizes = [8, 32], strides = [1, 1]} : vector<256x32xf32> to vector<8x32xf32>
      %80 = arith.addf %78, %79 : vector<8x32xf32>
      %81 = vector.extract_strided_slice %57 {offsets = [96, 0], sizes = [8, 32], strides = [1, 1]} : vector<256x32xf32> to vector<8x32xf32>
      %82 = arith.addf %80, %81 : vector<8x32xf32>
      %83 = vector.extract_strided_slice %57 {offsets = [104, 0], sizes = [8, 32], strides = [1, 1]} : vector<256x32xf32> to vector<8x32xf32>
      %84 = arith.addf %82, %83 : vector<8x32xf32>
      %85 = vector.extract_strided_slice %57 {offsets = [112, 0], sizes = [8, 32], strides = [1, 1]} : vector<256x32xf32> to vector<8x32xf32>
      %86 = arith.addf %84, %85 : vector<8x32xf32>
      %87 = vector.extract_strided_slice %57 {offsets = [120, 0], sizes = [8, 32], strides = [1, 1]} : vector<256x32xf32> to vector<8x32xf32>
      %88 = arith.addf %86, %87 : vector<8x32xf32>
      %89 = vector.extract_strided_slice %57 {offsets = [128, 0], sizes = [8, 32], strides = [1, 1]} : vector<256x32xf32> to vector<8x32xf32>
      %90 = arith.addf %88, %89 : vector<8x32xf32>
      %91 = vector.extract_strided_slice %57 {offsets = [136, 0], sizes = [8, 32], strides = [1, 1]} : vector<256x32xf32> to vector<8x32xf32>
      %92 = arith.addf %90, %91 : vector<8x32xf32>
      %93 = vector.extract_strided_slice %57 {offsets = [144, 0], sizes = [8, 32], strides = [1, 1]} : vector<256x32xf32> to vector<8x32xf32>
      %94 = arith.addf %92, %93 : vector<8x32xf32>
      %95 = vector.extract_strided_slice %57 {offsets = [152, 0], sizes = [8, 32], strides = [1, 1]} : vector<256x32xf32> to vector<8x32xf32>
      %96 = arith.addf %94, %95 : vector<8x32xf32>
      %97 = vector.extract_strided_slice %57 {offsets = [160, 0], sizes = [8, 32], strides = [1, 1]} : vector<256x32xf32> to vector<8x32xf32>
      %98 = arith.addf %96, %97 : vector<8x32xf32>
      %99 = vector.extract_strided_slice %57 {offsets = [168, 0], sizes = [8, 32], strides = [1, 1]} : vector<256x32xf32> to vector<8x32xf32>
      %100 = arith.addf %98, %99 : vector<8x32xf32>
      %101 = vector.extract_strided_slice %57 {offsets = [176, 0], sizes = [8, 32], strides = [1, 1]} : vector<256x32xf32> to vector<8x32xf32>
      %102 = arith.addf %100, %101 : vector<8x32xf32>
      %103 = vector.extract_strided_slice %57 {offsets = [184, 0], sizes = [8, 32], strides = [1, 1]} : vector<256x32xf32> to vector<8x32xf32>
      %104 = arith.addf %102, %103 : vector<8x32xf32>
      %105 = vector.extract_strided_slice %57 {offsets = [192, 0], sizes = [8, 32], strides = [1, 1]} : vector<256x32xf32> to vector<8x32xf32>
      %106 = arith.addf %104, %105 : vector<8x32xf32>
      %107 = vector.extract_strided_slice %57 {offsets = [200, 0], sizes = [8, 32], strides = [1, 1]} : vector<256x32xf32> to vector<8x32xf32>
      %108 = arith.addf %106, %107 : vector<8x32xf32>
      %109 = vector.extract_strided_slice %57 {offsets = [208, 0], sizes = [8, 32], strides = [1, 1]} : vector<256x32xf32> to vector<8x32xf32>
      %110 = arith.addf %108, %109 : vector<8x32xf32>
      %111 = vector.extract_strided_slice %57 {offsets = [216, 0], sizes = [8, 32], strides = [1, 1]} : vector<256x32xf32> to vector<8x32xf32>
      %112 = arith.addf %110, %111 : vector<8x32xf32>
      %113 = vector.extract_strided_slice %57 {offsets = [224, 0], sizes = [8, 32], strides = [1, 1]} : vector<256x32xf32> to vector<8x32xf32>
      %114 = arith.addf %112, %113 : vector<8x32xf32>
      %115 = vector.extract_strided_slice %57 {offsets = [232, 0], sizes = [8, 32], strides = [1, 1]} : vector<256x32xf32> to vector<8x32xf32>
      %116 = arith.addf %114, %115 : vector<8x32xf32>
      %117 = vector.extract_strided_slice %57 {offsets = [240, 0], sizes = [8, 32], strides = [1, 1]} : vector<256x32xf32> to vector<8x32xf32>
      %118 = arith.addf %116, %117 : vector<8x32xf32>
      %119 = vector.extract_strided_slice %57 {offsets = [248, 0], sizes = [8, 32], strides = [1, 1]} : vector<256x32xf32> to vector<8x32xf32>
      %120 = arith.addf %118, %119 : vector<8x32xf32>
      %121 = vector.shape_cast %120 : vector<8x32xf32> to vector<1x8x32xf32>
      %c0_27 = arith.constant 0 : index
      %c0_28 = arith.constant 0 : index
      %c0_29 = arith.constant 0 : index
      %122 = vector.load %arg7[%c0_27, %c0_28, %c0_29] : memref<1x8x32xf32, #tpu.memory_space<vmem>>, vector<1x8x32xf32>
      tpu.vector_store %arg7[%c0_27, %c0_28, %c0_29], %121 {strides = array<i32>} : memref<1x8x32xf32, #tpu.memory_space<vmem>>, vector<1x8x32xf32>,
    } else {
    }
    return
  }
  func.func @transform_0(%arg0: i32, %arg1: i32) -> (i32, i32) {
    %c0_i32 = arith.constant 0 : i32
    %c0_i32_0 = arith.constant 0 : i32
    return %arg0, %c0_i32 : i32, i32
  }
  func.func @transform_1(%arg0: i32, %arg1: i32) -> (i32, i32) {
    %c0_i32 = arith.constant 0 : i32
    %c0_i32_0 = arith.constant 0 : i32
    return %arg1, %c0_i32 : i32, i32
  }
  func.func @transform_2(%arg0: i32, %arg1: i32) -> (i32, i32) {
    %c0_i32 = arith.constant 0 : i32
    %c0_i32_0 = arith.constant 0 : i32
    return %c0_i32, %arg1 : i32, i32
  }
  func.func @transform_3(%arg0: i32, %arg1: i32) -> (i32, i32) {
    %c0_i32 = arith.constant 0 : i32
    %c0_i32_0 = arith.constant 0 : i32
    return %arg0, %c0_i32 : i32, i32
  }
  func.func @transform_4(%arg0: i32, %arg1: i32) -> (i32, i32) {
    %c0_i32 = arith.constant 0 : i32
    %c0_i32_0 = arith.constant 0 : i32
    return %arg0, %c0_i32 : i32, i32
  }
  func.func @transform_5(%arg0: i32, %arg1: i32) -> (i32, i32, i32) {
    %c0_i32 = arith.constant 0 : i32
    %c0_i32_0 = arith.constant 0 : i32
    %c0_i32_1 = arith.constant 0 : i32
    return %arg0, %c0_i32, %c0_i32_0 : i32, i32, i32
  }
}

</mosaic_0001>

<llo_original>
// kernel: tpu_custom_call.1
$region0: #{tpu_custom_call.1}
  #allocation0 [shape = 'u32[]', space=smem, size = 0x4, offset = 0x4, fixed_abs, tag = 'smem constant byte address 0x4 - core index']
  #allocation1 [shape = 'u32[144,128]{1,0:T(1,128)}', space=vmem, size = 0x12000, scoped, tag = 'internal scratch']
  #allocation2 [shape = 'f32[256,32]{1,0:T(8,128)}', space=vmem, size = 0x20000, scoped, tag = 'scratch operand']
  #allocation3 [shape = 'f32[256,1]{1,0:T(8,128)}', space=vmem, size = 0x20000, scoped, tag = 'scratch operand']
  %s0 = inlined_call_operand.vmem [shape: f32[256,32], index: 0, kind: input, shape index: {}]
  %s1 = inlined_call_operand.vmem [shape: f32[256,32], index: 1, kind: input, shape index: {}]
  %s2 = inlined_call_operand.vmem [shape: f32[1,256], index: 2, kind: input, shape index: {}]
  %s3 = inlined_call_operand.vmem [shape: f32[256,32], index: 3, kind: output, shape index: {0}]
  %s4 = inlined_call_operand.vmem [shape: s32[256,1], index: 4, kind: output, shape index: {1}]
  %s5 = inlined_call_operand.hbm [shape: f32[1,8,32], index: 5, kind: output, shape index: {2}]
  %6 = xla_tuple %s3, %s4, %s5
  %s7 = sld [smem:[#allocation0]]
  $region46: #{tpu_custom_call.1} parent=0
    _
  %s9 = ssub.s32 1, %s7
  %s10 = scalar_select 0, %s9, %s7
  $region1: #{tpu_custom_call.1} parent=0
    #allocation4 [shape = 'u8[4096]{0}', space=vmem, size = 0x1000, scoped, tag = 'output window, operand 2, single buffered']
    #allocation5 [shape = 's32[1]{0}', space=sflag, size = 0x4, scoped, tag = 'scoped memory for tpu_custom_call.1']
    %11 = vsyncpa [#allocation5], 0
    // Predicated region
    $region2: #{tpu_custom_call.1} parent=1 // pred_check
      _
    $region3: #{tpu_custom_call.1} parent=1 // pred_check_branch
      %13 = sbr.rel (0) target = $region5
    $region4: #{tpu_custom_call.1} parent=1 // pred_region
      _
    $region5: #{tpu_custom_call.1} parent=1 // pred_fallthru
      _
    // Predicated region
    $region6: #{tpu_custom_call.1} parent=1 // pred_check
      _
    $region7: #{tpu_custom_call.1} parent=1 // pred_check_branch
      %15 = sbr.rel (0) target = $region9
    $region8: #{tpu_custom_call.1} parent=1 // pred_region
      _
    $region9: #{tpu_custom_call.1} parent=1 // pred_fallthru
      _
    // Predicated region
    $region10: #{tpu_custom_call.1} parent=1 // pred_check
      _
    $region11: #{tpu_custom_call.1} parent=1 // pred_check_branch
      %17 = sbr.rel (0) target = $region13
    $region12: #{tpu_custom_call.1} parent=1 // pred_region
      _
    $region13: #{tpu_custom_call.1} parent=1 // pred_fallthru
      _
    %p19 = scmp.eq.s32.totalorder 0, 0
    // Predicated region
    $region14: #{tpu_custom_call.1} parent=1 // pred_check
      %p20 = pneg %p19
    $region15: #{tpu_custom_call.1} parent=1 // pred_check_branch
      %22 = sbr.rel (%p20) target = $region17
    $region16: #{tpu_custom_call.1} parent=1 // pred_region
      %v23 = vld [vmem:[%s0] sm:$0xff]
      %v24 = vld [vmem:[%s0 + $0x8] sm:$0xff]
      %v25 = vld [vmem:[%s0 + $0x10] sm:$0xff]
      %v26 = vld [vmem:[%s0 + $0x18] sm:$0xff]
      %v27 = vld [vmem:[%s0 + $0x20] sm:$0xff]
      %v28 = vld [vmem:[%s0 + $0x28] sm:$0xff]
      %v29 = vld [vmem:[%s0 + $0x30] sm:$0xff]
      %v30 = vld [vmem:[%s0 + $0x38] sm:$0xff]
      %v31 = vld [vmem:[%s0 + $0x40] sm:$0xff]
      %v32 = vld [vmem:[%s0 + $0x48] sm:$0xff]
      %v33 = vld [vmem:[%s0 + $0x50] sm:$0xff]
      %v34 = vld [vmem:[%s0 + $0x58] sm:$0xff]
      %v35 = vld [vmem:[%s0 + $0x60] sm:$0xff]
      %v36 = vld [vmem:[%s0 + $0x68] sm:$0xff]
      %v37 = vld [vmem:[%s0 + $0x70] sm:$0xff]
      %v38 = vld [vmem:[%s0 + $0x78] sm:$0xff]
      %v39 = vld [vmem:[%s0 + $0x80] sm:$0xff]
      %v40 = vld [vmem:[%s0 + $0x88] sm:$0xff]
      %v41 = vld [vmem:[%s0 + $0x90] sm:$0xff]
      %v42 = vld [vmem:[%s0 + $0x98] sm:$0xff]
      %v43 = vld [vmem:[%s0 + $0xa0] sm:$0xff]
      %v44 = vld [vmem:[%s0 + $0xa8] sm:$0xff]
      %v45 = vld [vmem:[%s0 + $0xb0] sm:$0xff]
      %v46 = vld [vmem:[%s0 + $0xb8] sm:$0xff]
      %v47 = vld [vmem:[%s0 + $0xc0] sm:$0xff]
      %v48 = vld [vmem:[%s0 + $0xc8] sm:$0xff]
      %v49 = vld [vmem:[%s0 + $0xd0] sm:$0xff]
      %v50 = vld [vmem:[%s0 + $0xd8] sm:$0xff]
      %v51 = vld [vmem:[%s0 + $0xe0] sm:$0xff]
      %v52 = vld [vmem:[%s0 + $0xe8] sm:$0xff]
      %v53 = vld [vmem:[%s0 + $0xf0] sm:$0xff]
      %v54 = vld [vmem:[%s0 + $0xf8] sm:$0xff]
      %vm55 = vcmask 261120
      %v56 = vsel %vm55, %v23, 0.0
      %57 = vadd.xlane.f32.xlu0 %v56
      %v58 = vpop.xlane.xlu0 %57
      %v59 = vsel %vm55, %v24, 0.0
      %60 = vadd.xlane.f32.xlu0 %v59
      %v61 = vpop.xlane.xlu0 %60
      %v62 = vsel %vm55, %v25, 0.0
      %63 = vadd.xlane.f32.xlu0 %v62
      %v64 = vpop.xlane.xlu0 %63
      %v65 = vsel %vm55, %v26, 0.0
      %66 = vadd.xlane.f32.xlu0 %v65
      %v67 = vpop.xlane.xlu0 %66
      %v68 = vsel %vm55, %v27, 0.0
      %69 = vadd.xlane.f32.xlu0 %v68
      %v70 = vpop.xlane.xlu0 %69
      %v71 = vsel %vm55, %v28, 0.0
      %72 = vadd.xlane.f32.xlu0 %v71
      %v73 = vpop.xlane.xlu0 %72
      %v74 = vsel %vm55, %v29, 0.0
      %75 = vadd.xlane.f32.xlu0 %v74
      %v76 = vpop.xlane.xlu0 %75
      %v77 = vsel %vm55, %v30, 0.0
      %78 = vadd.xlane.f32.xlu0 %v77
      %v79 = vpop.xlane.xlu0 %78
      %v80 = vsel %vm55, %v31, 0.0
      %81 = vadd.xlane.f32.xlu0 %v80
      %v82 = vpop.xlane.xlu0 %81
      %v83 = vsel %vm55, %v32, 0.0
      %84 = vadd.xlane.f32.xlu0 %v83
      %v85 = vpop.xlane.xlu0 %84
      %v86 = vsel %vm55, %v33, 0.0
      %87 = vadd.xlane.f32.xlu0 %v86
      %v88 = vpop.xlane.xlu0 %87
      %v89 = vsel %vm55, %v34, 0.0
      %90 = vadd.xlane.f32.xlu0 %v89
      %v91 = vpop.xlane.xlu0 %90
      %v92 = vsel %vm55, %v35, 0.0
      %93 = vadd.xlane.f32.xlu0 %v92
      %v94 = vpop.xlane.xlu0 %93
      %v95 = vsel %vm55, %v36, 0.0
      %96 = vadd.xlane.f32.xlu0 %v95
      %v97 = vpop.xlane.xlu0 %96
      %v98 = vsel %vm55, %v37, 0.0
      %99 = vadd.xlane.f32.xlu0 %v98
      %v100 = vpop.xlane.xlu0 %99
      %v101 = vsel %vm55, %v38, 0.0
      %102 = vadd.xlane.f32.xlu0 %v101
      %v103 = vpop.xlane.xlu0 %102
      %v104 = vsel %vm55, %v39, 0.0
      %105 = vadd.xlane.f32.xlu0 %v104
      %v106 = vpop.xlane.xlu0 %105
      %v107 = vsel %vm55, %v40, 0.0
      %108 = vadd.xlane.f32.xlu0 %v107
      %v109 = vpop.xlane.xlu0 %108
      %v110 = vsel %vm55, %v41, 0.0
      %111 = vadd.xlane.f32.xlu0 %v110
      %v112 = vpop.xlane.xlu0 %111
      %v113 = vsel %vm55, %v42, 0.0
      %114 = vadd.xlane.f32.xlu0 %v113
      %v115 = vpop.xlane.xlu0 %114
      %v116 = vsel %vm55, %v43, 0.0
      %117 = vadd.xlane.f32.xlu0 %v116
      %v118 = vpop.xlane.xlu0 %117
      %v119 = vsel %vm55, %v44, 0.0
      %120 = vadd.xlane.f32.xlu0 %v119
      %v121 = vpop.xlane.xlu0 %120
      %v122 = vsel %vm55, %v45, 0.0
      %123 = vadd.xlane.f32.xlu0 %v122
      %v124 = vpop.xlane.xlu0 %123
      %v125 = vsel %vm55, %v46, 0.0
      %126 = vadd.xlane.f32.xlu0 %v125
      %v127 = vpop.xlane.xlu0 %126
      %v128 = vsel %vm55, %v47, 0.0
      %129 = vadd.xlane.f32.xlu0 %v128
      %v130 = vpop.xlane.xlu0 %129
      %v131 = vsel %vm55, %v48, 0.0
      %132 = vadd.xlane.f32.xlu0 %v131
      %v133 = vpop.xlane.xlu0 %132
      %v134 = vsel %vm55, %v49, 0.0
      %135 = vadd.xlane.f32.xlu0 %v134
      %v136 = vpop.xlane.xlu0 %135
      %v137 = vsel %vm55, %v50, 0.0
      %138 = vadd.xlane.f32.xlu0 %v137
      %v139 = vpop.xlane.xlu0 %138
      %v140 = vsel %vm55, %v51, 0.0
      %141 = vadd.xlane.f32.xlu0 %v140
      %v142 = vpop.xlane.xlu0 %141
      %v143 = vsel %vm55, %v52, 0.0
      %144 = vadd.xlane.f32.xlu0 %v143
      %v145 = vpop.xlane.xlu0 %144
      %v146 = vsel %vm55, %v53, 0.0
      %147 = vadd.xlane.f32.xlu0 %v146
      %v148 = vpop.xlane.xlu0 %147
      %v149 = vsel %vm55, %v54, 0.0
      %150 = vadd.xlane.f32.xlu0 %v149
      %v151 = vpop.xlane.xlu0 %150
      %v152 = vrcp.pop 32.0
      %v153 = vmul.f32 %v58, %v152
      %v154 = vmul.f32 %v61, %v152
      %v155 = vmul.f32 %v64, %v152
      %v156 = vmul.f32 %v67, %v152
      %v157 = vmul.f32 %v70, %v152
      %v158 = vmul.f32 %v73, %v152
      %v159 = vmul.f32 %v76, %v152
      %v160 = vmul.f32 %v79, %v152
      %v161 = vmul.f32 %v82, %v152
      %v162 = vmul.f32 %v85, %v152
      %v163 = vmul.f32 %v88, %v152
      %v164 = vmul.f32 %v91, %v152
      %v165 = vmul.f32 %v94, %v152
      %v166 = vmul.f32 %v97, %v152
      %v167 = vmul.f32 %v100, %v152
      %v168 = vmul.f32 %v103, %v152
      %v169 = vmul.f32 %v106, %v152
      %v170 = vmul.f32 %v109, %v152
      %v171 = vmul.f32 %v112, %v152
      %v172 = vmul.f32 %v115, %v152
      %v173 = vmul.f32 %v118, %v152
      %v174 = vmul.f32 %v121, %v152
      %v175 = vmul.f32 %v124, %v152
      %v176 = vmul.f32 %v127, %v152
      %v177 = vmul.f32 %v130, %v152
      %v178 = vmul.f32 %v133, %v152
      %v179 = vmul.f32 %v136, %v152
      %v180 = vmul.f32 %v139, %v152
      %v181 = vmul.f32 %v142, %v152
      %v182 = vmul.f32 %v145, %v152
      %v183 = vmul.f32 %v148, %v152
      %v184 = vmul.f32 %v151, %v152
      %v185 = vsub.f32 %v23, %v153
      %v186 = vsub.f32 %v24, %v154
      %v187 = vsub.f32 %v25, %v155
      %v188 = vsub.f32 %v26, %v156
      %v189 = vsub.f32 %v27, %v157
      %v190 = vsub.f32 %v28, %v158
      %v191 = vsub.f32 %v29, %v159
      %v192 = vsub.f32 %v30, %v160
      %v193 = vsub.f32 %v31, %v161
      %v194 = vsub.f32 %v32, %v162
      %v195 = vsub.f32 %v33, %v163
      %v196 = vsub.f32 %v34, %v164
      %v197 = vsub.f32 %v35, %v165
      %v198 = vsub.f32 %v36, %v166
      %v199 = vsub.f32 %v37, %v167
      %v200 = vsub.f32 %v38, %v168
      %v201 = vsub.f32 %v39, %v169
      %v202 = vsub.f32 %v40, %v170
      %v203 = vsub.f32 %v41, %v171
      %v204 = vsub.f32 %v42, %v172
      %v205 = vsub.f32 %v43, %v173
      %v206 = vsub.f32 %v44, %v174
      %v207 = vsub.f32 %v45, %v175
      %v208 = vsub.f32 %v46, %v176
      %v209 = vsub.f32 %v47, %v177
      %v210 = vsub.f32 %v48, %v178
      %v211 = vsub.f32 %v49, %v179
      %v212 = vsub.f32 %v50, %v180
      %v213 = vsub.f32 %v51, %v181
      %v214 = vsub.f32 %v52, %v182
      %v215 = vsub.f32 %v53, %v183
      %v216 = vsub.f32 %v54, %v184
      %v217 = vmul.f32 %v185, %v185
      %v218 = vmul.f32 %v186, %v186
      %v219 = vmul.f32 %v187, %v187
      %v220 = vmul.f32 %v188, %v188
      %v221 = vmul.f32 %v189, %v189
      %v222 = vmul.f32 %v190, %v190
      %v223 = vmul.f32 %v191, %v191
      %v224 = vmul.f32 %v192, %v192
      %v225 = vmul.f32 %v193, %v193
      %v226 = vmul.f32 %v194, %v194
      %v227 = vmul.f32 %v195, %v195
      %v228 = vmul.f32 %v196, %v196
      %v229 = vmul.f32 %v197, %v197
      %v230 = vmul.f32 %v198, %v198
      %v231 = vmul.f32 %v199, %v199
      %v232 = vmul.f32 %v200, %v200
      %v233 = vmul.f32 %v201, %v201
      %v234 = vmul.f32 %v202, %v202
      %v235 = vmul.f32 %v203, %v203
      %v236 = vmul.f32 %v204, %v204
      %v237 = vmul.f32 %v205, %v205
      %v238 = vmul.f32 %v206, %v206
      %v239 = vmul.f32 %v207, %v207
      %v240 = vmul.f32 %v208, %v208
      %v241 = vmul.f32 %v209, %v209
      %v242 = vmul.f32 %v210, %v210
      %v243 = vmul.f32 %v211, %v211
      %v244 = vmul.f32 %v212, %v212
      %v245 = vmul.f32 %v213, %v213
      %v246 = vmul.f32 %v214, %v214
      %v247 = vmul.f32 %v215, %v215
      %v248 = vmul.f32 %v216, %v216
      %v249 = vsel %vm55, %v217, 0.0
      %250 = vadd.xlane.f32.xlu0 %v249
      %v251 = vpop.xlane.xlu0 %250
      %v252 = vsel %vm55, %v218, 0.0
      %253 = vadd.xlane.f32.xlu0 %v252
      %v254 = vpop.xlane.xlu0 %253
      %v255 = vsel %vm55, %v219, 0.0
      %256 = vadd.xlane.f32.xlu0 %v255
      %v257 = vpop.xlane.xlu0 %256
      %v258 = vsel %vm55, %v220, 0.0
      %259 = vadd.xlane.f32.xlu0 %v258
      %v260 = vpop.xlane.xlu0 %259
      %v261 = vsel %vm55, %v221, 0.0
      %262 = vadd.xlane.f32.xlu0 %v261
      %v263 = vpop.xlane.xlu0 %262
      %v264 = vsel %vm55, %v222, 0.0
      %265 = vadd.xlane.f32.xlu0 %v264
      %v266 = vpop.xlane.xlu0 %265
      %v267 = vsel %vm55, %v223, 0.0
      %268 = vadd.xlane.f32.xlu0 %v267
      %v269 = vpop.xlane.xlu0 %268
      %v270 = vsel %vm55, %v224, 0.0
      %271 = vadd.xlane.f32.xlu0 %v270
      %v272 = vpop.xlane.xlu0 %271
      %v273 = vsel %vm55, %v225, 0.0
      %274 = vadd.xlane.f32.xlu0 %v273
      %v275 = vpop.xlane.xlu0 %274
      %v276 = vsel %vm55, %v226, 0.0
      %277 = vadd.xlane.f32.xlu0 %v276
      %v278 = vpop.xlane.xlu0 %277
      %v279 = vsel %vm55, %v227, 0.0
      %280 = vadd.xlane.f32.xlu0 %v279
      %v281 = vpop.xlane.xlu0 %280
      %v282 = vsel %vm55, %v228, 0.0
      %283 = vadd.xlane.f32.xlu0 %v282
      %v284 = vpop.xlane.xlu0 %283
      %v285 = vsel %vm55, %v229, 0.0
      %286 = vadd.xlane.f32.xlu0 %v285
      %v287 = vpop.xlane.xlu0 %286
      %v288 = vsel %vm55, %v230, 0.0
      %289 = vadd.xlane.f32.xlu0 %v288
      %v290 = vpop.xlane.xlu0 %289
      %v291 = vsel %vm55, %v231, 0.0
      %292 = vadd.xlane.f32.xlu0 %v291
      %v293 = vpop.xlane.xlu0 %292
      %v294 = vsel %vm55, %v232, 0.0
      %295 = vadd.xlane.f32.xlu0 %v294
      %v296 = vpop.xlane.xlu0 %295
      %v297 = vsel %vm55, %v233, 0.0
      %298 = vadd.xlane.f32.xlu0 %v297
      %v299 = vpop.xlane.xlu0 %298
      %v300 = vsel %vm55, %v234, 0.0
      %301 = vadd.xlane.f32.xlu0 %v300
      %v302 = vpop.xlane.xlu0 %301
      %v303 = vsel %vm55, %v235, 0.0
      %304 = vadd.xlane.f32.xlu0 %v303
      %v305 = vpop.xlane.xlu0 %304
      %v306 = vsel %vm55, %v236, 0.0
      %307 = vadd.xlane.f32.xlu0 %v306
      %v308 = vpop.xlane.xlu0 %307
      %v309 = vsel %vm55, %v237, 0.0
      %310 = vadd.xlane.f32.xlu0 %v309
      %v311 = vpop.xlane.xlu0 %310
      %v312 = vsel %vm55, %v238, 0.0
      %313 = vadd.xlane.f32.xlu0 %v312
      %v314 = vpop.xlane.xlu0 %313
      %v315 = vsel %vm55, %v239, 0.0
      %316 = vadd.xlane.f32.xlu0 %v315
      %v317 = vpop.xlane.xlu0 %316
      %v318 = vsel %vm55, %v240, 0.0
      %319 = vadd.xlane.f32.xlu0 %v318
      %v320 = vpop.xlane.xlu0 %319
      %v321 = vsel %vm55, %v241, 0.0
      %322 = vadd.xlane.f32.xlu0 %v321
      %v323 = vpop.xlane.xlu0 %322
      %v324 = vsel %vm55, %v242, 0.0
      %325 = vadd.xlane.f32.xlu0 %v324
      %v326 = vpop.xlane.xlu0 %325
      %v327 = vsel %vm55, %v243, 0.0
      %328 = vadd.xlane.f32.xlu0 %v327
      %v329 = vpop.xlane.xlu0 %328
      %v330 = vsel %vm55, %v244, 0.0
      %331 = vadd.xlane.f32.xlu0 %v330
      %v332 = vpop.xlane.xlu0 %331
      %v333 = vsel %vm55, %v245, 0.0
      %334 = vadd.xlane.f32.xlu0 %v333
      %v335 = vpop.xlane.xlu0 %334
      %v336 = vsel %vm55, %v246, 0.0
      %337 = vadd.xlane.f32.xlu0 %v336
      %v338 = vpop.xlane.xlu0 %337
      %v339 = vsel %vm55, %v247, 0.0
      %340 = vadd.xlane.f32.xlu0 %v339
      %v341 = vpop.xlane.xlu0 %340
      %v342 = vsel %vm55, %v248, 0.0
      %343 = vadd.xlane.f32.xlu0 %v342
      %v344 = vpop.xlane.xlu0 %343
      %v345 = vmul.f32 %v251, %v152
      %v346 = vmul.f32 %v254, %v152
      %v347 = vmul.f32 %v257, %v152
      %v348 = vmul.f32 %v260, %v152
      %v349 = vmul.f32 %v263, %v152
      %v350 = vmul.f32 %v266, %v152
      %v351 = vmul.f32 %v269, %v152
      %v352 = vmul.f32 %v272, %v152
      %v353 = vmul.f32 %v275, %v152
      %v354 = vmul.f32 %v278, %v152
      %v355 = vmul.f32 %v281, %v152
      %v356 = vmul.f32 %v284, %v152
      %v357 = vmul.f32 %v287, %v152
      %v358 = vmul.f32 %v290, %v152
      %v359 = vmul.f32 %v293, %v152
      %v360 = vmul.f32 %v296, %v152
      %v361 = vmul.f32 %v299, %v152
      %v362 = vmul.f32 %v302, %v152
      %v363 = vmul.f32 %v305, %v152
      %v364 = vmul.f32 %v308, %v152
      %v365 = vmul.f32 %v311, %v152
      %v366 = vmul.f32 %v314, %v152
      %v367 = vmul.f32 %v317, %v152
      %v368 = vmul.f32 %v320, %v152
      %v369 = vmul.f32 %v323, %v152
      %v370 = vmul.f32 %v326, %v152
      %v371 = vmul.f32 %v329, %v152
      %v372 = vmul.f32 %v332, %v152
      %v373 = vmul.f32 %v335, %v152
      %v374 = vmul.f32 %v338, %v152
      %v375 = vmul.f32 %v341, %v152
      %v376 = vmul.f32 %v344, %v152
      %v377 = vadd.f32 %v345, 1e-05
      %v378 = vadd.f32 %v346, 1e-05
      %v379 = vadd.f32 %v347, 1e-05
      %v380 = vadd.f32 %v348, 1e-05
      %v381 = vadd.f32 %v349, 1e-05
      %v382 = vadd.f32 %v350, 1e-05
      %v383 = vadd.f32 %v351, 1e-05
      %v384 = vadd.f32 %v352, 1e-05
      %v385 = vadd.f32 %v353, 1e-05
      %v386 = vadd.f32 %v354, 1e-05
      %v387 = vadd.f32 %v355, 1e-05
      %v388 = vadd.f32 %v356, 1e-05
      %v389 = vadd.f32 %v357, 1e-05
      %v390 = vadd.f32 %v358, 1e-05
      %v391 = vadd.f32 %v359, 1e-05
      %v392 = vadd.f32 %v360, 1e-05
      %v393 = vadd.f32 %v361, 1e-05
      %v394 = vadd.f32 %v362, 1e-05
      %v395 = vadd.f32 %v363, 1e-05
      %v396 = vadd.f32 %v364, 1e-05
      %v397 = vadd.f32 %v365, 1e-05
      %v398 = vadd.f32 %v366, 1e-05
      %v399 = vadd.f32 %v367, 1e-05
      %v400 = vadd.f32 %v368, 1e-05
      %v401 = vadd.f32 %v369, 1e-05
      %v402 = vadd.f32 %v370, 1e-05
      %v403 = vadd.f32 %v371, 1e-05
      %v404 = vadd.f32 %v372, 1e-05
      %v405 = vadd.f32 %v373, 1e-05
      %v406 = vadd.f32 %v374, 1e-05
      %v407 = vadd.f32 %v375, 1e-05
      %v408 = vadd.f32 %v376, 1e-05
      %v409 = vrsqrt.pop %v377
      %v410 = vrsqrt.pop %v378
      %v411 = vrsqrt.pop %v379
      %v412 = vrsqrt.pop %v380
      %v413 = vrsqrt.pop %v381
      %v414 = vrsqrt.pop %v382
      %v415 = vrsqrt.pop %v383
      %v416 = vrsqrt.pop %v384
      %v417 = vrsqrt.pop %v385
      %v418 = vrsqrt.pop %v386
      %v419 = vrsqrt.pop %v387
      %v420 = vrsqrt.pop %v388
      %v421 = vrsqrt.pop %v389
      %v422 = vrsqrt.pop %v390
      %v423 = vrsqrt.pop %v391
      %v424 = vrsqrt.pop %v392
      %v425 = vrsqrt.pop %v393
      %v426 = vrsqrt.pop %v394
      %v427 = vrsqrt.pop %v395
      %v428 = vrsqrt.pop %v396
      %v429 = vrsqrt.pop %v397
      %v430 = vrsqrt.pop %v398
      %v431 = vrsqrt.pop %v399
      %v432 = vrsqrt.pop %v400
      %v433 = vrsqrt.pop %v401
      %v434 = vrsqrt.pop %v402
      %v435 = vrsqrt.pop %v403
      %v436 = vrsqrt.pop %v404
      %v437 = vrsqrt.pop %v405
      %v438 = vrsqrt.pop %v406
      %v439 = vrsqrt.pop %v407
      %v440 = vrsqrt.pop %v408
      %v441 = vmul.f32 %v185, %v409
      %v442 = vmul.f32 %v186, %v410
      %v443 = vmul.f32 %v187, %v411
      %v444 = vmul.f32 %v188, %v412
      %v445 = vmul.f32 %v189, %v413
      %v446 = vmul.f32 %v190, %v414
      %v447 = vmul.f32 %v191, %v415
      %v448 = vmul.f32 %v192, %v416
      %v449 = vmul.f32 %v193, %v417
      %v450 = vmul.f32 %v194, %v418
      %v451 = vmul.f32 %v195, %v419
      %v452 = vmul.f32 %v196, %v420
      %v453 = vmul.f32 %v197, %v421
      %v454 = vmul.f32 %v198, %v422
      %v455 = vmul.f32 %v199, %v423
      %v456 = vmul.f32 %v200, %v424
      %v457 = vmul.f32 %v201, %v425
      %v458 = vmul.f32 %v202, %v426
      %v459 = vmul.f32 %v203, %v427
      %v460 = vmul.f32 %v204, %v428
      %v461 = vmul.f32 %v205, %v429
      %v462 = vmul.f32 %v206, %v430
      %v463 = vmul.f32 %v207, %v431
      %v464 = vmul.f32 %v208, %v432
      %v465 = vmul.f32 %v209, %v433
      %v466 = vmul.f32 %v210, %v434
      %v467 = vmul.f32 %v211, %v435
      %v468 = vmul.f32 %v212, %v436
      %v469 = vmul.f32 %v213, %v437
      %v470 = vmul.f32 %v214, %v438
      %v471 = vmul.f32 %v215, %v439
      %v472 = vmul.f32 %v216, %v440
      %473 = vst.msk [vmem:[#allocation2] sm:$0xff] %vm55, %v441
      %474 = vst.msk [vmem:[#allocation2 + $0x8] sm:$0xff] %vm55, %v442
      %475 = vst.msk [vmem:[#allocation2 + $0x10] sm:$0xff] %vm55, %v443
      %476 = vst.msk [vmem:[#allocation2 + $0x18] sm:$0xff] %vm55, %v444
      %477 = vst.msk [vmem:[#allocation2 + $0x20] sm:$0xff] %vm55, %v445
      %478 = vst.msk [vmem:[#allocation2 + $0x28] sm:$0xff] %vm55, %v446
      %479 = vst.msk [vmem:[#allocation2 + $0x30] sm:$0xff] %vm55, %v447
      %480 = vst.msk [vmem:[#allocation2 + $0x38] sm:$0xff] %vm55, %v448
      %481 = vst.msk [vmem:[#allocation2 + $0x40] sm:$0xff] %vm55, %v449
      %482 = vst.msk [vmem:[#allocation2 + $0x48] sm:$0xff] %vm55, %v450
      %483 = vst.msk [vmem:[#allocation2 + $0x50] sm:$0xff] %vm55, %v451
      %484 = vst.msk [vmem:[#allocation2 + $0x58] sm:$0xff] %vm55, %v452
      %485 = vst.msk [vmem:[#allocation2 + $0x60] sm:$0xff] %vm55, %v453
      %486 = vst.msk [vmem:[#allocation2 + $0x68] sm:$0xff] %vm55, %v454
      %487 = vst.msk [vmem:[#allocation2 + $0x70] sm:$0xff] %vm55, %v455
      %488 = vst.msk [vmem:[#allocation2 + $0x78] sm:$0xff] %vm55, %v456
      %489 = vst.msk [vmem:[#allocation2 + $0x80] sm:$0xff] %vm55, %v457
      %490 = vst.msk [vmem:[#allocation2 + $0x88] sm:$0xff] %vm55, %v458
      %491 = vst.msk [vmem:[#allocation2 + $0x90] sm:$0xff] %vm55, %v459
      %492 = vst.msk [vmem:[#allocation2 + $0x98] sm:$0xff] %vm55, %v460
      %493 = vst.msk [vmem:[#allocation2 + $0xa0] sm:$0xff] %vm55, %v461
      %494 = vst.msk [vmem:[#allocation2 + $0xa8] sm:$0xff] %vm55, %v462
      %495 = vst.msk [vmem:[#allocation2 + $0xb0] sm:$0xff] %vm55, %v463
      %496 = vst.msk [vmem:[#allocation2 + $0xb8] sm:$0xff] %vm55, %v464
      %497 = vst.msk [vmem:[#allocation2 + $0xc0] sm:$0xff] %vm55, %v465
      %498 = vst.msk [vmem:[#allocation2 + $0xc8] sm:$0xff] %vm55, %v466
      %499 = vst.msk [vmem:[#allocation2 + $0xd0] sm:$0xff] %vm55, %v467
      %500 = vst.msk [vmem:[#allocation2 + $0xd8] sm:$0xff] %vm55, %v468
      %501 = vst.msk [vmem:[#allocation2 + $0xe0] sm:$0xff] %vm55, %v469
      %502 = vst.msk [vmem:[#allocation2 + $0xe8] sm:$0xff] %vm55, %v470
      %503 = vst.msk [vmem:[#allocation2 + $0xf0] sm:$0xff] %vm55, %v471
      %504 = vst.msk [vmem:[#allocation2 + $0xf8] sm:$0xff] %vm55, %v472
      %vm505 = vcmask 7168
      %506 = vst.msk [vmem:[#allocation3] sm:$0xff] %vm505, inf
      %507 = vst.msk [vmem:[#allocation3 + $0x8] sm:$0xff] %vm505, inf
      %508 = vst.msk [vmem:[#allocation3 + $0x10] sm:$0xff] %vm505, inf
      %509 = vst.msk [vmem:[#allocation3 + $0x18] sm:$0xff] %vm505, inf
      %510 = vst.msk [vmem:[#allocation3 + $0x20] sm:$0xff] %vm505, inf
      %511 = vst.msk [vmem:[#allocation3 + $0x28] sm:$0xff] %vm505, inf
      %512 = vst.msk [vmem:[#allocation3 + $0x30] sm:$0xff] %vm505, inf
      %513 = vst.msk [vmem:[#allocation3 + $0x38] sm:$0xff] %vm505, inf
      %514 = vst.msk [vmem:[#allocation3 + $0x40] sm:$0xff] %vm505, inf
      %515 = vst.msk [vmem:[#allocation3 + $0x48] sm:$0xff] %vm505, inf
      %516 = vst.msk [vmem:[#allocation3 + $0x50] sm:$0xff] %vm505, inf
      %517 = vst.msk [vmem:[#allocation3 + $0x58] sm:$0xff] %vm505, inf
      %518 = vst.msk [vmem:[#allocation3 + $0x60] sm:$0xff] %vm505, inf
      %519 = vst.msk [vmem:[#allocation3 + $0x68] sm:$0xff] %vm505, inf
      %520 = vst.msk [vmem:[#allocation3 + $0x70] sm:$0xff] %vm505, inf
      %521 = vst.msk [vmem:[#allocation3 + $0x78] sm:$0xff] %vm505, inf
      %522 = vst.msk [vmem:[#allocation3 + $0x80] sm:$0xff] %vm505, inf
      %523 = vst.msk [vmem:[#allocation3 + $0x88] sm:$0xff] %vm505, inf
      %524 = vst.msk [vmem:[#allocation3 + $0x90] sm:$0xff] %vm505, inf
      %525 = vst.msk [vmem:[#allocation3 + $0x98] sm:$0xff] %vm505, inf
      %526 = vst.msk [vmem:[#allocation3 + $0xa0] sm:$0xff] %vm505, inf
      %527 = vst.msk [vmem:[#allocation3 + $0xa8] sm:$0xff] %vm505, inf
      %528 = vst.msk [vmem:[#allocation3 + $0xb0] sm:$0xff] %vm505, inf
      %529 = vst.msk [vmem:[#allocation3 + $0xb8] sm:$0xff] %vm505, inf
      %530 = vst.msk [vmem:[#allocation3 + $0xc0] sm:$0xff] %vm505, inf
      %531 = vst.msk [vmem:[#allocation3 + $0xc8] sm:$0xff] %vm505, inf
      %532 = vst.msk [vmem:[#allocation3 + $0xd0] sm:$0xff] %vm505, inf
      %533 = vst.msk [vmem:[#allocation3 + $0xd8] sm:$0xff] %vm505, inf
      %534 = vst.msk [vmem:[#allocation3 + $0xe0] sm:$0xff] %vm505, inf
      %535 = vst.msk [vmem:[#allocation3 + $0xe8] sm:$0xff] %vm505, inf
      %536 = vst.msk [vmem:[#allocation3 + $0xf0] sm:$0xff] %vm505, inf
      %537 = vst.msk [vmem:[#allocation3 + $0xf8] sm:$0xff] %vm505, inf
    $region17: #{tpu_custom_call.1} parent=1 // pred_fallthru
      _
    %v538 = vld [vmem:[#allocation2] sm:$0xff]
    %v539 = vld [vmem:[#allocation2 + $0x8] sm:$0xff]
    %v540 = vld [vmem:[#allocation2 + $0x10] sm:$0xff]
    %v541 = vld [vmem:[#allocation2 + $0x18] sm:$0xff]
    %v542 = vld [vmem:[#allocation2 + $0x20] sm:$0xff]
    %v543 = vld [vmem:[#allocation2 + $0x28] sm:$0xff]
    %v544 = vld [vmem:[#allocation2 + $0x30] sm:$0xff]
    %v545 = vld [vmem:[#allocation2 + $0x38] sm:$0xff]
    %v546 = vld [vmem:[#allocation2 + $0x40] sm:$0xff]
    %v547 = vld [vmem:[#allocation2 + $0x48] sm:$0xff]
    %v548 = vld [vmem:[#allocation2 + $0x50] sm:$0xff]
    %v549 = vld [vmem:[#allocation2 + $0x58] sm:$0xff]
    %v550 = vld [vmem:[#allocation2 + $0x60] sm:$0xff]
    %v551 = vld [vmem:[#allocation2 + $0x68] sm:$0xff]
    %v552 = vld [vmem:[#allocation2 + $0x70] sm:$0xff]
    %v553 = vld [vmem:[#allocation2 + $0x78] sm:$0xff]
    %v554 = vld [vmem:[#allocation2 + $0x80] sm:$0xff]
    %v555 = vld [vmem:[#allocation2 + $0x88] sm:$0xff]
    %v556 = vld [vmem:[#allocation2 + $0x90] sm:$0xff]
    %v557 = vld [vmem:[#allocation2 + $0x98] sm:$0xff]
    %v558 = vld [vmem:[#allocation2 + $0xa0] sm:$0xff]
    %v559 = vld [vmem:[#allocation2 + $0xa8] sm:$0xff]
    %v560 = vld [vmem:[#allocation2 + $0xb0] sm:$0xff]
    %v561 = vld [vmem:[#allocation2 + $0xb8] sm:$0xff]
    %v562 = vld [vmem:[#allocation2 + $0xc0] sm:$0xff]
    %v563 = vld [vmem:[#allocation2 + $0xc8] sm:$0xff]
    %v564 = vld [vmem:[#allocation2 + $0xd0] sm:$0xff]
    %v565 = vld [vmem:[#allocation2 + $0xd8] sm:$0xff]
    %v566 = vld [vmem:[#allocation2 + $0xe0] sm:$0xff]
    %v567 = vld [vmem:[#allocation2 + $0xe8] sm:$0xff]
    %v568 = vld [vmem:[#allocation2 + $0xf0] sm:$0xff]
    %v569 = vld [vmem:[#allocation2 + $0xf8] sm:$0xff]
    %v570 = vld [vmem:[%s1] sm:$0xff]
    %v571 = vld [vmem:[%s1 + $0x8] sm:$0xff]
    %v572 = vld [vmem:[%s1 + $0x10] sm:$0xff]
    %v573 = vld [vmem:[%s1 + $0x18] sm:$0xff]
    %v574 = vld [vmem:[%s1 + $0x20] sm:$0xff]
    %v575 = vld [vmem:[%s1 + $0x28] sm:$0xff]
    %v576 = vld [vmem:[%s1 + $0x30] sm:$0xff]
    %v577 = vld [vmem:[%s1 + $0x38] sm:$0xff]
    %v578 = vld [vmem:[%s1 + $0x40] sm:$0xff]
    %v579 = vld [vmem:[%s1 + $0x48] sm:$0xff]
    %v580 = vld [vmem:[%s1 + $0x50] sm:$0xff]
    %v581 = vld [vmem:[%s1 + $0x58] sm:$0xff]
    %v582 = vld [vmem:[%s1 + $0x60] sm:$0xff]
    %v583 = vld [vmem:[%s1 + $0x68] sm:$0xff]
    %v584 = vld [vmem:[%s1 + $0x70] sm:$0xff]
    %v585 = vld [vmem:[%s1 + $0x78] sm:$0xff]
    %v586 = vld [vmem:[%s1 + $0x80] sm:$0xff]
    %v587 = vld [vmem:[%s1 + $0x88] sm:$0xff]
    %v588 = vld [vmem:[%s1 + $0x90] sm:$0xff]
    %v589 = vld [vmem:[%s1 + $0x98] sm:$0xff]
    %v590 = vld [vmem:[%s1 + $0xa0] sm:$0xff]
    %v591 = vld [vmem:[%s1 + $0xa8] sm:$0xff]
    %v592 = vld [vmem:[%s1 + $0xb0] sm:$0xff]
    %v593 = vld [vmem:[%s1 + $0xb8] sm:$0xff]
    %v594 = vld [vmem:[%s1 + $0xc0] sm:$0xff]
    %v595 = vld [vmem:[%s1 + $0xc8] sm:$0xff]
    %v596 = vld [vmem:[%s1 + $0xd0] sm:$0xff]
    %v597 = vld [vmem:[%s1 + $0xd8] sm:$0xff]
    %v598 = vld [vmem:[%s1 + $0xe0] sm:$0xff]
    %v599 = vld [vmem:[%s1 + $0xe8] sm:$0xff]
    %v600 = vld [vmem:[%s1 + $0xf0] sm:$0xff]
    %v601 = vld [vmem:[%s1 + $0xf8] sm:$0xff]
    %v602 = vld [vmem:[%s2] sm:$0x3]
    %v603 = vpack.c.bf16 %v539, %v538
    %v604 = vpack.c.bf16 %v541, %v540
    %v605 = vpack.c.bf16 %v543, %v542
    %v606 = vpack.c.bf16 %v545, %v544
    %v607 = vpack.c.bf16 %v547, %v546
    %v608 = vpack.c.bf16 %v549, %v548
    %v609 = vpack.c.bf16 %v551, %v550
    %v610 = vpack.c.bf16 %v553, %v552
    %v611 = vpack.c.bf16 %v555, %v554
    %v612 = vpack.c.bf16 %v557, %v556
    %v613 = vpack.c.bf16 %v559, %v558
    %v614 = vpack.c.bf16 %v561, %v560
    %v615 = vpack.c.bf16 %v563, %v562
    %v616 = vpack.c.bf16 %v565, %v564
    %v617 = vpack.c.bf16 %v567, %v566
    %v618 = vpack.c.bf16 %v569, %v568
    %v619 = vpack.c.bf16 %v571, %v570
    %v620 = vpack.c.bf16 %v573, %v572
    %v621 = vpack.c.bf16 %v575, %v574
    %v622 = vpack.c.bf16 %v577, %v576
    %v623 = vpack.c.bf16 %v579, %v578
    %v624 = vpack.c.bf16 %v581, %v580
    %v625 = vpack.c.bf16 %v583, %v582
    %v626 = vpack.c.bf16 %v585, %v584
    %v627 = vpack.c.bf16 %v587, %v586
    %v628 = vpack.c.bf16 %v589, %v588
    %v629 = vpack.c.bf16 %v591, %v590
    %v630 = vpack.c.bf16 %v593, %v592
    %v631 = vpack.c.bf16 %v595, %v594
    %v632 = vpack.c.bf16 %v597, %v596
    %v633 = vpack.c.bf16 %v599, %v598
    %v634 = vpack.c.bf16 %v601, %v600
    %vm635 = vcmask 261120
    %v637 = vsel %vm635, %v603, 0
    %v640 = vsel %vm635, %v604, 0
    %v643 = vsel %vm635, %v605, 0
    %v646 = vsel %vm635, %v606, 0
    %v649 = vsel %vm635, %v607, 0
    %v652 = vsel %vm635, %v608, 0
    %v655 = vsel %vm635, %v609, 0
    %v658 = vsel %vm635, %v610, 0
    %v661 = vsel %vm635, %v611, 0
    %v664 = vsel %vm635, %v612, 0
    %v667 = vsel %vm635, %v613, 0
    %v670 = vsel %vm635, %v614, 0
    %v673 = vsel %vm635, %v615, 0
    %v676 = vsel %vm635, %v616, 0
    %v679 = vsel %vm635, %v617, 0
    %v682 = vsel %vm635, %v618, 0
    %v685 = vsel %vm635, %v619, 0
    %v688 = vsel %vm635, %v620, 0
    %v691 = vsel %vm635, %v621, 0
    %v694 = vsel %vm635, %v622, 0
    %v697 = vsel %vm635, %v623, 0
    %v700 = vsel %vm635, %v624, 0
    %v703 = vsel %vm635, %v625, 0
    %v706 = vsel %vm635, %v626, 0
    %v709 = vsel %vm635, %v627, 0
    %v712 = vsel %vm635, %v628, 0
    %v715 = vsel %vm635, %v629, 0
    %v718 = vsel %vm635, %v630, 0
    %v721 = vsel %vm635, %v631, 0
    %v724 = vsel %vm635, %v632, 0
    %v727 = vsel %vm635, %v633, 0
    %v730 = vsel %vm635, %v634, 0
    %732 = vmatprep.subr.bf16.mxu0 0
    %733 = vmatpush1.bf16.xpose.msra.mxu0 %v706
    %734 = vmatprep.subr.bf16.mxu0 0
    %735 = vmatpush1.bf16.xpose.msra.mxu0 %v703
    %736 = vmatprep.subr.bf16.mxu0 0
    %737 = vmatpush1.bf16.xpose.msra.mxu0 %v700
    %738 = vmatprep.subr.bf16.mxu0 0
    %739 = vmatpush1.bf16.xpose.msra.mxu0 %v697
    %740 = vmatprep.subr.bf16.mxu0 0
    %741 = vmatpush1.bf16.xpose.msra.mxu0 %v694
    %742 = vmatprep.subr.bf16.mxu0 0
    %743 = vmatpush1.bf16.xpose.msra.mxu0 %v691
    %744 = vmatprep.subr.bf16.mxu0 0
    %745 = vmatpush1.bf16.xpose.msra.mxu0 %v688
    %746 = vmatprep.subr.bf16.mxu0 0
    %747 = vmatpush1.bf16.xpose.msra.mxu0 %v685
    %748 = vmatprep.subr.bf16.mxu0 0
    %749 = vmatpush2.bf16.xpose.msra.mxu0 %v730
    %750 = vmatprep.subr.bf16.mxu0 0
    %751 = vmatpush2.bf16.xpose.msra.mxu0 %v727
    %752 = vmatprep.subr.bf16.mxu0 0
    %753 = vmatpush2.bf16.xpose.msra.mxu0 %v724
    %754 = vmatprep.subr.bf16.mxu0 0
    %755 = vmatpush2.bf16.xpose.msra.mxu0 %v721
    %756 = vmatprep.subr.bf16.mxu0 0
    %757 = vmatpush2.bf16.xpose.msra.mxu0 %v718
    %758 = vmatprep.subr.bf16.mxu0 0
    %759 = vmatpush2.bf16.xpose.msra.mxu0 %v715
    %760 = vmatprep.subr.bf16.mxu0 0
    %761 = vmatpush2.bf16.xpose.msra.mxu0 %v712
    %762 = vmatprep.subr.bf16.mxu0 0
    %763 = vmatpush2.bf16.xpose.msra.mxu0 %v709
    %764 = vmatprep.mubr.bf16.mxu0 0
    %765 = vmatmul.mubr.bf16.gmra.mxu0 %v637
    %v766 = vpop.f32.mrf.mxu0
    %v767 = vadd.f32 0.0, %v766
    %v768 = vpop.f32.mrf.mxu0
    %v769 = vadd.f32 0.0, %v768
    %v770 = vpop.f32.mrf.mxu0
    %v771 = vadd.f32 0.0, %v770
    %v772 = vpop.f32.mrf.mxu0
    %v773 = vadd.f32 0.0, %v772
    %774 = vmatprep.mubr.bf16.mxu0 0
    %775 = vmatmul.mubr.bf16.gmra.mxu0 %v640
    %v776 = vpop.f32.mrf.mxu0
    %v777 = vadd.f32 0.0, %v776
    %v778 = vpop.f32.mrf.mxu0
    %v779 = vadd.f32 0.0, %v778
    %v780 = vpop.f32.mrf.mxu0
    %v781 = vadd.f32 0.0, %v780
    %v782 = vpop.f32.mrf.mxu0
    %v783 = vadd.f32 0.0, %v782
    %784 = vmatprep.mubr.bf16.mxu0 0
    %785 = vmatmul.mubr.bf16.gmra.mxu0 %v643
    %v786 = vpop.f32.mrf.mxu0
    %v787 = vadd.f32 0.0, %v786
    %v788 = vpop.f32.mrf.mxu0
    %v789 = vadd.f32 0.0, %v788
    %v790 = vpop.f32.mrf.mxu0
    %v791 = vadd.f32 0.0, %v790
    %v792 = vpop.f32.mrf.mxu0
    %v793 = vadd.f32 0.0, %v792
    %794 = vmatprep.mubr.bf16.mxu0 0
    %795 = vmatmul.mubr.bf16.gmra.mxu0 %v646
    %v796 = vpop.f32.mrf.mxu0
    %v797 = vadd.f32 0.0, %v796
    %v798 = vpop.f32.mrf.mxu0
    %v799 = vadd.f32 0.0, %v798
    %v800 = vpop.f32.mrf.mxu0
    %v801 = vadd.f32 0.0, %v800
    %v802 = vpop.f32.mrf.mxu0
    %v803 = vadd.f32 0.0, %v802
    %804 = vmatprep.mubr.bf16.mxu0 0
    %805 = vmatmul.mubr.bf16.gmra.mxu0 %v649
    %v806 = vpop.f32.mrf.mxu0
    %v807 = vadd.f32 0.0, %v806
    %v808 = vpop.f32.mrf.mxu0
    %v809 = vadd.f32 0.0, %v808
    %v810 = vpop.f32.mrf.mxu0
    %v811 = vadd.f32 0.0, %v810
    %v812 = vpop.f32.mrf.mxu0
    %v813 = vadd.f32 0.0, %v812
    %814 = vmatprep.mubr.bf16.mxu0 0
    %815 = vmatmul.mubr.bf16.gmra.mxu0 %v652
    %v816 = vpop.f32.mrf.mxu0
    %v817 = vadd.f32 0.0, %v816
    %v818 = vpop.f32.mrf.mxu0
    %v819 = vadd.f32 0.0, %v818
    %v820 = vpop.f32.mrf.mxu0
    %v821 = vadd.f32 0.0, %v820
    %v822 = vpop.f32.mrf.mxu0
    %v823 = vadd.f32 0.0, %v822
    %824 = vmatprep.mubr.bf16.mxu0 0
    %825 = vmatmul.mubr.bf16.gmra.mxu0 %v655
    %v826 = vpop.f32.mrf.mxu0
    %v827 = vadd.f32 0.0, %v826
    %v828 = vpop.f32.mrf.mxu0
    %v829 = vadd.f32 0.0, %v828
    %v830 = vpop.f32.mrf.mxu0
    %v831 = vadd.f32 0.0, %v830
    %v832 = vpop.f32.mrf.mxu0
    %v833 = vadd.f32 0.0, %v832
    %834 = vmatprep.mubr.bf16.mxu0 0
    %835 = vmatmul.mubr.bf16.gmra.mxu0 %v658
    %v836 = vpop.f32.mrf.mxu0
    %v837 = vadd.f32 0.0, %v836
    %v838 = vpop.f32.mrf.mxu0
    %v839 = vadd.f32 0.0, %v838
    %v840 = vpop.f32.mrf.mxu0
    %v841 = vadd.f32 0.0, %v840
    %v842 = vpop.f32.mrf.mxu0
    %v843 = vadd.f32 0.0, %v842
    %844 = vmatprep.mubr.bf16.mxu0 0
    %845 = vmatmul.mubr.bf16.gmra.mxu0 %v661
    %v846 = vpop.f32.mrf.mxu0
    %v847 = vadd.f32 0.0, %v846
    %v848 = vpop.f32.mrf.mxu0
    %v849 = vadd.f32 0.0, %v848
    %v850 = vpop.f32.mrf.mxu0
    %v851 = vadd.f32 0.0, %v850
    %v852 = vpop.f32.mrf.mxu0
    %v853 = vadd.f32 0.0, %v852
    %854 = vmatprep.mubr.bf16.mxu0 0
    %855 = vmatmul.mubr.bf16.gmra.mxu0 %v664
    %v856 = vpop.f32.mrf.mxu0
    %v857 = vadd.f32 0.0, %v856
    %v858 = vpop.f32.mrf.mxu0
    %v859 = vadd.f32 0.0, %v858
    %v860 = vpop.f32.mrf.mxu0
    %v861 = vadd.f32 0.0, %v860
    %v862 = vpop.f32.mrf.mxu0
    %v863 = vadd.f32 0.0, %v862
    %864 = vmatprep.mubr.bf16.mxu0 0
    %865 = vmatmul.mubr.bf16.gmra.mxu0 %v667
    %v866 = vpop.f32.mrf.mxu0
    %v867 = vadd.f32 0.0, %v866
    %v868 = vpop.f32.mrf.mxu0
    %v869 = vadd.f32 0.0, %v868
    %v870 = vpop.f32.mrf.mxu0
    %v871 = vadd.f32 0.0, %v870
    %v872 = vpop.f32.mrf.mxu0
    %v873 = vadd.f32 0.0, %v872
    %874 = vmatprep.mubr.bf16.mxu0 0
    %875 = vmatmul.mubr.bf16.gmra.mxu0 %v670
    %v876 = vpop.f32.mrf.mxu0
    %v877 = vadd.f32 0.0, %v876
    %v878 = vpop.f32.mrf.mxu0
    %v879 = vadd.f32 0.0, %v878
    %v880 = vpop.f32.mrf.mxu0
    %v881 = vadd.f32 0.0, %v880
    %v882 = vpop.f32.mrf.mxu0
    %v883 = vadd.f32 0.0, %v882
    %884 = vmatprep.mubr.bf16.mxu0 0
    %885 = vmatmul.mubr.bf16.gmra.mxu0 %v673
    %v886 = vpop.f32.mrf.mxu0
    %v887 = vadd.f32 0.0, %v886
    %v888 = vpop.f32.mrf.mxu0
    %v889 = vadd.f32 0.0, %v888
    %v890 = vpop.f32.mrf.mxu0
    %v891 = vadd.f32 0.0, %v890
    %v892 = vpop.f32.mrf.mxu0
    %v893 = vadd.f32 0.0, %v892
    %894 = vmatprep.mubr.bf16.mxu0 0
    %895 = vmatmul.mubr.bf16.gmra.mxu0 %v676
    %v896 = vpop.f32.mrf.mxu0
    %v897 = vadd.f32 0.0, %v896
    %v898 = vpop.f32.mrf.mxu0
    %v899 = vadd.f32 0.0, %v898
    %v900 = vpop.f32.mrf.mxu0
    %v901 = vadd.f32 0.0, %v900
    %v902 = vpop.f32.mrf.mxu0
    %v903 = vadd.f32 0.0, %v902
    %904 = vmatprep.mubr.bf16.mxu0 0
    %905 = vmatmul.mubr.bf16.gmra.mxu0 %v679
    %v906 = vpop.f32.mrf.mxu0
    %v907 = vadd.f32 0.0, %v906
    %v908 = vpop.f32.mrf.mxu0
    %v909 = vadd.f32 0.0, %v908
    %v910 = vpop.f32.mrf.mxu0
    %v911 = vadd.f32 0.0, %v910
    %v912 = vpop.f32.mrf.mxu0
    %v913 = vadd.f32 0.0, %v912
    %914 = vmatprep.mubr.bf16.mxu0 0
    %915 = vmatmul.mubr.bf16.gmra.mxu0 %v682
    %v916 = vpop.f32.mrf.mxu0
    %v917 = vadd.f32 0.0, %v916
    %v918 = vpop.f32.mrf.mxu0
    %v919 = vadd.f32 0.0, %v918
    %v920 = vpop.f32.mrf.mxu0
    %v921 = vadd.f32 0.0, %v920
    %v922 = vpop.f32.mrf.mxu0
    %v923 = vadd.f32 0.0, %v922
    %924 = vdwg.mxu0
    %v925 = vmul.f32 %v767, 2.0
    %v926 = vmul.f32 %v769, 2.0
    %v927 = vmul.f32 %v771, 2.0
    %v928 = vmul.f32 %v773, 2.0
    %v929 = vmul.f32 %v777, 2.0
    %v930 = vmul.f32 %v779, 2.0
    %v931 = vmul.f32 %v781, 2.0
    %v932 = vmul.f32 %v783, 2.0
    %v933 = vmul.f32 %v787, 2.0
    %v934 = vmul.f32 %v789, 2.0
    %v935 = vmul.f32 %v791, 2.0
    %v936 = vmul.f32 %v793, 2.0
    %v937 = vmul.f32 %v797, 2.0
    %v938 = vmul.f32 %v799, 2.0
    %v939 = vmul.f32 %v801, 2.0
    %v940 = vmul.f32 %v803, 2.0
    %v941 = vmul.f32 %v807, 2.0
    %v942 = vmul.f32 %v809, 2.0
    %v943 = vmul.f32 %v811, 2.0
    %v944 = vmul.f32 %v813, 2.0
    %v945 = vmul.f32 %v817, 2.0
    %v946 = vmul.f32 %v819, 2.0
    %v947 = vmul.f32 %v821, 2.0
    %v948 = vmul.f32 %v823, 2.0
    %v949 = vmul.f32 %v827, 2.0
    %v950 = vmul.f32 %v829, 2.0
    %v951 = vmul.f32 %v831, 2.0
    %v952 = vmul.f32 %v833, 2.0
    %v953 = vmul.f32 %v837, 2.0
    %v954 = vmul.f32 %v839, 2.0
    %v955 = vmul.f32 %v841, 2.0
    %v956 = vmul.f32 %v843, 2.0
    %v957 = vmul.f32 %v847, 2.0
    %v958 = vmul.f32 %v849, 2.0
    %v959 = vmul.f32 %v851, 2.0
    %v960 = vmul.f32 %v853, 2.0
    %v961 = vmul.f32 %v857, 2.0
    %v962 = vmul.f32 %v859, 2.0
    %v963 = vmul.f32 %v861, 2.0
    %v964 = vmul.f32 %v863, 2.0
    %v965 = vmul.f32 %v867, 2.0
    %v966 = vmul.f32 %v869, 2.0
    %v967 = vmul.f32 %v871, 2.0
    %v968 = vmul.f32 %v873, 2.0
    %v969 = vmul.f32 %v877, 2.0
    %v970 = vmul.f32 %v879, 2.0
    %v971 = vmul.f32 %v881, 2.0
    %v972 = vmul.f32 %v883, 2.0
    %v973 = vmul.f32 %v887, 2.0
    %v974 = vmul.f32 %v889, 2.0
    %v975 = vmul.f32 %v891, 2.0
    %v976 = vmul.f32 %v893, 2.0
    %v977 = vmul.f32 %v897, 2.0
    %v978 = vmul.f32 %v899, 2.0
    %v979 = vmul.f32 %v901, 2.0
    %v980 = vmul.f32 %v903, 2.0
    %v981 = vmul.f32 %v907, 2.0
    %v982 = vmul.f32 %v909, 2.0
    %v983 = vmul.f32 %v911, 2.0
    %v984 = vmul.f32 %v913, 2.0
    %v985 = vmul.f32 %v917, 2.0
    %v986 = vmul.f32 %v919, 2.0
    %v987 = vmul.f32 %v921, 2.0
    %v988 = vmul.f32 %v923, 2.0
    %v990 = vlaneseq
    %v991 = vshrl.u32 %v990, 7
    %v992 = vsub.s32 0, %v991
    %v993 = vrot.slane %v602, %v992
    %v994 = vlaneseq
    %v995 = vshrl.u32 %v994, 7
    %v996 = vsub.s32 1, %v995
    %v997 = vrot.slane %v602, %v996
    %v1000 = vsub.f32 %v993, %v925
    %v1001 = vsub.f32 %v997, %v926
    %v1002 = vsub.f32 %v993, %v927
    %v1003 = vsub.f32 %v997, %v928
    %v1004 = vsub.f32 %v993, %v929
    %v1005 = vsub.f32 %v997, %v930
    %v1006 = vsub.f32 %v993, %v931
    %v1007 = vsub.f32 %v997, %v932
    %v1008 = vsub.f32 %v993, %v933
    %v1009 = vsub.f32 %v997, %v934
    %v1010 = vsub.f32 %v993, %v935
    %v1011 = vsub.f32 %v997, %v936
    %v1012 = vsub.f32 %v993, %v937
    %v1013 = vsub.f32 %v997, %v938
    %v1014 = vsub.f32 %v993, %v939
    %v1015 = vsub.f32 %v997, %v940
    %v1016 = vsub.f32 %v993, %v941
    %v1017 = vsub.f32 %v997, %v942
    %v1018 = vsub.f32 %v993, %v943
    %v1019 = vsub.f32 %v997, %v944
    %v1020 = vsub.f32 %v993, %v945
    %v1021 = vsub.f32 %v997, %v946
    %v1022 = vsub.f32 %v993, %v947
    %v1023 = vsub.f32 %v997, %v948
    %v1024 = vsub.f32 %v993, %v949
    %v1025 = vsub.f32 %v997, %v950
    %v1026 = vsub.f32 %v993, %v951
    %v1027 = vsub.f32 %v997, %v952
    %v1028 = vsub.f32 %v993, %v953
    %v1029 = vsub.f32 %v997, %v954
    %v1030 = vsub.f32 %v993, %v955
    %v1031 = vsub.f32 %v997, %v956
    %v1032 = vsub.f32 %v993, %v957
    %v1033 = vsub.f32 %v997, %v958
    %v1034 = vsub.f32 %v993, %v959
    %v1035 = vsub.f32 %v997, %v960
    %v1036 = vsub.f32 %v993, %v961
    %v1037 = vsub.f32 %v997, %v962
    %v1038 = vsub.f32 %v993, %v963
    %v1039 = vsub.f32 %v997, %v964
    %v1040 = vsub.f32 %v993, %v965
    %v1041 = vsub.f32 %v997, %v966
    %v1042 = vsub.f32 %v993, %v967
    %v1043 = vsub.f32 %v997, %v968
    %v1044 = vsub.f32 %v993, %v969
    %v1045 = vsub.f32 %v997, %v970
    %v1046 = vsub.f32 %v993, %v971
    %v1047 = vsub.f32 %v997, %v972
    %v1048 = vsub.f32 %v993, %v973
    %v1049 = vsub.f32 %v997, %v974
    %v1050 = vsub.f32 %v993, %v975
    %v1051 = vsub.f32 %v997, %v976
    %v1052 = vsub.f32 %v993, %v977
    %v1053 = vsub.f32 %v997, %v978
    %v1054 = vsub.f32 %v993, %v979
    %v1055 = vsub.f32 %v997, %v980
    %v1056 = vsub.f32 %v993, %v981
    %v1057 = vsub.f32 %v997, %v982
    %v1058 = vsub.f32 %v993, %v983
    %v1059 = vsub.f32 %v997, %v984
    %v1060 = vsub.f32 %v993, %v985
    %v1061 = vsub.f32 %v997, %v986
    %v1062 = vsub.f32 %v993, %v987
    %v1063 = vsub.f32 %v997, %v988
    %v1064 = vmin.f32 %v1000, %v1001
    %1065 = vmin.xlane.f32.xlu0 %v1064
    %v1066 = vpop.xlane.xlu0 %1065
    %v1067 = vmin.f32 %v1002, %v1003
    %1068 = vmin.xlane.f32.xlu0 %v1067
    %v1069 = vpop.xlane.xlu0 %1068
    %v1070 = vmin.f32 %v1004, %v1005
    %1071 = vmin.xlane.f32.xlu0 %v1070
    %v1072 = vpop.xlane.xlu0 %1071
    %v1073 = vmin.f32 %v1006, %v1007
    %1074 = vmin.xlane.f32.xlu0 %v1073
    %v1075 = vpop.xlane.xlu0 %1074
    %v1076 = vmin.f32 %v1008, %v1009
    %1077 = vmin.xlane.f32.xlu0 %v1076
    %v1078 = vpop.xlane.xlu0 %1077
    %v1079 = vmin.f32 %v1010, %v1011
    %1080 = vmin.xlane.f32.xlu0 %v1079
    %v1081 = vpop.xlane.xlu0 %1080
    %v1082 = vmin.f32 %v1012, %v1013
    %1083 = vmin.xlane.f32.xlu0 %v1082
    %v1084 = vpop.xlane.xlu0 %1083
    %v1085 = vmin.f32 %v1014, %v1015
    %1086 = vmin.xlane.f32.xlu0 %v1085
    %v1087 = vpop.xlane.xlu0 %1086
    %v1088 = vmin.f32 %v1016, %v1017
    %1089 = vmin.xlane.f32.xlu0 %v1088
    %v1090 = vpop.xlane.xlu0 %1089
    %v1091 = vmin.f32 %v1018, %v1019
    %1092 = vmin.xlane.f32.xlu0 %v1091
    %v1093 = vpop.xlane.xlu0 %1092
    %v1094 = vmin.f32 %v1020, %v1021
    %1095 = vmin.xlane.f32.xlu0 %v1094
    %v1096 = vpop.xlane.xlu0 %1095
    %v1097 = vmin.f32 %v1022, %v1023
    %1098 = vmin.xlane.f32.xlu0 %v1097
    %v1099 = vpop.xlane.xlu0 %1098
    %v1100 = vmin.f32 %v1024, %v1025
    %1101 = vmin.xlane.f32.xlu0 %v1100
    %v1102 = vpop.xlane.xlu0 %1101
    %v1103 = vmin.f32 %v1026, %v1027
    %1104 = vmin.xlane.f32.xlu0 %v1103
    %v1105 = vpop.xlane.xlu0 %1104
    %v1106 = vmin.f32 %v1028, %v1029
    %1107 = vmin.xlane.f32.xlu0 %v1106
    %v1108 = vpop.xlane.xlu0 %1107
    %v1109 = vmin.f32 %v1030, %v1031
    %1110 = vmin.xlane.f32.xlu0 %v1109
    %v1111 = vpop.xlane.xlu0 %1110
    %v1112 = vmin.f32 %v1032, %v1033
    %1113 = vmin.xlane.f32.xlu0 %v1112
    %v1114 = vpop.xlane.xlu0 %1113
    %v1115 = vmin.f32 %v1034, %v1035
    %1116 = vmin.xlane.f32.xlu0 %v1115
    %v1117 = vpop.xlane.xlu0 %1116
    %v1118 = vmin.f32 %v1036, %v1037
    %1119 = vmin.xlane.f32.xlu0 %v1118
    %v1120 = vpop.xlane.xlu0 %1119
    %v1121 = vmin.f32 %v1038, %v1039
    %1122 = vmin.xlane.f32.xlu0 %v1121
    %v1123 = vpop.xlane.xlu0 %1122
    %v1124 = vmin.f32 %v1040, %v1041
    %1125 = vmin.xlane.f32.xlu0 %v1124
    %v1126 = vpop.xlane.xlu0 %1125
    %v1127 = vmin.f32 %v1042, %v1043
    %1128 = vmin.xlane.f32.xlu0 %v1127
    %v1129 = vpop.xlane.xlu0 %1128
    %v1130 = vmin.f32 %v1044, %v1045
    %1131 = vmin.xlane.f32.xlu0 %v1130
    %v1132 = vpop.xlane.xlu0 %1131
    %v1133 = vmin.f32 %v1046, %v1047
    %1134 = vmin.xlane.f32.xlu0 %v1133
    %v1135 = vpop.xlane.xlu0 %1134
    %v1136 = vmin.f32 %v1048, %v1049
    %1137 = vmin.xlane.f32.xlu0 %v1136
    %v1138 = vpop.xlane.xlu0 %1137
    %v1139 = vmin.f32 %v1050, %v1051
    %1140 = vmin.xlane.f32.xlu0 %v1139
    %v1141 = vpop.xlane.xlu0 %1140
    %v1142 = vmin.f32 %v1052, %v1053
    %1143 = vmin.xlane.f32.xlu0 %v1142
    %v1144 = vpop.xlane.xlu0 %1143
    %v1145 = vmin.f32 %v1054, %v1055
    %1146 = vmin.xlane.f32.xlu0 %v1145
    %v1147 = vpop.xlane.xlu0 %1146
    %v1148 = vmin.f32 %v1056, %v1057
    %1149 = vmin.xlane.f32.xlu0 %v1148
    %v1150 = vpop.xlane.xlu0 %1149
    %v1151 = vmin.f32 %v1058, %v1059
    %1152 = vmin.xlane.f32.xlu0 %v1151
    %v1153 = vpop.xlane.xlu0 %1152
    %v1154 = vmin.f32 %v1060, %v1061
    %1155 = vmin.xlane.f32.xlu0 %v1154
    %v1156 = vpop.xlane.xlu0 %1155
    %v1157 = vmin.f32 %v1062, %v1063
    %1158 = vmin.xlane.f32.xlu0 %v1157
    %v1159 = vpop.xlane.xlu0 %1158
    %v1160 = vlaneseq
    %v1161 = vand.u32 %v1160, 127
    %v1162 = vadd.s32 %v1161, 128
    %vm1163 = vcmp.eq.f32.partialorder %v1000, %v1066
    %vm1164 = vcmp.eq.f32.partialorder %v1001, %v1066
    %vm1165 = vcmp.eq.f32.partialorder %v1002, %v1069
    %vm1166 = vcmp.eq.f32.partialorder %v1003, %v1069
    %vm1167 = vcmp.eq.f32.partialorder %v1004, %v1072
    %vm1168 = vcmp.eq.f32.partialorder %v1005, %v1072
    %vm1169 = vcmp.eq.f32.partialorder %v1006, %v1075
    %vm1170 = vcmp.eq.f32.partialorder %v1007, %v1075
    %vm1171 = vcmp.eq.f32.partialorder %v1008, %v1078
    %vm1172 = vcmp.eq.f32.partialorder %v1009, %v1078
    %vm1173 = vcmp.eq.f32.partialorder %v1010, %v1081
    %vm1174 = vcmp.eq.f32.partialorder %v1011, %v1081
    %vm1175 = vcmp.eq.f32.partialorder %v1012, %v1084
    %vm1176 = vcmp.eq.f32.partialorder %v1013, %v1084
    %vm1177 = vcmp.eq.f32.partialorder %v1014, %v1087
    %vm1178 = vcmp.eq.f32.partialorder %v1015, %v1087
    %vm1179 = vcmp.eq.f32.partialorder %v1016, %v1090
    %vm1180 = vcmp.eq.f32.partialorder %v1017, %v1090
    %vm1181 = vcmp.eq.f32.partialorder %v1018, %v1093
    %vm1182 = vcmp.eq.f32.partialorder %v1019, %v1093
    %vm1183 = vcmp.eq.f32.partialorder %v1020, %v1096
    %vm1184 = vcmp.eq.f32.partialorder %v1021, %v1096
    %vm1185 = vcmp.eq.f32.partialorder %v1022, %v1099
    %vm1186 = vcmp.eq.f32.partialorder %v1023, %v1099
    %vm1187 = vcmp.eq.f32.partialorder %v1024, %v1102
    %vm1188 = vcmp.eq.f32.partialorder %v1025, %v1102
    %vm1189 = vcmp.eq.f32.partialorder %v1026, %v1105
    %vm1190 = vcmp.eq.f32.partialorder %v1027, %v1105
    %vm1191 = vcmp.eq.f32.partialorder %v1028, %v1108
    %vm1192 = vcmp.eq.f32.partialorder %v1029, %v1108
    %vm1193 = vcmp.eq.f32.partialorder %v1030, %v1111
    %vm1194 = vcmp.eq.f32.partialorder %v1031, %v1111
    %vm1195 = vcmp.eq.f32.partialorder %v1032, %v1114
    %vm1196 = vcmp.eq.f32.partialorder %v1033, %v1114
    %vm1197 = vcmp.eq.f32.partialorder %v1034, %v1117
    %vm1198 = vcmp.eq.f32.partialorder %v1035, %v1117
    %vm1199 = vcmp.eq.f32.partialorder %v1036, %v1120
    %vm1200 = vcmp.eq.f32.partialorder %v1037, %v1120
    %vm1201 = vcmp.eq.f32.partialorder %v1038, %v1123
    %vm1202 = vcmp.eq.f32.partialorder %v1039, %v1123
    %vm1203 = vcmp.eq.f32.partialorder %v1040, %v1126
    %vm1204 = vcmp.eq.f32.partialorder %v1041, %v1126
    %vm1205 = vcmp.eq.f32.partialorder %v1042, %v1129
    %vm1206 = vcmp.eq.f32.partialorder %v1043, %v1129
    %vm1207 = vcmp.eq.f32.partialorder %v1044, %v1132
    %vm1208 = vcmp.eq.f32.partialorder %v1045, %v1132
    %vm1209 = vcmp.eq.f32.partialorder %v1046, %v1135
    %vm1210 = vcmp.eq.f32.partialorder %v1047, %v1135
    %vm1211 = vcmp.eq.f32.partialorder %v1048, %v1138
    %vm1212 = vcmp.eq.f32.partialorder %v1049, %v1138
    %vm1213 = vcmp.eq.f32.partialorder %v1050, %v1141
    %vm1214 = vcmp.eq.f32.partialorder %v1051, %v1141
    %vm1215 = vcmp.eq.f32.partialorder %v1052, %v1144
    %vm1216 = vcmp.eq.f32.partialorder %v1053, %v1144
    %vm1217 = vcmp.eq.f32.partialorder %v1054, %v1147
    %vm1218 = vcmp.eq.f32.partialorder %v1055, %v1147
    %vm1219 = vcmp.eq.f32.partialorder %v1056, %v1150
    %vm1220 = vcmp.eq.f32.partialorder %v1057, %v1150
    %vm1221 = vcmp.eq.f32.partialorder %v1058, %v1153
    %vm1222 = vcmp.eq.f32.partialorder %v1059, %v1153
    %vm1223 = vcmp.eq.f32.partialorder %v1060, %v1156
    %vm1224 = vcmp.eq.f32.partialorder %v1061, %v1156
    %vm1225 = vcmp.eq.f32.partialorder %v1062, %v1159
    %vm1226 = vcmp.eq.f32.partialorder %v1063, %v1159
    %v1227 = vsel %vm1163, %v1161, 2147483647
    %v1228 = vsel %vm1164, %v1162, 2147483647
    %v1229 = vsel %vm1165, %v1161, 2147483647
    %v1230 = vsel %vm1166, %v1162, 2147483647
    %v1231 = vsel %vm1167, %v1161, 2147483647
    %v1232 = vsel %vm1168, %v1162, 2147483647
    %v1233 = vsel %vm1169, %v1161, 2147483647
    %v1234 = vsel %vm1170, %v1162, 2147483647
    %v1235 = vsel %vm1171, %v1161, 2147483647
    %v1236 = vsel %vm1172, %v1162, 2147483647
    %v1237 = vsel %vm1173, %v1161, 2147483647
    %v1238 = vsel %vm1174, %v1162, 2147483647
    %v1239 = vsel %vm1175, %v1161, 2147483647
    %v1240 = vsel %vm1176, %v1162, 2147483647
    %v1241 = vsel %vm1177, %v1161, 2147483647
    %v1242 = vsel %vm1178, %v1162, 2147483647
    %v1243 = vsel %vm1179, %v1161, 2147483647
    %v1244 = vsel %vm1180, %v1162, 2147483647
    %v1245 = vsel %vm1181, %v1161, 2147483647
    %v1246 = vsel %vm1182, %v1162, 2147483647
    %v1247 = vsel %vm1183, %v1161, 2147483647
    %v1248 = vsel %vm1184, %v1162, 2147483647
    %v1249 = vsel %vm1185, %v1161, 2147483647
    %v1250 = vsel %vm1186, %v1162, 2147483647
    %v1251 = vsel %vm1187, %v1161, 2147483647
    %v1252 = vsel %vm1188, %v1162, 2147483647
    %v1253 = vsel %vm1189, %v1161, 2147483647
    %v1254 = vsel %vm1190, %v1162, 2147483647
    %v1255 = vsel %vm1191, %v1161, 2147483647
    %v1256 = vsel %vm1192, %v1162, 2147483647
    %v1257 = vsel %vm1193, %v1161, 2147483647
    %v1258 = vsel %vm1194, %v1162, 2147483647
    %v1259 = vsel %vm1195, %v1161, 2147483647
    %v1260 = vsel %vm1196, %v1162, 2147483647
    %v1261 = vsel %vm1197, %v1161, 2147483647
    %v1262 = vsel %vm1198, %v1162, 2147483647
    %v1263 = vsel %vm1199, %v1161, 2147483647
    %v1264 = vsel %vm1200, %v1162, 2147483647
    %v1265 = vsel %vm1201, %v1161, 2147483647
    %v1266 = vsel %vm1202, %v1162, 2147483647
    %v1267 = vsel %vm1203, %v1161, 2147483647
    %v1268 = vsel %vm1204, %v1162, 2147483647
    %v1269 = vsel %vm1205, %v1161, 2147483647
    %v1270 = vsel %vm1206, %v1162, 2147483647
    %v1271 = vsel %vm1207, %v1161, 2147483647
    %v1272 = vsel %vm1208, %v1162, 2147483647
    %v1273 = vsel %vm1209, %v1161, 2147483647
    %v1274 = vsel %vm1210, %v1162, 2147483647
    %v1275 = vsel %vm1211, %v1161, 2147483647
    %v1276 = vsel %vm1212, %v1162, 2147483647
    %v1277 = vsel %vm1213, %v1161, 2147483647
    %v1278 = vsel %vm1214, %v1162, 2147483647
    %v1279 = vsel %vm1215, %v1161, 2147483647
    %v1280 = vsel %vm1216, %v1162, 2147483647
    %v1281 = vsel %vm1217, %v1161, 2147483647
    %v1282 = vsel %vm1218, %v1162, 2147483647
    %v1283 = vsel %vm1219, %v1161, 2147483647
    %v1284 = vsel %vm1220, %v1162, 2147483647
    %v1285 = vsel %vm1221, %v1161, 2147483647
    %v1286 = vsel %vm1222, %v1162, 2147483647
    %v1287 = vsel %vm1223, %v1161, 2147483647
    %v1288 = vsel %vm1224, %v1162, 2147483647
    %v1289 = vsel %vm1225, %v1161, 2147483647
    %v1290 = vsel %vm1226, %v1162, 2147483647
    %vm1291 = vcmp.lt.s32.totalorder %v1227, %v1228
    %v1292 = vsel %vm1291, %v1227, %v1228
    %v1293 = vand.u32 %v1292, 65535
    %v1294 = vshra.s32 %v1292, 16
    %v1295 = vcvt.s32.f32 %v1293
    %v1296 = vcvt.s32.f32 %v1294
    %1297 = vmin.xlane.f32.xlu0 %v1296
    %v1298 = vpop.xlane.xlu0 %1297
    %vm1299 = vcmp.eq.f32.partialorder %v1296, %v1298
    %v1300 = vsel %vm1299, %v1295, inf
    %1301 = vmin.xlane.f32.xlu0 %v1300
    %v1302 = vpop.xlane.xlu0 %1301
    %v1303 = vcvt.f32.s32 %v1302
    %v1304 = vcvt.f32.s32 %v1298
    %v1305 = vshll.u32 %v1304, 16
    %v1306 = vadd.s32 %v1305, %v1303
    %vm1307 = vcmp.lt.s32.totalorder %v1229, %v1230
    %v1308 = vsel %vm1307, %v1229, %v1230
    %v1309 = vand.u32 %v1308, 65535
    %v1310 = vshra.s32 %v1308, 16
    %v1311 = vcvt.s32.f32 %v1309
    %v1312 = vcvt.s32.f32 %v1310
    %1313 = vmin.xlane.f32.xlu0 %v1312
    %v1314 = vpop.xlane.xlu0 %1313
    %vm1315 = vcmp.eq.f32.partialorder %v1312, %v1314
    %v1316 = vsel %vm1315, %v1311, inf
    %1317 = vmin.xlane.f32.xlu0 %v1316
    %v1318 = vpop.xlane.xlu0 %1317
    %v1319 = vcvt.f32.s32 %v1318
    %v1320 = vcvt.f32.s32 %v1314
    %v1321 = vshll.u32 %v1320, 16
    %v1322 = vadd.s32 %v1321, %v1319
    %vm1323 = vcmp.lt.s32.totalorder %v1231, %v1232
    %v1324 = vsel %vm1323, %v1231, %v1232
    %v1325 = vand.u32 %v1324, 65535
    %v1326 = vshra.s32 %v1324, 16
    %v1327 = vcvt.s32.f32 %v1325
    %v1328 = vcvt.s32.f32 %v1326
    %1329 = vmin.xlane.f32.xlu0 %v1328
    %v1330 = vpop.xlane.xlu0 %1329
    %vm1331 = vcmp.eq.f32.partialorder %v1328, %v1330
    %v1332 = vsel %vm1331, %v1327, inf
    %1333 = vmin.xlane.f32.xlu0 %v1332
    %v1334 = vpop.xlane.xlu0 %1333
    %v1335 = vcvt.f32.s32 %v1334
    %v1336 = vcvt.f32.s32 %v1330
    %v1337 = vshll.u32 %v1336, 16
    %v1338 = vadd.s32 %v1337, %v1335
    %vm1339 = vcmp.lt.s32.totalorder %v1233, %v1234
    %v1340 = vsel %vm1339, %v1233, %v1234
    %v1341 = vand.u32 %v1340, 65535
    %v1342 = vshra.s32 %v1340, 16
    %v1343 = vcvt.s32.f32 %v1341
    %v1344 = vcvt.s32.f32 %v1342
    %1345 = vmin.xlane.f32.xlu0 %v1344
    %v1346 = vpop.xlane.xlu0 %1345
    %vm1347 = vcmp.eq.f32.partialorder %v1344, %v1346
    %v1348 = vsel %vm1347, %v1343, inf
    %1349 = vmin.xlane.f32.xlu0 %v1348
    %v1350 = vpop.xlane.xlu0 %1349
    %v1351 = vcvt.f32.s32 %v1350
    %v1352 = vcvt.f32.s32 %v1346
    %v1353 = vshll.u32 %v1352, 16
    %v1354 = vadd.s32 %v1353, %v1351
    %vm1355 = vcmp.lt.s32.totalorder %v1235, %v1236
    %v1356 = vsel %vm1355, %v1235, %v1236
    %v1357 = vand.u32 %v1356, 65535
    %v1358 = vshra.s32 %v1356, 16
    %v1359 = vcvt.s32.f32 %v1357
    %v1360 = vcvt.s32.f32 %v1358
    %1361 = vmin.xlane.f32.xlu0 %v1360
    %v1362 = vpop.xlane.xlu0 %1361
    %vm1363 = vcmp.eq.f32.partialorder %v1360, %v1362
    %v1364 = vsel %vm1363, %v1359, inf
    %1365 = vmin.xlane.f32.xlu0 %v1364
    %v1366 = vpop.xlane.xlu0 %1365
    %v1367 = vcvt.f32.s32 %v1366
    %v1368 = vcvt.f32.s32 %v1362
    %v1369 = vshll.u32 %v1368, 16
    %v1370 = vadd.s32 %v1369, %v1367
    %vm1371 = vcmp.lt.s32.totalorder %v1237, %v1238
    %v1372 = vsel %vm1371, %v1237, %v1238
    %v1373 = vand.u32 %v1372, 65535
    %v1374 = vshra.s32 %v1372, 16
    %v1375 = vcvt.s32.f32 %v1373
    %v1376 = vcvt.s32.f32 %v1374
    %1377 = vmin.xlane.f32.xlu0 %v1376
    %v1378 = vpop.xlane.xlu0 %1377
    %vm1379 = vcmp.eq.f32.partialorder %v1376, %v1378
    %v1380 = vsel %vm1379, %v1375, inf
    %1381 = vmin.xlane.f32.xlu0 %v1380
    %v1382 = vpop.xlane.xlu0 %1381
    %v1383 = vcvt.f32.s32 %v1382
    %v1384 = vcvt.f32.s32 %v1378
    %v1385 = vshll.u32 %v1384, 16
    %v1386 = vadd.s32 %v1385, %v1383
    %vm1387 = vcmp.lt.s32.totalorder %v1239, %v1240
    %v1388 = vsel %vm1387, %v1239, %v1240
    %v1389 = vand.u32 %v1388, 65535
    %v1390 = vshra.s32 %v1388, 16
    %v1391 = vcvt.s32.f32 %v1389
    %v1392 = vcvt.s32.f32 %v1390
    %1393 = vmin.xlane.f32.xlu0 %v1392
    %v1394 = vpop.xlane.xlu0 %1393
    %vm1395 = vcmp.eq.f32.partialorder %v1392, %v1394
    %v1396 = vsel %vm1395, %v1391, inf
    %1397 = vmin.xlane.f32.xlu0 %v1396
    %v1398 = vpop.xlane.xlu0 %1397
    %v1399 = vcvt.f32.s32 %v1398
    %v1400 = vcvt.f32.s32 %v1394
    %v1401 = vshll.u32 %v1400, 16
    %v1402 = vadd.s32 %v1401, %v1399
    %vm1403 = vcmp.lt.s32.totalorder %v1241, %v1242
    %v1404 = vsel %vm1403, %v1241, %v1242
    %v1405 = vand.u32 %v1404, 65535
    %v1406 = vshra.s32 %v1404, 16
    %v1407 = vcvt.s32.f32 %v1405
    %v1408 = vcvt.s32.f32 %v1406
    %1409 = vmin.xlane.f32.xlu0 %v1408
    %v1410 = vpop.xlane.xlu0 %1409
    %vm1411 = vcmp.eq.f32.partialorder %v1408, %v1410
    %v1412 = vsel %vm1411, %v1407, inf
    %1413 = vmin.xlane.f32.xlu0 %v1412
    %v1414 = vpop.xlane.xlu0 %1413
    %v1415 = vcvt.f32.s32 %v1414
    %v1416 = vcvt.f32.s32 %v1410
    %v1417 = vshll.u32 %v1416, 16
    %v1418 = vadd.s32 %v1417, %v1415
    %vm1419 = vcmp.lt.s32.totalorder %v1243, %v1244
    %v1420 = vsel %vm1419, %v1243, %v1244
    %v1421 = vand.u32 %v1420, 65535
    %v1422 = vshra.s32 %v1420, 16
    %v1423 = vcvt.s32.f32 %v1421
    %v1424 = vcvt.s32.f32 %v1422
    %1425 = vmin.xlane.f32.xlu0 %v1424
    %v1426 = vpop.xlane.xlu0 %1425
    %vm1427 = vcmp.eq.f32.partialorder %v1424, %v1426
    %v1428 = vsel %vm1427, %v1423, inf
    %1429 = vmin.xlane.f32.xlu0 %v1428
    %v1430 = vpop.xlane.xlu0 %1429
    %v1431 = vcvt.f32.s32 %v1430
    %v1432 = vcvt.f32.s32 %v1426
    %v1433 = vshll.u32 %v1432, 16
    %v1434 = vadd.s32 %v1433, %v1431
    %vm1435 = vcmp.lt.s32.totalorder %v1245, %v1246
    %v1436 = vsel %vm1435, %v1245, %v1246
    %v1437 = vand.u32 %v1436, 65535
    %v1438 = vshra.s32 %v1436, 16
    %v1439 = vcvt.s32.f32 %v1437
    %v1440 = vcvt.s32.f32 %v1438
    %1441 = vmin.xlane.f32.xlu0 %v1440
    %v1442 = vpop.xlane.xlu0 %1441
    %vm1443 = vcmp.eq.f32.partialorder %v1440, %v1442
    %v1444 = vsel %vm1443, %v1439, inf
    %1445 = vmin.xlane.f32.xlu0 %v1444
    %v1446 = vpop.xlane.xlu0 %1445
    %v1447 = vcvt.f32.s32 %v1446
    %v1448 = vcvt.f32.s32 %v1442
    %v1449 = vshll.u32 %v1448, 16
    %v1450 = vadd.s32 %v1449, %v1447
    %vm1451 = vcmp.lt.s32.totalorder %v1247, %v1248
    %v1452 = vsel %vm1451, %v1247, %v1248
    %v1453 = vand.u32 %v1452, 65535
    %v1454 = vshra.s32 %v1452, 16
    %v1455 = vcvt.s32.f32 %v1453
    %v1456 = vcvt.s32.f32 %v1454
    %1457 = vmin.xlane.f32.xlu0 %v1456
    %v1458 = vpop.xlane.xlu0 %1457
    %vm1459 = vcmp.eq.f32.partialorder %v1456, %v1458
    %v1460 = vsel %vm1459, %v1455, inf
    %1461 = vmin.xlane.f32.xlu0 %v1460
    %v1462 = vpop.xlane.xlu0 %1461
    %v1463 = vcvt.f32.s32 %v1462
    %v1464 = vcvt.f32.s32 %v1458
    %v1465 = vshll.u32 %v1464, 16
    %v1466 = vadd.s32 %v1465, %v1463
    %vm1467 = vcmp.lt.s32.totalorder %v1249, %v1250
    %v1468 = vsel %vm1467, %v1249, %v1250
    %v1469 = vand.u32 %v1468, 65535
    %v1470 = vshra.s32 %v1468, 16
    %v1471 = vcvt.s32.f32 %v1469
    %v1472 = vcvt.s32.f32 %v1470
    %1473 = vmin.xlane.f32.xlu0 %v1472
    %v1474 = vpop.xlane.xlu0 %1473
    %vm1475 = vcmp.eq.f32.partialorder %v1472, %v1474
    %v1476 = vsel %vm1475, %v1471, inf
    %1477 = vmin.xlane.f32.xlu0 %v1476
    %v1478 = vpop.xlane.xlu0 %1477
    %v1479 = vcvt.f32.s32 %v1478
    %v1480 = vcvt.f32.s32 %v1474
    %v1481 = vshll.u32 %v1480, 16
    %v1482 = vadd.s32 %v1481, %v1479
    %vm1483 = vcmp.lt.s32.totalorder %v1251, %v1252
    %v1484 = vsel %vm1483, %v1251, %v1252
    %v1485 = vand.u32 %v1484, 65535
    %v1486 = vshra.s32 %v1484, 16
    %v1487 = vcvt.s32.f32 %v1485
    %v1488 = vcvt.s32.f32 %v1486
    %1489 = vmin.xlane.f32.xlu0 %v1488
    %v1490 = vpop.xlane.xlu0 %1489
    %vm1491 = vcmp.eq.f32.partialorder %v1488, %v1490
    %v1492 = vsel %vm1491, %v1487, inf
    %1493 = vmin.xlane.f32.xlu0 %v1492
    %v1494 = vpop.xlane.xlu0 %1493
    %v1495 = vcvt.f32.s32 %v1494
    %v1496 = vcvt.f32.s32 %v1490
    %v1497 = vshll.u32 %v1496, 16
    %v1498 = vadd.s32 %v1497, %v1495
    %vm1499 = vcmp.lt.s32.totalorder %v1253, %v1254
    %v1500 = vsel %vm1499, %v1253, %v1254
    %v1501 = vand.u32 %v1500, 65535
    %v1502 = vshra.s32 %v1500, 16
    %v1503 = vcvt.s32.f32 %v1501
    %v1504 = vcvt.s32.f32 %v1502
    %1505 = vmin.xlane.f32.xlu0 %v1504
    %v1506 = vpop.xlane.xlu0 %1505
    %vm1507 = vcmp.eq.f32.partialorder %v1504, %v1506
    %v1508 = vsel %vm1507, %v1503, inf
    %1509 = vmin.xlane.f32.xlu0 %v1508
    %v1510 = vpop.xlane.xlu0 %1509
    %v1511 = vcvt.f32.s32 %v1510
    %v1512 = vcvt.f32.s32 %v1506
    %v1513 = vshll.u32 %v1512, 16
    %v1514 = vadd.s32 %v1513, %v1511
    %vm1515 = vcmp.lt.s32.totalorder %v1255, %v1256
    %v1516 = vsel %vm1515, %v1255, %v1256
    %v1517 = vand.u32 %v1516, 65535
    %v1518 = vshra.s32 %v1516, 16
    %v1519 = vcvt.s32.f32 %v1517
    %v1520 = vcvt.s32.f32 %v1518
    %1521 = vmin.xlane.f32.xlu0 %v1520
    %v1522 = vpop.xlane.xlu0 %1521
    %vm1523 = vcmp.eq.f32.partialorder %v1520, %v1522
    %v1524 = vsel %vm1523, %v1519, inf
    %1525 = vmin.xlane.f32.xlu0 %v1524
    %v1526 = vpop.xlane.xlu0 %1525
    %v1527 = vcvt.f32.s32 %v1526
    %v1528 = vcvt.f32.s32 %v1522
    %v1529 = vshll.u32 %v1528, 16
    %v1530 = vadd.s32 %v1529, %v1527
    %vm1531 = vcmp.lt.s32.totalorder %v1257, %v1258
    %v1532 = vsel %vm1531, %v1257, %v1258
    %v1533 = vand.u32 %v1532, 65535
    %v1534 = vshra.s32 %v1532, 16
    %v1535 = vcvt.s32.f32 %v1533
    %v1536 = vcvt.s32.f32 %v1534
    %1537 = vmin.xlane.f32.xlu0 %v1536
    %v1538 = vpop.xlane.xlu0 %1537
    %vm1539 = vcmp.eq.f32.partialorder %v1536, %v1538
    %v1540 = vsel %vm1539, %v1535, inf
    %1541 = vmin.xlane.f32.xlu0 %v1540
    %v1542 = vpop.xlane.xlu0 %1541
    %v1543 = vcvt.f32.s32 %v1542
    %v1544 = vcvt.f32.s32 %v1538
    %v1545 = vshll.u32 %v1544, 16
    %v1546 = vadd.s32 %v1545, %v1543
    %vm1547 = vcmp.lt.s32.totalorder %v1259, %v1260
    %v1548 = vsel %vm1547, %v1259, %v1260
    %v1549 = vand.u32 %v1548, 65535
    %v1550 = vshra.s32 %v1548, 16
    %v1551 = vcvt.s32.f32 %v1549
    %v1552 = vcvt.s32.f32 %v1550
    %1553 = vmin.xlane.f32.xlu0 %v1552
    %v1554 = vpop.xlane.xlu0 %1553
    %vm1555 = vcmp.eq.f32.partialorder %v1552, %v1554
    %v1556 = vsel %vm1555, %v1551, inf
    %1557 = vmin.xlane.f32.xlu0 %v1556
    %v1558 = vpop.xlane.xlu0 %1557
    %v1559 = vcvt.f32.s32 %v1558
    %v1560 = vcvt.f32.s32 %v1554
    %v1561 = vshll.u32 %v1560, 16
    %v1562 = vadd.s32 %v1561, %v1559
    %vm1563 = vcmp.lt.s32.totalorder %v1261, %v1262
    %v1564 = vsel %vm1563, %v1261, %v1262
    %v1565 = vand.u32 %v1564, 65535
    %v1566 = vshra.s32 %v1564, 16
    %v1567 = vcvt.s32.f32 %v1565
    %v1568 = vcvt.s32.f32 %v1566
    %1569 = vmin.xlane.f32.xlu0 %v1568
    %v1570 = vpop.xlane.xlu0 %1569
    %vm1571 = vcmp.eq.f32.partialorder %v1568, %v1570
    %v1572 = vsel %vm1571, %v1567, inf
    %1573 = vmin.xlane.f32.xlu0 %v1572
    %v1574 = vpop.xlane.xlu0 %1573
    %v1575 = vcvt.f32.s32 %v1574
    %v1576 = vcvt.f32.s32 %v1570
    %v1577 = vshll.u32 %v1576, 16
    %v1578 = vadd.s32 %v1577, %v1575
    %vm1579 = vcmp.lt.s32.totalorder %v1263, %v1264
    %v1580 = vsel %vm1579, %v1263, %v1264
    %v1581 = vand.u32 %v1580, 65535
    %v1582 = vshra.s32 %v1580, 16
    %v1583 = vcvt.s32.f32 %v1581
    %v1584 = vcvt.s32.f32 %v1582
    %1585 = vmin.xlane.f32.xlu0 %v1584
    %v1586 = vpop.xlane.xlu0 %1585
    %vm1587 = vcmp.eq.f32.partialorder %v1584, %v1586
    %v1588 = vsel %vm1587, %v1583, inf
    %1589 = vmin.xlane.f32.xlu0 %v1588
    %v1590 = vpop.xlane.xlu0 %1589
    %v1591 = vcvt.f32.s32 %v1590
    %v1592 = vcvt.f32.s32 %v1586
    %v1593 = vshll.u32 %v1592, 16
    %v1594 = vadd.s32 %v1593, %v1591
    %vm1595 = vcmp.lt.s32.totalorder %v1265, %v1266
    %v1596 = vsel %vm1595, %v1265, %v1266
    %v1597 = vand.u32 %v1596, 65535
    %v1598 = vshra.s32 %v1596, 16
    %v1599 = vcvt.s32.f32 %v1597
    %v1600 = vcvt.s32.f32 %v1598
    %1601 = vmin.xlane.f32.xlu0 %v1600
    %v1602 = vpop.xlane.xlu0 %1601
    %vm1603 = vcmp.eq.f32.partialorder %v1600, %v1602
    %v1604 = vsel %vm1603, %v1599, inf
    %1605 = vmin.xlane.f32.xlu0 %v1604
    %v1606 = vpop.xlane.xlu0 %1605
    %v1607 = vcvt.f32.s32 %v1606
    %v1608 = vcvt.f32.s32 %v1602
    %v1609 = vshll.u32 %v1608, 16
    %v1610 = vadd.s32 %v1609, %v1607
    %vm1611 = vcmp.lt.s32.totalorder %v1267, %v1268
    %v1612 = vsel %vm1611, %v1267, %v1268
    %v1613 = vand.u32 %v1612, 65535
    %v1614 = vshra.s32 %v1612, 16
    %v1615 = vcvt.s32.f32 %v1613
    %v1616 = vcvt.s32.f32 %v1614
    %1617 = vmin.xlane.f32.xlu0 %v1616
    %v1618 = vpop.xlane.xlu0 %1617
    %vm1619 = vcmp.eq.f32.partialorder %v1616, %v1618
    %v1620 = vsel %vm1619, %v1615, inf
    %1621 = vmin.xlane.f32.xlu0 %v1620
    %v1622 = vpop.xlane.xlu0 %1621
    %v1623 = vcvt.f32.s32 %v1622
    %v1624 = vcvt.f32.s32 %v1618
    %v1625 = vshll.u32 %v1624, 16
    %v1626 = vadd.s32 %v1625, %v1623
    %vm1627 = vcmp.lt.s32.totalorder %v1269, %v1270
    %v1628 = vsel %vm1627, %v1269, %v1270
    %v1629 = vand.u32 %v1628, 65535
    %v1630 = vshra.s32 %v1628, 16
    %v1631 = vcvt.s32.f32 %v1629
    %v1632 = vcvt.s32.f32 %v1630
    %1633 = vmin.xlane.f32.xlu0 %v1632
    %v1634 = vpop.xlane.xlu0 %1633
    %vm1635 = vcmp.eq.f32.partialorder %v1632, %v1634
    %v1636 = vsel %vm1635, %v1631, inf
    %1637 = vmin.xlane.f32.xlu0 %v1636
    %v1638 = vpop.xlane.xlu0 %1637
    %v1639 = vcvt.f32.s32 %v1638
    %v1640 = vcvt.f32.s32 %v1634
    %v1641 = vshll.u32 %v1640, 16
    %v1642 = vadd.s32 %v1641, %v1639
    %vm1643 = vcmp.lt.s32.totalorder %v1271, %v1272
    %v1644 = vsel %vm1643, %v1271, %v1272
    %v1645 = vand.u32 %v1644, 65535
    %v1646 = vshra.s32 %v1644, 16
    %v1647 = vcvt.s32.f32 %v1645
    %v1648 = vcvt.s32.f32 %v1646
    %1649 = vmin.xlane.f32.xlu0 %v1648
    %v1650 = vpop.xlane.xlu0 %1649
    %vm1651 = vcmp.eq.f32.partialorder %v1648, %v1650
    %v1652 = vsel %vm1651, %v1647, inf
    %1653 = vmin.xlane.f32.xlu0 %v1652
    %v1654 = vpop.xlane.xlu0 %1653
    %v1655 = vcvt.f32.s32 %v1654
    %v1656 = vcvt.f32.s32 %v1650
    %v1657 = vshll.u32 %v1656, 16
    %v1658 = vadd.s32 %v1657, %v1655
    %vm1659 = vcmp.lt.s32.totalorder %v1273, %v1274
    %v1660 = vsel %vm1659, %v1273, %v1274
    %v1661 = vand.u32 %v1660, 65535
    %v1662 = vshra.s32 %v1660, 16
    %v1663 = vcvt.s32.f32 %v1661
    %v1664 = vcvt.s32.f32 %v1662
    %1665 = vmin.xlane.f32.xlu0 %v1664
    %v1666 = vpop.xlane.xlu0 %1665
    %vm1667 = vcmp.eq.f32.partialorder %v1664, %v1666
    %v1668 = vsel %vm1667, %v1663, inf
    %1669 = vmin.xlane.f32.xlu0 %v1668
    %v1670 = vpop.xlane.xlu0 %1669
    %v1671 = vcvt.f32.s32 %v1670
    %v1672 = vcvt.f32.s32 %v1666
    %v1673 = vshll.u32 %v1672, 16
    %v1674 = vadd.s32 %v1673, %v1671
    %vm1675 = vcmp.lt.s32.totalorder %v1275, %v1276
    %v1676 = vsel %vm1675, %v1275, %v1276
    %v1677 = vand.u32 %v1676, 65535
    %v1678 = vshra.s32 %v1676, 16
    %v1679 = vcvt.s32.f32 %v1677
    %v1680 = vcvt.s32.f32 %v1678
    %1681 = vmin.xlane.f32.xlu0 %v1680
    %v1682 = vpop.xlane.xlu0 %1681
    %vm1683 = vcmp.eq.f32.partialorder %v1680, %v1682
    %v1684 = vsel %vm1683, %v1679, inf
    %1685 = vmin.xlane.f32.xlu0 %v1684
    %v1686 = vpop.xlane.xlu0 %1685
    %v1687 = vcvt.f32.s32 %v1686
    %v1688 = vcvt.f32.s32 %v1682
    %v1689 = vshll.u32 %v1688, 16
    %v1690 = vadd.s32 %v1689, %v1687
    %vm1691 = vcmp.lt.s32.totalorder %v1277, %v1278
    %v1692 = vsel %vm1691, %v1277, %v1278
    %v1693 = vand.u32 %v1692, 65535
    %v1694 = vshra.s32 %v1692, 16
    %v1695 = vcvt.s32.f32 %v1693
    %v1696 = vcvt.s32.f32 %v1694
    %1697 = vmin.xlane.f32.xlu0 %v1696
    %v1698 = vpop.xlane.xlu0 %1697
    %vm1699 = vcmp.eq.f32.partialorder %v1696, %v1698
    %v1700 = vsel %vm1699, %v1695, inf
    %1701 = vmin.xlane.f32.xlu0 %v1700
    %v1702 = vpop.xlane.xlu0 %1701
    %v1703 = vcvt.f32.s32 %v1702
    %v1704 = vcvt.f32.s32 %v1698
    %v1705 = vshll.u32 %v1704, 16
    %v1706 = vadd.s32 %v1705, %v1703
    %vm1707 = vcmp.lt.s32.totalorder %v1279, %v1280
    %v1708 = vsel %vm1707, %v1279, %v1280
    %v1709 = vand.u32 %v1708, 65535
    %v1710 = vshra.s32 %v1708, 16
    %v1711 = vcvt.s32.f32 %v1709
    %v1712 = vcvt.s32.f32 %v1710
    %1713 = vmin.xlane.f32.xlu0 %v1712
    %v1714 = vpop.xlane.xlu0 %1713
    %vm1715 = vcmp.eq.f32.partialorder %v1712, %v1714
    %v1716 = vsel %vm1715, %v1711, inf
    %1717 = vmin.xlane.f32.xlu0 %v1716
    %v1718 = vpop.xlane.xlu0 %1717
    %v1719 = vcvt.f32.s32 %v1718
    %v1720 = vcvt.f32.s32 %v1714
    %v1721 = vshll.u32 %v1720, 16
    %v1722 = vadd.s32 %v1721, %v1719
    %vm1723 = vcmp.lt.s32.totalorder %v1281, %v1282
    %v1724 = vsel %vm1723, %v1281, %v1282
    %v1725 = vand.u32 %v1724, 65535
    %v1726 = vshra.s32 %v1724, 16
    %v1727 = vcvt.s32.f32 %v1725
    %v1728 = vcvt.s32.f32 %v1726
    %1729 = vmin.xlane.f32.xlu0 %v1728
    %v1730 = vpop.xlane.xlu0 %1729
    %vm1731 = vcmp.eq.f32.partialorder %v1728, %v1730
    %v1732 = vsel %vm1731, %v1727, inf
    %1733 = vmin.xlane.f32.xlu0 %v1732
    %v1734 = vpop.xlane.xlu0 %1733
    %v1735 = vcvt.f32.s32 %v1734
    %v1736 = vcvt.f32.s32 %v1730
    %v1737 = vshll.u32 %v1736, 16
    %v1738 = vadd.s32 %v1737, %v1735
    %vm1739 = vcmp.lt.s32.totalorder %v1283, %v1284
    %v1740 = vsel %vm1739, %v1283, %v1284
    %v1741 = vand.u32 %v1740, 65535
    %v1742 = vshra.s32 %v1740, 16
    %v1743 = vcvt.s32.f32 %v1741
    %v1744 = vcvt.s32.f32 %v1742
    %1745 = vmin.xlane.f32.xlu0 %v1744
    %v1746 = vpop.xlane.xlu0 %1745
    %vm1747 = vcmp.eq.f32.partialorder %v1744, %v1746
    %v1748 = vsel %vm1747, %v1743, inf
    %1749 = vmin.xlane.f32.xlu0 %v1748
    %v1750 = vpop.xlane.xlu0 %1749
    %v1751 = vcvt.f32.s32 %v1750
    %v1752 = vcvt.f32.s32 %v1746
    %v1753 = vshll.u32 %v1752, 16
    %v1754 = vadd.s32 %v1753, %v1751
    %vm1755 = vcmp.lt.s32.totalorder %v1285, %v1286
    %v1756 = vsel %vm1755, %v1285, %v1286
    %v1757 = vand.u32 %v1756, 65535
    %v1758 = vshra.s32 %v1756, 16
    %v1759 = vcvt.s32.f32 %v1757
    %v1760 = vcvt.s32.f32 %v1758
    %1761 = vmin.xlane.f32.xlu0 %v1760
    %v1762 = vpop.xlane.xlu0 %1761
    %vm1763 = vcmp.eq.f32.partialorder %v1760, %v1762
    %v1764 = vsel %vm1763, %v1759, inf
    %1765 = vmin.xlane.f32.xlu0 %v1764
    %v1766 = vpop.xlane.xlu0 %1765
    %v1767 = vcvt.f32.s32 %v1766
    %v1768 = vcvt.f32.s32 %v1762
    %v1769 = vshll.u32 %v1768, 16
    %v1770 = vadd.s32 %v1769, %v1767
    %vm1771 = vcmp.lt.s32.totalorder %v1287, %v1288
    %v1772 = vsel %vm1771, %v1287, %v1288
    %v1773 = vand.u32 %v1772, 65535
    %v1774 = vshra.s32 %v1772, 16
    %v1775 = vcvt.s32.f32 %v1773
    %v1776 = vcvt.s32.f32 %v1774
    %1777 = vmin.xlane.f32.xlu0 %v1776
    %v1778 = vpop.xlane.xlu0 %1777
    %vm1779 = vcmp.eq.f32.partialorder %v1776, %v1778
    %v1780 = vsel %vm1779, %v1775, inf
    %1781 = vmin.xlane.f32.xlu0 %v1780
    %v1782 = vpop.xlane.xlu0 %1781
    %v1783 = vcvt.f32.s32 %v1782
    %v1784 = vcvt.f32.s32 %v1778
    %v1785 = vshll.u32 %v1784, 16
    %v1786 = vadd.s32 %v1785, %v1783
    %vm1787 = vcmp.lt.s32.totalorder %v1289, %v1290
    %v1788 = vsel %vm1787, %v1289, %v1290
    %v1789 = vand.u32 %v1788, 65535
    %v1790 = vshra.s32 %v1788, 16
    %v1791 = vcvt.s32.f32 %v1789
    %v1792 = vcvt.s32.f32 %v1790
    %1793 = vmin.xlane.f32.xlu0 %v1792
    %v1794 = vpop.xlane.xlu0 %1793
    %vm1795 = vcmp.eq.f32.partialorder %v1792, %v1794
    %v1796 = vsel %vm1795, %v1791, inf
    %1797 = vmin.xlane.f32.xlu0 %v1796
    %v1798 = vpop.xlane.xlu0 %1797
    %v1799 = vcvt.f32.s32 %v1798
    %v1800 = vcvt.f32.s32 %v1794
    %v1801 = vshll.u32 %v1800, 16
    %v1802 = vadd.s32 %v1801, %v1799
    %v1803 = vld [vmem:[#allocation3] sm:$0xff]
    %v1804 = vld [vmem:[#allocation3 + $0x8] sm:$0xff]
    %v1805 = vld [vmem:[#allocation3 + $0x10] sm:$0xff]
    %v1806 = vld [vmem:[#allocation3 + $0x18] sm:$0xff]
    %v1807 = vld [vmem:[#allocation3 + $0x20] sm:$0xff]
    %v1808 = vld [vmem:[#allocation3 + $0x28] sm:$0xff]
    %v1809 = vld [vmem:[#allocation3 + $0x30] sm:$0xff]
    %v1810 = vld [vmem:[#allocation3 + $0x38] sm:$0xff]
    %v1811 = vld [vmem:[#allocation3 + $0x40] sm:$0xff]
    %v1812 = vld [vmem:[#allocation3 + $0x48] sm:$0xff]
    %v1813 = vld [vmem:[#allocation3 + $0x50] sm:$0xff]
    %v1814 = vld [vmem:[#allocation3 + $0x58] sm:$0xff]
    %v1815 = vld [vmem:[#allocation3 + $0x60] sm:$0xff]
    %v1816 = vld [vmem:[#allocation3 + $0x68] sm:$0xff]
    %v1817 = vld [vmem:[#allocation3 + $0x70] sm:$0xff]
    %v1818 = vld [vmem:[#allocation3 + $0x78] sm:$0xff]
    %v1819 = vld [vmem:[#allocation3 + $0x80] sm:$0xff]
    %v1820 = vld [vmem:[#allocation3 + $0x88] sm:$0xff]
    %v1821 = vld [vmem:[#allocation3 + $0x90] sm:$0xff]
    %v1822 = vld [vmem:[#allocation3 + $0x98] sm:$0xff]
    %v1823 = vld [vmem:[#allocation3 + $0xa0] sm:$0xff]
    %v1824 = vld [vmem:[#allocation3 + $0xa8] sm:$0xff]
    %v1825 = vld [vmem:[#allocation3 + $0xb0] sm:$0xff]
    %v1826 = vld [vmem:[#allocation3 + $0xb8] sm:$0xff]
    %v1827 = vld [vmem:[#allocation3 + $0xc0] sm:$0xff]
    %v1828 = vld [vmem:[#allocation3 + $0xc8] sm:$0xff]
    %v1829 = vld [vmem:[#allocation3 + $0xd0] sm:$0xff]
    %v1830 = vld [vmem:[#allocation3 + $0xd8] sm:$0xff]
    %v1831 = vld [vmem:[#allocation3 + $0xe0] sm:$0xff]
    %v1832 = vld [vmem:[#allocation3 + $0xe8] sm:$0xff]
    %v1833 = vld [vmem:[#allocation3 + $0xf0] sm:$0xff]
    %v1834 = vld [vmem:[#allocation3 + $0xf8] sm:$0xff]
    %vm1835 = vcmp.lt.f32.partialorder %v1066, %v1803
    %vm1836 = vcmp.lt.f32.partialorder %v1069, %v1804
    %vm1837 = vcmp.lt.f32.partialorder %v1072, %v1805
    %vm1838 = vcmp.lt.f32.partialorder %v1075, %v1806
    %vm1839 = vcmp.lt.f32.partialorder %v1078, %v1807
    %vm1840 = vcmp.lt.f32.partialorder %v1081, %v1808
    %vm1841 = vcmp.lt.f32.partialorder %v1084, %v1809
    %vm1842 = vcmp.lt.f32.partialorder %v1087, %v1810
    %vm1843 = vcmp.lt.f32.partialorder %v1090, %v1811
    %vm1844 = vcmp.lt.f32.partialorder %v1093, %v1812
    %vm1845 = vcmp.lt.f32.partialorder %v1096, %v1813
    %vm1846 = vcmp.lt.f32.partialorder %v1099, %v1814
    %vm1847 = vcmp.lt.f32.partialorder %v1102, %v1815
    %vm1848 = vcmp.lt.f32.partialorder %v1105, %v1816
    %vm1849 = vcmp.lt.f32.partialorder %v1108, %v1817
    %vm1850 = vcmp.lt.f32.partialorder %v1111, %v1818
    %vm1851 = vcmp.lt.f32.partialorder %v1114, %v1819
    %vm1852 = vcmp.lt.f32.partialorder %v1117, %v1820
    %vm1853 = vcmp.lt.f32.partialorder %v1120, %v1821
    %vm1854 = vcmp.lt.f32.partialorder %v1123, %v1822
    %vm1855 = vcmp.lt.f32.partialorder %v1126, %v1823
    %vm1856 = vcmp.lt.f32.partialorder %v1129, %v1824
    %vm1857 = vcmp.lt.f32.partialorder %v1132, %v1825
    %vm1858 = vcmp.lt.f32.partialorder %v1135, %v1826
    %vm1859 = vcmp.lt.f32.partialorder %v1138, %v1827
    %vm1860 = vcmp.lt.f32.partialorder %v1141, %v1828
    %vm1861 = vcmp.lt.f32.partialorder %v1144, %v1829
    %vm1862 = vcmp.lt.f32.partialorder %v1147, %v1830
    %vm1863 = vcmp.lt.f32.partialorder %v1150, %v1831
    %vm1864 = vcmp.lt.f32.partialorder %v1153, %v1832
    %vm1865 = vcmp.lt.f32.partialorder %v1156, %v1833
    %vm1866 = vcmp.lt.f32.partialorder %v1159, %v1834
    %s1867 = smul.u32 0, 256
    %v1868 = vstv %s1867
    %v1869 = vadd.s32 %v1306, %v1868
    %v1870 = vadd.s32 %v1322, %v1868
    %v1871 = vadd.s32 %v1338, %v1868
    %v1872 = vadd.s32 %v1354, %v1868
    %v1873 = vadd.s32 %v1370, %v1868
    %v1874 = vadd.s32 %v1386, %v1868
    %v1875 = vadd.s32 %v1402, %v1868
    %v1876 = vadd.s32 %v1418, %v1868
    %v1877 = vadd.s32 %v1434, %v1868
    %v1878 = vadd.s32 %v1450, %v1868
    %v1879 = vadd.s32 %v1466, %v1868
    %v1880 = vadd.s32 %v1482, %v1868
    %v1881 = vadd.s32 %v1498, %v1868
    %v1882 = vadd.s32 %v1514, %v1868
    %v1883 = vadd.s32 %v1530, %v1868
    %v1884 = vadd.s32 %v1546, %v1868
    %v1885 = vadd.s32 %v1562, %v1868
    %v1886 = vadd.s32 %v1578, %v1868
    %v1887 = vadd.s32 %v1594, %v1868
    %v1888 = vadd.s32 %v1610, %v1868
    %v1889 = vadd.s32 %v1626, %v1868
    %v1890 = vadd.s32 %v1642, %v1868
    %v1891 = vadd.s32 %v1658, %v1868
    %v1892 = vadd.s32 %v1674, %v1868
    %v1893 = vadd.s32 %v1690, %v1868
    %v1894 = vadd.s32 %v1706, %v1868
    %v1895 = vadd.s32 %v1722, %v1868
    %v1896 = vadd.s32 %v1738, %v1868
    %v1897 = vadd.s32 %v1754, %v1868
    %v1898 = vadd.s32 %v1770, %v1868
    %v1899 = vadd.s32 %v1786, %v1868
    %v1900 = vadd.s32 %v1802, %v1868
    %v1901 = vld [vmem:[%s4] sm:$0xff]
    %v1902 = vld [vmem:[%s4 + $0x8] sm:$0xff]
    %v1903 = vld [vmem:[%s4 + $0x10] sm:$0xff]
    %v1904 = vld [vmem:[%s4 + $0x18] sm:$0xff]
    %v1905 = vld [vmem:[%s4 + $0x20] sm:$0xff]
    %v1906 = vld [vmem:[%s4 + $0x28] sm:$0xff]
    %v1907 = vld [vmem:[%s4 + $0x30] sm:$0xff]
    %v1908 = vld [vmem:[%s4 + $0x38] sm:$0xff]
    %v1909 = vld [vmem:[%s4 + $0x40] sm:$0xff]
    %v1910 = vld [vmem:[%s4 + $0x48] sm:$0xff]
    %v1911 = vld [vmem:[%s4 + $0x50] sm:$0xff]
    %v1912 = vld [vmem:[%s4 + $0x58] sm:$0xff]
    %v1913 = vld [vmem:[%s4 + $0x60] sm:$0xff]
    %v1914 = vld [vmem:[%s4 + $0x68] sm:$0xff]
    %v1915 = vld [vmem:[%s4 + $0x70] sm:$0xff]
    %v1916 = vld [vmem:[%s4 + $0x78] sm:$0xff]
    %v1917 = vld [vmem:[%s4 + $0x80] sm:$0xff]
    %v1918 = vld [vmem:[%s4 + $0x88] sm:$0xff]
    %v1919 = vld [vmem:[%s4 + $0x90] sm:$0xff]
    %v1920 = vld [vmem:[%s4 + $0x98] sm:$0xff]
    %v1921 = vld [vmem:[%s4 + $0xa0] sm:$0xff]
    %v1922 = vld [vmem:[%s4 + $0xa8] sm:$0xff]
    %v1923 = vld [vmem:[%s4 + $0xb0] sm:$0xff]
    %v1924 = vld [vmem:[%s4 + $0xb8] sm:$0xff]
    %v1925 = vld [vmem:[%s4 + $0xc0] sm:$0xff]
    %v1926 = vld [vmem:[%s4 + $0xc8] sm:$0xff]
    %v1927 = vld [vmem:[%s4 + $0xd0] sm:$0xff]
    %v1928 = vld [vmem:[%s4 + $0xd8] sm:$0xff]
    %v1929 = vld [vmem:[%s4 + $0xe0] sm:$0xff]
    %v1930 = vld [vmem:[%s4 + $0xe8] sm:$0xff]
    %v1931 = vld [vmem:[%s4 + $0xf0] sm:$0xff]
    %v1932 = vld [vmem:[%s4 + $0xf8] sm:$0xff]
    %v1933 = vsel %vm1835, %v1869, %v1901
    %v1934 = vsel %vm1836, %v1870, %v1902
    %v1935 = vsel %vm1837, %v1871, %v1903
    %v1936 = vsel %vm1838, %v1872, %v1904
    %v1937 = vsel %vm1839, %v1873, %v1905
    %v1938 = vsel %vm1840, %v1874, %v1906
    %v1939 = vsel %vm1841, %v1875, %v1907
    %v1940 = vsel %vm1842, %v1876, %v1908
    %v1941 = vsel %vm1843, %v1877, %v1909
    %v1942 = vsel %vm1844, %v1878, %v1910
    %v1943 = vsel %vm1845, %v1879, %v1911
    %v1944 = vsel %vm1846, %v1880, %v1912
    %v1945 = vsel %vm1847, %v1881, %v1913
    %v1946 = vsel %vm1848, %v1882, %v1914
    %v1947 = vsel %vm1849, %v1883, %v1915
    %v1948 = vsel %vm1850, %v1884, %v1916
    %v1949 = vsel %vm1851, %v1885, %v1917
    %v1950 = vsel %vm1852, %v1886, %v1918
    %v1951 = vsel %vm1853, %v1887, %v1919
    %v1952 = vsel %vm1854, %v1888, %v1920
    %v1953 = vsel %vm1855, %v1889, %v1921
    %v1954 = vsel %vm1856, %v1890, %v1922
    %v1955 = vsel %vm1857, %v1891, %v1923
    %v1956 = vsel %vm1858, %v1892, %v1924
    %v1957 = vsel %vm1859, %v1893, %v1925
    %v1958 = vsel %vm1860, %v1894, %v1926
    %v1959 = vsel %vm1861, %v1895, %v1927
    %v1960 = vsel %vm1862, %v1896, %v1928
    %v1961 = vsel %vm1863, %v1897, %v1929
    %v1962 = vsel %vm1864, %v1898, %v1930
    %v1963 = vsel %vm1865, %v1899, %v1931
    %v1964 = vsel %vm1866, %v1900, %v1932
    %vm1965 = vcmask 7168
    %1966 = vst.msk [vmem:[%s4] sm:$0xff] %vm1965, %v1933
    %1967 = vst.msk [vmem:[%s4 + $0x8] sm:$0xff] %vm1965, %v1934
    %1968 = vst.msk [vmem:[%s4 + $0x10] sm:$0xff] %vm1965, %v1935
    %1969 = vst.msk [vmem:[%s4 + $0x18] sm:$0xff] %vm1965, %v1936
    %1970 = vst.msk [vmem:[%s4 + $0x20] sm:$0xff] %vm1965, %v1937
    %1971 = vst.msk [vmem:[%s4 + $0x28] sm:$0xff] %vm1965, %v1938
    %1972 = vst.msk [vmem:[%s4 + $0x30] sm:$0xff] %vm1965, %v1939
    %1973 = vst.msk [vmem:[%s4 + $0x38] sm:$0xff] %vm1965, %v1940
    %1974 = vst.msk [vmem:[%s4 + $0x40] sm:$0xff] %vm1965, %v1941
    %1975 = vst.msk [vmem:[%s4 + $0x48] sm:$0xff] %vm1965, %v1942
    %1976 = vst.msk [vmem:[%s4 + $0x50] sm:$0xff] %vm1965, %v1943
    %1977 = vst.msk [vmem:[%s4 + $0x58] sm:$0xff] %vm1965, %v1944
    %1978 = vst.msk [vmem:[%s4 + $0x60] sm:$0xff] %vm1965, %v1945
    %1979 = vst.msk [vmem:[%s4 + $0x68] sm:$0xff] %vm1965, %v1946
    %1980 = vst.msk [vmem:[%s4 + $0x70] sm:$0xff] %vm1965, %v1947
    %1981 = vst.msk [vmem:[%s4 + $0x78] sm:$0xff] %vm1965, %v1948
    %1982 = vst.msk [vmem:[%s4 + $0x80] sm:$0xff] %vm1965, %v1949
    %1983 = vst.msk [vmem:[%s4 + $0x88] sm:$0xff] %vm1965, %v1950
    %1984 = vst.msk [vmem:[%s4 + $0x90] sm:$0xff] %vm1965, %v1951
    %1985 = vst.msk [vmem:[%s4 + $0x98] sm:$0xff] %vm1965, %v1952
    %1986 = vst.msk [vmem:[%s4 + $0xa0] sm:$0xff] %vm1965, %v1953
    %1987 = vst.msk [vmem:[%s4 + $0xa8] sm:$0xff] %vm1965, %v1954
    %1988 = vst.msk [vmem:[%s4 + $0xb0] sm:$0xff] %vm1965, %v1955
    %1989 = vst.msk [vmem:[%s4 + $0xb8] sm:$0xff] %vm1965, %v1956
    %1990 = vst.msk [vmem:[%s4 + $0xc0] sm:$0xff] %vm1965, %v1957
    %1991 = vst.msk [vmem:[%s4 + $0xc8] sm:$0xff] %vm1965, %v1958
    %1992 = vst.msk [vmem:[%s4 + $0xd0] sm:$0xff] %vm1965, %v1959
    %1993 = vst.msk [vmem:[%s4 + $0xd8] sm:$0xff] %vm1965, %v1960
    %1994 = vst.msk [vmem:[%s4 + $0xe0] sm:$0xff] %vm1965, %v1961
    %1995 = vst.msk [vmem:[%s4 + $0xe8] sm:$0xff] %vm1965, %v1962
    %1996 = vst.msk [vmem:[%s4 + $0xf0] sm:$0xff] %vm1965, %v1963
    %1997 = vst.msk [vmem:[%s4 + $0xf8] sm:$0xff] %vm1965, %v1964
    %v1998 = vld [vmem:[#allocation3] sm:$0xff]
    %v1999 = vld [vmem:[#allocation3 + $0x8] sm:$0xff]
    %v2000 = vld [vmem:[#allocation3 + $0x10] sm:$0xff]
    %v2001 = vld [vmem:[#allocation3 + $0x18] sm:$0xff]
    %v2002 = vld [vmem:[#allocation3 + $0x20] sm:$0xff]
    %v2003 = vld [vmem:[#allocation3 + $0x28] sm:$0xff]
    %v2004 = vld [vmem:[#allocation3 + $0x30] sm:$0xff]
    %v2005 = vld [vmem:[#allocation3 + $0x38] sm:$0xff]
    %v2006 = vld [vmem:[#allocation3 + $0x40] sm:$0xff]
    %v2007 = vld [vmem:[#allocation3 + $0x48] sm:$0xff]
    %v2008 = vld [vmem:[#allocation3 + $0x50] sm:$0xff]
    %v2009 = vld [vmem:[#allocation3 + $0x58] sm:$0xff]
    %v2010 = vld [vmem:[#allocation3 + $0x60] sm:$0xff]
    %v2011 = vld [vmem:[#allocation3 + $0x68] sm:$0xff]
    %v2012 = vld [vmem:[#allocation3 + $0x70] sm:$0xff]
    %v2013 = vld [vmem:[#allocation3 + $0x78] sm:$0xff]
    %v2014 = vld [vmem:[#allocation3 + $0x80] sm:$0xff]
    %v2015 = vld [vmem:[#allocation3 + $0x88] sm:$0xff]
    %v2016 = vld [vmem:[#allocation3 + $0x90] sm:$0xff]
    %v2017 = vld [vmem:[#allocation3 + $0x98] sm:$0xff]
    %v2018 = vld [vmem:[#allocation3 + $0xa0] sm:$0xff]
    %v2019 = vld [vmem:[#allocation3 + $0xa8] sm:$0xff]
    %v2020 = vld [vmem:[#allocation3 + $0xb0] sm:$0xff]
    %v2021 = vld [vmem:[#allocation3 + $0xb8] sm:$0xff]
    %v2022 = vld [vmem:[#allocation3 + $0xc0] sm:$0xff]
    %v2023 = vld [vmem:[#allocation3 + $0xc8] sm:$0xff]
    %v2024 = vld [vmem:[#allocation3 + $0xd0] sm:$0xff]
    %v2025 = vld [vmem:[#allocation3 + $0xd8] sm:$0xff]
    %v2026 = vld [vmem:[#allocation3 + $0xe0] sm:$0xff]
    %v2027 = vld [vmem:[#allocation3 + $0xe8] sm:$0xff]
    %v2028 = vld [vmem:[#allocation3 + $0xf0] sm:$0xff]
    %v2029 = vld [vmem:[#allocation3 + $0xf8] sm:$0xff]
    %v2030 = vsel %vm1835, %v1066, %v1998
    %v2031 = vsel %vm1836, %v1069, %v1999
    %v2032 = vsel %vm1837, %v1072, %v2000
    %v2033 = vsel %vm1838, %v1075, %v2001
    %v2034 = vsel %vm1839, %v1078, %v2002
    %v2035 = vsel %vm1840, %v1081, %v2003
    %v2036 = vsel %vm1841, %v1084, %v2004
    %v2037 = vsel %vm1842, %v1087, %v2005
    %v2038 = vsel %vm1843, %v1090, %v2006
    %v2039 = vsel %vm1844, %v1093, %v2007
    %v2040 = vsel %vm1845, %v1096, %v2008
    %v2041 = vsel %vm1846, %v1099, %v2009
    %v2042 = vsel %vm1847, %v1102, %v2010
    %v2043 = vsel %vm1848, %v1105, %v2011
    %v2044 = vsel %vm1849, %v1108, %v2012
    %v2045 = vsel %vm1850, %v1111, %v2013
    %v2046 = vsel %vm1851, %v1114, %v2014
    %v2047 = vsel %vm1852, %v1117, %v2015
    %v2048 = vsel %vm1853, %v1120, %v2016
    %v2049 = vsel %vm1854, %v1123, %v2017
    %v2050 = vsel %vm1855, %v1126, %v2018
    %v2051 = vsel %vm1856, %v1129, %v2019
    %v2052 = vsel %vm1857, %v1132, %v2020
    %v2053 = vsel %vm1858, %v1135, %v2021
    %v2054 = vsel %vm1859, %v1138, %v2022
    %v2055 = vsel %vm1860, %v1141, %v2023
    %v2056 = vsel %vm1861, %v1144, %v2024
    %v2057 = vsel %vm1862, %v1147, %v2025
    %v2058 = vsel %vm1863, %v1150, %v2026
    %v2059 = vsel %vm1864, %v1153, %v2027
    %v2060 = vsel %vm1865, %v1156, %v2028
    %v2061 = vsel %vm1866, %v1159, %v2029
    %2062 = vst.msk [vmem:[#allocation3] sm:$0xff] %vm1965, %v2030
    %2063 = vst.msk [vmem:[#allocation3 + $0x8] sm:$0xff] %vm1965, %v2031
    %2064 = vst.msk [vmem:[#allocation3 + $0x10] sm:$0xff] %vm1965, %v2032
    %2065 = vst.msk [vmem:[#allocation3 + $0x18] sm:$0xff] %vm1965, %v2033
    %2066 = vst.msk [vmem:[#allocation3 + $0x20] sm:$0xff] %vm1965, %v2034
    %2067 = vst.msk [vmem:[#allocation3 + $0x28] sm:$0xff] %vm1965, %v2035
    %2068 = vst.msk [vmem:[#allocation3 + $0x30] sm:$0xff] %vm1965, %v2036
    %2069 = vst.msk [vmem:[#allocation3 + $0x38] sm:$0xff] %vm1965, %v2037
    %2070 = vst.msk [vmem:[#allocation3 + $0x40] sm:$0xff] %vm1965, %v2038
    %2071 = vst.msk [vmem:[#allocation3 + $0x48] sm:$0xff] %vm1965, %v2039
    %2072 = vst.msk [vmem:[#allocation3 + $0x50] sm:$0xff] %vm1965, %v2040
    %2073 = vst.msk [vmem:[#allocation3 + $0x58] sm:$0xff] %vm1965, %v2041
    %2074 = vst.msk [vmem:[#allocation3 + $0x60] sm:$0xff] %vm1965, %v2042
    %2075 = vst.msk [vmem:[#allocation3 + $0x68] sm:$0xff] %vm1965, %v2043
    %2076 = vst.msk [vmem:[#allocation3 + $0x70] sm:$0xff] %vm1965, %v2044
    %2077 = vst.msk [vmem:[#allocation3 + $0x78] sm:$0xff] %vm1965, %v2045
    %2078 = vst.msk [vmem:[#allocation3 + $0x80] sm:$0xff] %vm1965, %v2046
    %2079 = vst.msk [vmem:[#allocation3 + $0x88] sm:$0xff] %vm1965, %v2047
    %2080 = vst.msk [vmem:[#allocation3 + $0x90] sm:$0xff] %vm1965, %v2048
    %2081 = vst.msk [vmem:[#allocation3 + $0x98] sm:$0xff] %vm1965, %v2049
    %2082 = vst.msk [vmem:[#allocation3 + $0xa0] sm:$0xff] %vm1965, %v2050
    %2083 = vst.msk [vmem:[#allocation3 + $0xa8] sm:$0xff] %vm1965, %v2051
    %2084 = vst.msk [vmem:[#allocation3 + $0xb0] sm:$0xff] %vm1965, %v2052
    %2085 = vst.msk [vmem:[#allocation3 + $0xb8] sm:$0xff] %vm1965, %v2053
    %2086 = vst.msk [vmem:[#allocation3 + $0xc0] sm:$0xff] %vm1965, %v2054
    %2087 = vst.msk [vmem:[#allocation3 + $0xc8] sm:$0xff] %vm1965, %v2055
    %2088 = vst.msk [vmem:[#allocation3 + $0xd0] sm:$0xff] %vm1965, %v2056
    %2089 = vst.msk [vmem:[#allocation3 + $0xd8] sm:$0xff] %vm1965, %v2057
    %2090 = vst.msk [vmem:[#allocation3 + $0xe0] sm:$0xff] %vm1965, %v2058
    %2091 = vst.msk [vmem:[#allocation3 + $0xe8] sm:$0xff] %vm1965, %v2059
    %2092 = vst.msk [vmem:[#allocation3 + $0xf0] sm:$0xff] %vm1965, %v2060
    %2093 = vst.msk [vmem:[#allocation3 + $0xf8] sm:$0xff] %vm1965, %v2061
    %vm2094 = vcmp.eq.s32.totalorder %v1161, %v1306
    %vm2095 = vcmp.eq.s32.totalorder %v1162, %v1306
    %vm2096 = vcmp.eq.s32.totalorder %v1161, %v1322
    %vm2097 = vcmp.eq.s32.totalorder %v1162, %v1322
    %vm2098 = vcmp.eq.s32.totalorder %v1161, %v1338
    %vm2099 = vcmp.eq.s32.totalorder %v1162, %v1338
    %vm2100 = vcmp.eq.s32.totalorder %v1161, %v1354
    %vm2101 = vcmp.eq.s32.totalorder %v1162, %v1354
    %vm2102 = vcmp.eq.s32.totalorder %v1161, %v1370
    %vm2103 = vcmp.eq.s32.totalorder %v1162, %v1370
    %vm2104 = vcmp.eq.s32.totalorder %v1161, %v1386
    %vm2105 = vcmp.eq.s32.totalorder %v1162, %v1386
    %vm2106 = vcmp.eq.s32.totalorder %v1161, %v1402
    %vm2107 = vcmp.eq.s32.totalorder %v1162, %v1402
    %vm2108 = vcmp.eq.s32.totalorder %v1161, %v1418
    %vm2109 = vcmp.eq.s32.totalorder %v1162, %v1418
    %vm2110 = vcmp.eq.s32.totalorder %v1161, %v1434
    %vm2111 = vcmp.eq.s32.totalorder %v1162, %v1434
    %vm2112 = vcmp.eq.s32.totalorder %v1161, %v1450
    %vm2113 = vcmp.eq.s32.totalorder %v1162, %v1450
    %vm2114 = vcmp.eq.s32.totalorder %v1161, %v1466
    %vm2115 = vcmp.eq.s32.totalorder %v1162, %v1466
    %vm2116 = vcmp.eq.s32.totalorder %v1161, %v1482
    %vm2117 = vcmp.eq.s32.totalorder %v1162, %v1482
    %vm2118 = vcmp.eq.s32.totalorder %v1161, %v1498
    %vm2119 = vcmp.eq.s32.totalorder %v1162, %v1498
    %vm2120 = vcmp.eq.s32.totalorder %v1161, %v1514
    %vm2121 = vcmp.eq.s32.totalorder %v1162, %v1514
    %vm2122 = vcmp.eq.s32.totalorder %v1161, %v1530
    %vm2123 = vcmp.eq.s32.totalorder %v1162, %v1530
    %vm2124 = vcmp.eq.s32.totalorder %v1161, %v1546
    %vm2125 = vcmp.eq.s32.totalorder %v1162, %v1546
    %vm2126 = vcmp.eq.s32.totalorder %v1161, %v1562
    %vm2127 = vcmp.eq.s32.totalorder %v1162, %v1562
    %vm2128 = vcmp.eq.s32.totalorder %v1161, %v1578
    %vm2129 = vcmp.eq.s32.totalorder %v1162, %v1578
    %vm2130 = vcmp.eq.s32.totalorder %v1161, %v1594
    %vm2131 = vcmp.eq.s32.totalorder %v1162, %v1594
    %vm2132 = vcmp.eq.s32.totalorder %v1161, %v1610
    %vm2133 = vcmp.eq.s32.totalorder %v1162, %v1610
    %vm2134 = vcmp.eq.s32.totalorder %v1161, %v1626
    %vm2135 = vcmp.eq.s32.totalorder %v1162, %v1626
    %vm2136 = vcmp.eq.s32.totalorder %v1161, %v1642
    %vm2137 = vcmp.eq.s32.totalorder %v1162, %v1642
    %vm2138 = vcmp.eq.s32.totalorder %v1161, %v1658
    %vm2139 = vcmp.eq.s32.totalorder %v1162, %v1658
    %vm2140 = vcmp.eq.s32.totalorder %v1161, %v1674
    %vm2141 = vcmp.eq.s32.totalorder %v1162, %v1674
    %vm2142 = vcmp.eq.s32.totalorder %v1161, %v1690
    %vm2143 = vcmp.eq.s32.totalorder %v1162, %v1690
    %vm2144 = vcmp.eq.s32.totalorder %v1161, %v1706
    %vm2145 = vcmp.eq.s32.totalorder %v1162, %v1706
    %vm2146 = vcmp.eq.s32.totalorder %v1161, %v1722
    %vm2147 = vcmp.eq.s32.totalorder %v1162, %v1722
    %vm2148 = vcmp.eq.s32.totalorder %v1161, %v1738
    %vm2149 = vcmp.eq.s32.totalorder %v1162, %v1738
    %vm2150 = vcmp.eq.s32.totalorder %v1161, %v1754
    %vm2151 = vcmp.eq.s32.totalorder %v1162, %v1754
    %vm2152 = vcmp.eq.s32.totalorder %v1161, %v1770
    %vm2153 = vcmp.eq.s32.totalorder %v1162, %v1770
    %vm2154 = vcmp.eq.s32.totalorder %v1161, %v1786
    %vm2155 = vcmp.eq.s32.totalorder %v1162, %v1786
    %vm2156 = vcmp.eq.s32.totalorder %v1161, %v1802
    %vm2157 = vcmp.eq.s32.totalorder %v1162, %v1802
    %v2158 = vsel %vm2094, 1, 0
    %v2159 = vsel %vm2095, 1, 0
    %v2160 = vsel %vm2096, 1, 0
    %v2161 = vsel %vm2097, 1, 0
    %v2162 = vsel %vm2098, 1, 0
    %v2163 = vsel %vm2099, 1, 0
    %v2164 = vsel %vm2100, 1, 0
    %v2165 = vsel %vm2101, 1, 0
    %v2166 = vsel %vm2102, 1, 0
    %v2167 = vsel %vm2103, 1, 0
    %v2168 = vsel %vm2104, 1, 0
    %v2169 = vsel %vm2105, 1, 0
    %v2170 = vsel %vm2106, 1, 0
    %v2171 = vsel %vm2107, 1, 0
    %v2172 = vsel %vm2108, 1, 0
    %v2173 = vsel %vm2109, 1, 0
    %v2174 = vsel %vm2110, 1, 0
    %v2175 = vsel %vm2111, 1, 0
    %v2176 = vsel %vm2112, 1, 0
    %v2177 = vsel %vm2113, 1, 0
    %v2178 = vsel %vm2114, 1, 0
    %v2179 = vsel %vm2115, 1, 0
    %v2180 = vsel %vm2116, 1, 0
    %v2181 = vsel %vm2117, 1, 0
    %v2182 = vsel %vm2118, 1, 0
    %v2183 = vsel %vm2119, 1, 0
    %v2184 = vsel %vm2120, 1, 0
    %v2185 = vsel %vm2121, 1, 0
    %v2186 = vsel %vm2122, 1, 0
    %v2187 = vsel %vm2123, 1, 0
    %v2188 = vsel %vm2124, 1, 0
    %v2189 = vsel %vm2125, 1, 0
    %v2190 = vsel %vm2126, 1, 0
    %v2191 = vsel %vm2127, 1, 0
    %v2192 = vsel %vm2128, 1, 0
    %v2193 = vsel %vm2129, 1, 0
    %v2194 = vsel %vm2130, 1, 0
    %v2195 = vsel %vm2131, 1, 0
    %v2196 = vsel %vm2132, 1, 0
    %v2197 = vsel %vm2133, 1, 0
    %v2198 = vsel %vm2134, 1, 0
    %v2199 = vsel %vm2135, 1, 0
    %v2200 = vsel %vm2136, 1, 0
    %v2201 = vsel %vm2137, 1, 0
    %v2202 = vsel %vm2138, 1, 0
    %v2203 = vsel %vm2139, 1, 0
    %v2204 = vsel %vm2140, 1, 0
    %v2205 = vsel %vm2141, 1, 0
    %v2206 = vsel %vm2142, 1, 0
    %v2207 = vsel %vm2143, 1, 0
    %v2208 = vsel %vm2144, 1, 0
    %v2209 = vsel %vm2145, 1, 0
    %v2210 = vsel %vm2146, 1, 0
    %v2211 = vsel %vm2147, 1, 0
    %v2212 = vsel %vm2148, 1, 0
    %v2213 = vsel %vm2149, 1, 0
    %v2214 = vsel %vm2150, 1, 0
    %v2215 = vsel %vm2151, 1, 0
    %v2216 = vsel %vm2152, 1, 0
    %v2217 = vsel %vm2153, 1, 0
    %v2218 = vsel %vm2154, 1, 0
    %v2219 = vsel %vm2155, 1, 0
    %v2220 = vsel %vm2156, 1, 0
    %v2221 = vsel %vm2157, 1, 0
    %v2222 = vcvt.s32.f32 %v2158
    %v2223 = vcvt.s32.f32 %v2159
    %v2224 = vcvt.s32.f32 %v2160
    %v2225 = vcvt.s32.f32 %v2161
    %v2226 = vcvt.s32.f32 %v2162
    %v2227 = vcvt.s32.f32 %v2163
    %v2228 = vcvt.s32.f32 %v2164
    %v2229 = vcvt.s32.f32 %v2165
    %v2230 = vcvt.s32.f32 %v2166
    %v2231 = vcvt.s32.f32 %v2167
    %v2232 = vcvt.s32.f32 %v2168
    %v2233 = vcvt.s32.f32 %v2169
    %v2234 = vcvt.s32.f32 %v2170
    %v2235 = vcvt.s32.f32 %v2171
    %v2236 = vcvt.s32.f32 %v2172
    %v2237 = vcvt.s32.f32 %v2173
    %v2238 = vcvt.s32.f32 %v2174
    %v2239 = vcvt.s32.f32 %v2175
    %v2240 = vcvt.s32.f32 %v2176
    %v2241 = vcvt.s32.f32 %v2177
    %v2242 = vcvt.s32.f32 %v2178
    %v2243 = vcvt.s32.f32 %v2179
    %v2244 = vcvt.s32.f32 %v2180
    %v2245 = vcvt.s32.f32 %v2181
    %v2246 = vcvt.s32.f32 %v2182
    %v2247 = vcvt.s32.f32 %v2183
    %v2248 = vcvt.s32.f32 %v2184
    %v2249 = vcvt.s32.f32 %v2185
    %v2250 = vcvt.s32.f32 %v2186
    %v2251 = vcvt.s32.f32 %v2187
    %v2252 = vcvt.s32.f32 %v2188
    %v2253 = vcvt.s32.f32 %v2189
    %v2254 = vcvt.s32.f32 %v2190
    %v2255 = vcvt.s32.f32 %v2191
    %v2256 = vcvt.s32.f32 %v2192
    %v2257 = vcvt.s32.f32 %v2193
    %v2258 = vcvt.s32.f32 %v2194
    %v2259 = vcvt.s32.f32 %v2195
    %v2260 = vcvt.s32.f32 %v2196
    %v2261 = vcvt.s32.f32 %v2197
    %v2262 = vcvt.s32.f32 %v2198
    %v2263 = vcvt.s32.f32 %v2199
    %v2264 = vcvt.s32.f32 %v2200
    %v2265 = vcvt.s32.f32 %v2201
    %v2266 = vcvt.s32.f32 %v2202
    %v2267 = vcvt.s32.f32 %v2203
    %v2268 = vcvt.s32.f32 %v2204
    %v2269 = vcvt.s32.f32 %v2205
    %v2270 = vcvt.s32.f32 %v2206
    %v2271 = vcvt.s32.f32 %v2207
    %v2272 = vcvt.s32.f32 %v2208
    %v2273 = vcvt.s32.f32 %v2209
    %v2274 = vcvt.s32.f32 %v2210
    %v2275 = vcvt.s32.f32 %v2211
    %v2276 = vcvt.s32.f32 %v2212
    %v2277 = vcvt.s32.f32 %v2213
    %v2278 = vcvt.s32.f32 %v2214
    %v2279 = vcvt.s32.f32 %v2215
    %v2280 = vcvt.s32.f32 %v2216
    %v2281 = vcvt.s32.f32 %v2217
    %v2282 = vcvt.s32.f32 %v2218
    %v2283 = vcvt.s32.f32 %v2219
    %v2284 = vcvt.s32.f32 %v2220
    %v2285 = vcvt.s32.f32 %v2221
    %2286 = vmatprep.subr.mxu0 0.0
    %2287 = vmatpush1.msra.mxu0 %v585
    %2288 = vmatprep.subr.mxu0 0.0
    %2289 = vmatpush1.msra.mxu0 %v584
    %2290 = vmatprep.subr.mxu0 0.0
    %2291 = vmatpush1.msra.mxu0 %v583
    %2292 = vmatprep.subr.mxu0 0.0
    %2293 = vmatpush1.msra.mxu0 %v582
    %2294 = vmatprep.subr.mxu0 0.0
    %2295 = vmatpush1.msra.mxu0 %v581
    %2296 = vmatprep.subr.mxu0 0.0
    %2297 = vmatpush1.msra.mxu0 %v580
    %2298 = vmatprep.subr.mxu0 0.0
    %2299 = vmatpush1.msra.mxu0 %v579
    %2300 = vmatprep.subr.mxu0 0.0
    %2301 = vmatpush1.msra.mxu0 %v578
    %2302 = vmatprep.subr.mxu0 0.0
    %2303 = vmatpush1.msra.mxu0 %v577
    %2304 = vmatprep.subr.mxu0 0.0
    %2305 = vmatpush1.msra.mxu0 %v576
    %2306 = vmatprep.subr.mxu0 0.0
    %2307 = vmatpush1.msra.mxu0 %v575
    %2308 = vmatprep.subr.mxu0 0.0
    %2309 = vmatpush1.msra.mxu0 %v574
    %2310 = vmatprep.subr.mxu0 0.0
    %2311 = vmatpush1.msra.mxu0 %v573
    %2312 = vmatprep.subr.mxu0 0.0
    %2313 = vmatpush1.msra.mxu0 %v572
    %2314 = vmatprep.subr.mxu0 0.0
    %2315 = vmatpush1.msra.mxu0 %v571
    %2316 = vmatprep.subr.mxu0 0.0
    %2317 = vmatpush1.msra.mxu0 %v570
    %2318 = vmatprep.subr.mxu0 0.0
    %2319 = vmatpush2.msra.mxu0 %v601
    %2320 = vmatprep.subr.mxu0 0.0
    %2321 = vmatpush2.msra.mxu0 %v600
    %2322 = vmatprep.subr.mxu0 0.0
    %2323 = vmatpush2.msra.mxu0 %v599
    %2324 = vmatprep.subr.mxu0 0.0
    %2325 = vmatpush2.msra.mxu0 %v598
    %2326 = vmatprep.subr.mxu0 0.0
    %2327 = vmatpush2.msra.mxu0 %v597
    %2328 = vmatprep.subr.mxu0 0.0
    %2329 = vmatpush2.msra.mxu0 %v596
    %2330 = vmatprep.subr.mxu0 0.0
    %2331 = vmatpush2.msra.mxu0 %v595
    %2332 = vmatprep.subr.mxu0 0.0
    %2333 = vmatpush2.msra.mxu0 %v594
    %2334 = vmatprep.subr.mxu0 0.0
    %2335 = vmatpush2.msra.mxu0 %v593
    %2336 = vmatprep.subr.mxu0 0.0
    %2337 = vmatpush2.msra.mxu0 %v592
    %2338 = vmatprep.subr.mxu0 0.0
    %2339 = vmatpush2.msra.mxu0 %v591
    %2340 = vmatprep.subr.mxu0 0.0
    %2341 = vmatpush2.msra.mxu0 %v590
    %2342 = vmatprep.subr.mxu0 0.0
    %2343 = vmatpush2.msra.mxu0 %v589
    %2344 = vmatprep.subr.mxu0 0.0
    %2345 = vmatpush2.msra.mxu0 %v588
    %2346 = vmatprep.subr.mxu0 0.0
    %2347 = vmatpush2.msra.mxu0 %v587
    %2348 = vmatprep.subr.mxu0 0.0
    %2349 = vmatpush2.msra.mxu0 %v586
    %2350 = vmatprep.mubr.f32.mxu0 %v2223
    %2351 = vmatmul.mubr.f32.gmra.mxu0 %v2222
    %v2352 = vpop.f32.mrf.mxu0
    %v2353 = vadd.f32 0.0, %v2352
    %v2354 = vpop.f32.mrf.mxu0
    %2355 = vmatprep.mubr.f32.mxu0 %v2225
    %2356 = vmatmul.mubr.f32.gmra.mxu0 %v2224
    %v2357 = vpop.f32.mrf.mxu0
    %v2358 = vadd.f32 0.0, %v2357
    %v2359 = vpop.f32.mrf.mxu0
    %2360 = vmatprep.mubr.f32.mxu0 %v2227
    %2361 = vmatmul.mubr.f32.gmra.mxu0 %v2226
    %v2362 = vpop.f32.mrf.mxu0
    %v2363 = vadd.f32 0.0, %v2362
    %v2364 = vpop.f32.mrf.mxu0
    %2365 = vmatprep.mubr.f32.mxu0 %v2229
    %2366 = vmatmul.mubr.f32.gmra.mxu0 %v2228
    %v2367 = vpop.f32.mrf.mxu0
    %v2368 = vadd.f32 0.0, %v2367
    %v2369 = vpop.f32.mrf.mxu0
    %2370 = vmatprep.mubr.f32.mxu0 %v2231
    %2371 = vmatmul.mubr.f32.gmra.mxu0 %v2230
    %v2372 = vpop.f32.mrf.mxu0
    %v2373 = vadd.f32 0.0, %v2372
    %v2374 = vpop.f32.mrf.mxu0
    %2375 = vmatprep.mubr.f32.mxu0 %v2233
    %2376 = vmatmul.mubr.f32.gmra.mxu0 %v2232
    %v2377 = vpop.f32.mrf.mxu0
    %v2378 = vadd.f32 0.0, %v2377
    %v2379 = vpop.f32.mrf.mxu0
    %2380 = vmatprep.mubr.f32.mxu0 %v2235
    %2381 = vmatmul.mubr.f32.gmra.mxu0 %v2234
    %v2382 = vpop.f32.mrf.mxu0
    %v2383 = vadd.f32 0.0, %v2382
    %v2384 = vpop.f32.mrf.mxu0
    %2385 = vmatprep.mubr.f32.mxu0 %v2237
    %2386 = vmatmul.mubr.f32.gmra.mxu0 %v2236
    %v2387 = vpop.f32.mrf.mxu0
    %v2388 = vadd.f32 0.0, %v2387
    %v2389 = vpop.f32.mrf.mxu0
    %2390 = vmatprep.mubr.f32.mxu0 %v2239
    %2391 = vmatmul.mubr.f32.gmra.mxu0 %v2238
    %v2392 = vpop.f32.mrf.mxu0
    %v2393 = vadd.f32 0.0, %v2392
    %v2394 = vpop.f32.mrf.mxu0
    %2395 = vmatprep.mubr.f32.mxu0 %v2241
    %2396 = vmatmul.mubr.f32.gmra.mxu0 %v2240
    %v2397 = vpop.f32.mrf.mxu0
    %v2398 = vadd.f32 0.0, %v2397
    %v2399 = vpop.f32.mrf.mxu0
    %2400 = vmatprep.mubr.f32.mxu0 %v2243
    %2401 = vmatmul.mubr.f32.gmra.mxu0 %v2242
    %v2402 = vpop.f32.mrf.mxu0
    %v2403 = vadd.f32 0.0, %v2402
    %v2404 = vpop.f32.mrf.mxu0
    %2405 = vmatprep.mubr.f32.mxu0 %v2245
    %2406 = vmatmul.mubr.f32.gmra.mxu0 %v2244
    %v2407 = vpop.f32.mrf.mxu0
    %v2408 = vadd.f32 0.0, %v2407
    %v2409 = vpop.f32.mrf.mxu0
    %2410 = vmatprep.mubr.f32.mxu0 %v2247
    %2411 = vmatmul.mubr.f32.gmra.mxu0 %v2246
    %v2412 = vpop.f32.mrf.mxu0
    %v2413 = vadd.f32 0.0, %v2412
    %v2414 = vpop.f32.mrf.mxu0
    %2415 = vmatprep.mubr.f32.mxu0 %v2249
    %2416 = vmatmul.mubr.f32.gmra.mxu0 %v2248
    %v2417 = vpop.f32.mrf.mxu0
    %v2418 = vadd.f32 0.0, %v2417
    %v2419 = vpop.f32.mrf.mxu0
    %2420 = vmatprep.mubr.f32.mxu0 %v2251
    %2421 = vmatmul.mubr.f32.gmra.mxu0 %v2250
    %v2422 = vpop.f32.mrf.mxu0
    %v2423 = vadd.f32 0.0, %v2422
    %v2424 = vpop.f32.mrf.mxu0
    %2425 = vmatprep.mubr.f32.mxu0 %v2253
    %2426 = vmatmul.mubr.f32.gmra.mxu0 %v2252
    %v2427 = vpop.f32.mrf.mxu0
    %v2428 = vadd.f32 0.0, %v2427
    %v2429 = vpop.f32.mrf.mxu0
    %2430 = vmatprep.mubr.f32.mxu0 %v2255
    %2431 = vmatmul.mubr.f32.gmra.mxu0 %v2254
    %v2432 = vpop.f32.mrf.mxu0
    %v2433 = vadd.f32 0.0, %v2432
    %v2434 = vpop.f32.mrf.mxu0
    %2435 = vmatprep.mubr.f32.mxu0 %v2257
    %2436 = vmatmul.mubr.f32.gmra.mxu0 %v2256
    %v2437 = vpop.f32.mrf.mxu0
    %v2438 = vadd.f32 0.0, %v2437
    %v2439 = vpop.f32.mrf.mxu0
    %2440 = vmatprep.mubr.f32.mxu0 %v2259
    %2441 = vmatmul.mubr.f32.gmra.mxu0 %v2258
    %v2442 = vpop.f32.mrf.mxu0
    %v2443 = vadd.f32 0.0, %v2442
    %v2444 = vpop.f32.mrf.mxu0
    %2445 = vmatprep.mubr.f32.mxu0 %v2261
    %2446 = vmatmul.mubr.f32.gmra.mxu0 %v2260
    %v2447 = vpop.f32.mrf.mxu0
    %v2448 = vadd.f32 0.0, %v2447
    %v2449 = vpop.f32.mrf.mxu0
    %2450 = vmatprep.mubr.f32.mxu0 %v2263
    %2451 = vmatmul.mubr.f32.gmra.mxu0 %v2262
    %v2452 = vpop.f32.mrf.mxu0
    %v2453 = vadd.f32 0.0, %v2452
    %v2454 = vpop.f32.mrf.mxu0
    %2455 = vmatprep.mubr.f32.mxu0 %v2265
    %2456 = vmatmul.mubr.f32.gmra.mxu0 %v2264
    %v2457 = vpop.f32.mrf.mxu0
    %v2458 = vadd.f32 0.0, %v2457
    %v2459 = vpop.f32.mrf.mxu0
    %2460 = vmatprep.mubr.f32.mxu0 %v2267
    %2461 = vmatmul.mubr.f32.gmra.mxu0 %v2266
    %v2462 = vpop.f32.mrf.mxu0
    %v2463 = vadd.f32 0.0, %v2462
    %v2464 = vpop.f32.mrf.mxu0
    %2465 = vmatprep.mubr.f32.mxu0 %v2269
    %2466 = vmatmul.mubr.f32.gmra.mxu0 %v2268
    %v2467 = vpop.f32.mrf.mxu0
    %v2468 = vadd.f32 0.0, %v2467
    %v2469 = vpop.f32.mrf.mxu0
    %2470 = vmatprep.mubr.f32.mxu0 %v2271
    %2471 = vmatmul.mubr.f32.gmra.mxu0 %v2270
    %v2472 = vpop.f32.mrf.mxu0
    %v2473 = vadd.f32 0.0, %v2472
    %v2474 = vpop.f32.mrf.mxu0
    %2475 = vmatprep.mubr.f32.mxu0 %v2273
    %2476 = vmatmul.mubr.f32.gmra.mxu0 %v2272
    %v2477 = vpop.f32.mrf.mxu0
    %v2478 = vadd.f32 0.0, %v2477
    %v2479 = vpop.f32.mrf.mxu0
    %2480 = vmatprep.mubr.f32.mxu0 %v2275
    %2481 = vmatmul.mubr.f32.gmra.mxu0 %v2274
    %v2482 = vpop.f32.mrf.mxu0
    %v2483 = vadd.f32 0.0, %v2482
    %v2484 = vpop.f32.mrf.mxu0
    %2485 = vmatprep.mubr.f32.mxu0 %v2277
    %2486 = vmatmul.mubr.f32.gmra.mxu0 %v2276
    %v2487 = vpop.f32.mrf.mxu0
    %v2488 = vadd.f32 0.0, %v2487
    %v2489 = vpop.f32.mrf.mxu0
    %2490 = vmatprep.mubr.f32.mxu0 %v2279
    %2491 = vmatmul.mubr.f32.gmra.mxu0 %v2278
    %v2492 = vpop.f32.mrf.mxu0
    %v2493 = vadd.f32 0.0, %v2492
    %v2494 = vpop.f32.mrf.mxu0
    %2495 = vmatprep.mubr.f32.mxu0 %v2281
    %2496 = vmatmul.mubr.f32.gmra.mxu0 %v2280
    %v2497 = vpop.f32.mrf.mxu0
    %v2498 = vadd.f32 0.0, %v2497
    %v2499 = vpop.f32.mrf.mxu0
    %2500 = vmatprep.mubr.f32.mxu0 %v2283
    %2501 = vmatmul.mubr.f32.gmra.mxu0 %v2282
    %v2502 = vpop.f32.mrf.mxu0
    %v2503 = vadd.f32 0.0, %v2502
    %v2504 = vpop.f32.mrf.mxu0
    %2505 = vmatprep.mubr.f32.mxu0 %v2285
    %2506 = vmatmul.mubr.f32.gmra.mxu0 %v2284
    %v2507 = vpop.f32.mrf.mxu0
    %v2508 = vadd.f32 0.0, %v2507
    %v2509 = vpop.f32.mrf.mxu0
    %2510 = vdwg.mxu0
    %v2511 = vld [vmem:[%s3] sm:$0xff]
    %v2512 = vld [vmem:[%s3 + $0x8] sm:$0xff]
    %v2513 = vld [vmem:[%s3 + $0x10] sm:$0xff]
    %v2514 = vld [vmem:[%s3 + $0x18] sm:$0xff]
    %v2515 = vld [vmem:[%s3 + $0x20] sm:$0xff]
    %v2516 = vld [vmem:[%s3 + $0x28] sm:$0xff]
    %v2517 = vld [vmem:[%s3 + $0x30] sm:$0xff]
    %v2518 = vld [vmem:[%s3 + $0x38] sm:$0xff]
    %v2519 = vld [vmem:[%s3 + $0x40] sm:$0xff]
    %v2520 = vld [vmem:[%s3 + $0x48] sm:$0xff]
    %v2521 = vld [vmem:[%s3 + $0x50] sm:$0xff]
    %v2522 = vld [vmem:[%s3 + $0x58] sm:$0xff]
    %v2523 = vld [vmem:[%s3 + $0x60] sm:$0xff]
    %v2524 = vld [vmem:[%s3 + $0x68] sm:$0xff]
    %v2525 = vld [vmem:[%s3 + $0x70] sm:$0xff]
    %v2526 = vld [vmem:[%s3 + $0x78] sm:$0xff]
    %v2527 = vld [vmem:[%s3 + $0x80] sm:$0xff]
    %v2528 = vld [vmem:[%s3 + $0x88] sm:$0xff]
    %v2529 = vld [vmem:[%s3 + $0x90] sm:$0xff]
    %v2530 = vld [vmem:[%s3 + $0x98] sm:$0xff]
    %v2531 = vld [vmem:[%s3 + $0xa0] sm:$0xff]
    %v2532 = vld [vmem:[%s3 + $0xa8] sm:$0xff]
    %v2533 = vld [vmem:[%s3 + $0xb0] sm:$0xff]
    %v2534 = vld [vmem:[%s3 + $0xb8] sm:$0xff]
    %v2535 = vld [vmem:[%s3 + $0xc0] sm:$0xff]
    %v2536 = vld [vmem:[%s3 + $0xc8] sm:$0xff]
    %v2537 = vld [vmem:[%s3 + $0xd0] sm:$0xff]
    %v2538 = vld [vmem:[%s3 + $0xd8] sm:$0xff]
    %v2539 = vld [vmem:[%s3 + $0xe0] sm:$0xff]
    %v2540 = vld [vmem:[%s3 + $0xe8] sm:$0xff]
    %v2541 = vld [vmem:[%s3 + $0xf0] sm:$0xff]
    %v2542 = vld [vmem:[%s3 + $0xf8] sm:$0xff]
    %v2543 = vsel %vm1835, 1, 0
    %v2544 = vsel %vm1836, 1, 0
    %v2545 = vsel %vm1837, 1, 0
    %v2546 = vsel %vm1838, 1, 0
    %v2547 = vsel %vm1839, 1, 0
    %v2548 = vsel %vm1840, 1, 0
    %v2549 = vsel %vm1841, 1, 0
    %v2550 = vsel %vm1842, 1, 0
    %v2551 = vsel %vm1843, 1, 0
    %v2552 = vsel %vm1844, 1, 0
    %v2553 = vsel %vm1845, 1, 0
    %v2554 = vsel %vm1846, 1, 0
    %v2555 = vsel %vm1847, 1, 0
    %v2556 = vsel %vm1848, 1, 0
    %v2557 = vsel %vm1849, 1, 0
    %v2558 = vsel %vm1850, 1, 0
    %v2559 = vsel %vm1851, 1, 0
    %v2560 = vsel %vm1852, 1, 0
    %v2561 = vsel %vm1853, 1, 0
    %v2562 = vsel %vm1854, 1, 0
    %v2563 = vsel %vm1855, 1, 0
    %v2564 = vsel %vm1856, 1, 0
    %v2565 = vsel %vm1857, 1, 0
    %v2566 = vsel %vm1858, 1, 0
    %v2567 = vsel %vm1859, 1, 0
    %v2568 = vsel %vm1860, 1, 0
    %v2569 = vsel %vm1861, 1, 0
    %v2570 = vsel %vm1862, 1, 0
    %v2571 = vsel %vm1863, 1, 0
    %v2572 = vsel %vm1864, 1, 0
    %v2573 = vsel %vm1865, 1, 0
    %v2574 = vsel %vm1866, 1, 0
    %2575 = vset.pattern.permute.xlu0 0
    %2576 = vperm.xlu0 %2575, %v2543
    %v2577 = vpop.permute.xlu0 %2576
    %2578 = vset.pattern.permute.xlu0 0
    %2579 = vperm.xlu0 %2578, %v2544
    %v2580 = vpop.permute.xlu0 %2579
    %2581 = vset.pattern.permute.xlu0 0
    %2582 = vperm.xlu0 %2581, %v2545
    %v2583 = vpop.permute.xlu0 %2582
    %2584 = vset.pattern.permute.xlu0 0
    %2585 = vperm.xlu0 %2584, %v2546
    %v2586 = vpop.permute.xlu0 %2585
    %2587 = vset.pattern.permute.xlu0 0
    %2588 = vperm.xlu0 %2587, %v2547
    %v2589 = vpop.permute.xlu0 %2588
    %2590 = vset.pattern.permute.xlu0 0
    %2591 = vperm.xlu0 %2590, %v2548
    %v2592 = vpop.permute.xlu0 %2591
    %2593 = vset.pattern.permute.xlu0 0
    %2594 = vperm.xlu0 %2593, %v2549
    %v2595 = vpop.permute.xlu0 %2594
    %2596 = vset.pattern.permute.xlu0 0
    %2597 = vperm.xlu0 %2596, %v2550
    %v2598 = vpop.permute.xlu0 %2597
    %2599 = vset.pattern.permute.xlu0 0
    %2600 = vperm.xlu0 %2599, %v2551
    %v2601 = vpop.permute.xlu0 %2600
    %2602 = vset.pattern.permute.xlu0 0
    %2603 = vperm.xlu0 %2602, %v2552
    %v2604 = vpop.permute.xlu0 %2603
    %2605 = vset.pattern.permute.xlu0 0
    %2606 = vperm.xlu0 %2605, %v2553
    %v2607 = vpop.permute.xlu0 %2606
    %2608 = vset.pattern.permute.xlu0 0
    %2609 = vperm.xlu0 %2608, %v2554
    %v2610 = vpop.permute.xlu0 %2609
    %2611 = vset.pattern.permute.xlu0 0
    %2612 = vperm.xlu0 %2611, %v2555
    %v2613 = vpop.permute.xlu0 %2612
    %2614 = vset.pattern.permute.xlu0 0
    %2615 = vperm.xlu0 %2614, %v2556
    %v2616 = vpop.permute.xlu0 %2615
    %2617 = vset.pattern.permute.xlu0 0
    %2618 = vperm.xlu0 %2617, %v2557
    %v2619 = vpop.permute.xlu0 %2618
    %2620 = vset.pattern.permute.xlu0 0
    %2621 = vperm.xlu0 %2620, %v2558
    %v2622 = vpop.permute.xlu0 %2621
    %2623 = vset.pattern.permute.xlu0 0
    %2624 = vperm.xlu0 %2623, %v2559
    %v2625 = vpop.permute.xlu0 %2624
    %2626 = vset.pattern.permute.xlu0 0
    %2627 = vperm.xlu0 %2626, %v2560
    %v2628 = vpop.permute.xlu0 %2627
    %2629 = vset.pattern.permute.xlu0 0
    %2630 = vperm.xlu0 %2629, %v2561
    %v2631 = vpop.permute.xlu0 %2630
    %2632 = vset.pattern.permute.xlu0 0
    %2633 = vperm.xlu0 %2632, %v2562
    %v2634 = vpop.permute.xlu0 %2633
    %2635 = vset.pattern.permute.xlu0 0
    %2636 = vperm.xlu0 %2635, %v2563
    %v2637 = vpop.permute.xlu0 %2636
    %2638 = vset.pattern.permute.xlu0 0
    %2639 = vperm.xlu0 %2638, %v2564
    %v2640 = vpop.permute.xlu0 %2639
    %2641 = vset.pattern.permute.xlu0 0
    %2642 = vperm.xlu0 %2641, %v2565
    %v2643 = vpop.permute.xlu0 %2642
    %2644 = vset.pattern.permute.xlu0 0
    %2645 = vperm.xlu0 %2644, %v2566
    %v2646 = vpop.permute.xlu0 %2645
    %2647 = vset.pattern.permute.xlu0 0
    %2648 = vperm.xlu0 %2647, %v2567
    %v2649 = vpop.permute.xlu0 %2648
    %2650 = vset.pattern.permute.xlu0 0
    %2651 = vperm.xlu0 %2650, %v2568
    %v2652 = vpop.permute.xlu0 %2651
    %2653 = vset.pattern.permute.xlu0 0
    %2654 = vperm.xlu0 %2653, %v2569
    %v2655 = vpop.permute.xlu0 %2654
    %2656 = vset.pattern.permute.xlu0 0
    %2657 = vperm.xlu0 %2656, %v2570
    %v2658 = vpop.permute.xlu0 %2657
    %2659 = vset.pattern.permute.xlu0 0
    %2660 = vperm.xlu0 %2659, %v2571
    %v2661 = vpop.permute.xlu0 %2660
    %2662 = vset.pattern.permute.xlu0 0
    %2663 = vperm.xlu0 %2662, %v2572
    %v2664 = vpop.permute.xlu0 %2663
    %2665 = vset.pattern.permute.xlu0 0
    %2666 = vperm.xlu0 %2665, %v2573
    %v2667 = vpop.permute.xlu0 %2666
    %2668 = vset.pattern.permute.xlu0 0
    %2669 = vperm.xlu0 %2668, %v2574
    %v2670 = vpop.permute.xlu0 %2669
    %vm2671 = vcmp.eq.s32.totalorder %v2577, 1
    %vm2672 = vcmp.eq.s32.totalorder %v2580, 1
    %vm2673 = vcmp.eq.s32.totalorder %v2583, 1
    %vm2674 = vcmp.eq.s32.totalorder %v2586, 1
    %vm2675 = vcmp.eq.s32.totalorder %v2589, 1
    %vm2676 = vcmp.eq.s32.totalorder %v2592, 1
    %vm2677 = vcmp.eq.s32.totalorder %v2595, 1
    %vm2678 = vcmp.eq.s32.totalorder %v2598, 1
    %vm2679 = vcmp.eq.s32.totalorder %v2601, 1
    %vm2680 = vcmp.eq.s32.totalorder %v2604, 1
    %vm2681 = vcmp.eq.s32.totalorder %v2607, 1
    %vm2682 = vcmp.eq.s32.totalorder %v2610, 1
    %vm2683 = vcmp.eq.s32.totalorder %v2613, 1
    %vm2684 = vcmp.eq.s32.totalorder %v2616, 1
    %vm2685 = vcmp.eq.s32.totalorder %v2619, 1
    %vm2686 = vcmp.eq.s32.totalorder %v2622, 1
    %vm2687 = vcmp.eq.s32.totalorder %v2625, 1
    %vm2688 = vcmp.eq.s32.totalorder %v2628, 1
    %vm2689 = vcmp.eq.s32.totalorder %v2631, 1
    %vm2690 = vcmp.eq.s32.totalorder %v2634, 1
    %vm2691 = vcmp.eq.s32.totalorder %v2637, 1
    %vm2692 = vcmp.eq.s32.totalorder %v2640, 1
    %vm2693 = vcmp.eq.s32.totalorder %v2643, 1
    %vm2694 = vcmp.eq.s32.totalorder %v2646, 1
    %vm2695 = vcmp.eq.s32.totalorder %v2649, 1
    %vm2696 = vcmp.eq.s32.totalorder %v2652, 1
    %vm2697 = vcmp.eq.s32.totalorder %v2655, 1
    %vm2698 = vcmp.eq.s32.totalorder %v2658, 1
    %vm2699 = vcmp.eq.s32.totalorder %v2661, 1
    %vm2700 = vcmp.eq.s32.totalorder %v2664, 1
    %vm2701 = vcmp.eq.s32.totalorder %v2667, 1
    %vm2702 = vcmp.eq.s32.totalorder %v2670, 1
    %v2703 = vsel %vm2671, %v2353, %v2511
    %v2704 = vsel %vm2672, %v2358, %v2512
    %v2705 = vsel %vm2673, %v2363, %v2513
    %v2706 = vsel %vm2674, %v2368, %v2514
    %v2707 = vsel %vm2675, %v2373, %v2515
    %v2708 = vsel %vm2676, %v2378, %v2516
    %v2709 = vsel %vm2677, %v2383, %v2517
    %v2710 = vsel %vm2678, %v2388, %v2518
    %v2711 = vsel %vm2679, %v2393, %v2519
    %v2712 = vsel %vm2680, %v2398, %v2520
    %v2713 = vsel %vm2681, %v2403, %v2521
    %v2714 = vsel %vm2682, %v2408, %v2522
    %v2715 = vsel %vm2683, %v2413, %v2523
    %v2716 = vsel %vm2684, %v2418, %v2524
    %v2717 = vsel %vm2685, %v2423, %v2525
    %v2718 = vsel %vm2686, %v2428, %v2526
    %v2719 = vsel %vm2687, %v2433, %v2527
    %v2720 = vsel %vm2688, %v2438, %v2528
    %v2721 = vsel %vm2689, %v2443, %v2529
    %v2722 = vsel %vm2690, %v2448, %v2530
    %v2723 = vsel %vm2691, %v2453, %v2531
    %v2724 = vsel %vm2692, %v2458, %v2532
    %v2725 = vsel %vm2693, %v2463, %v2533
    %v2726 = vsel %vm2694, %v2468, %v2534
    %v2727 = vsel %vm2695, %v2473, %v2535
    %v2728 = vsel %vm2696, %v2478, %v2536
    %v2729 = vsel %vm2697, %v2483, %v2537
    %v2730 = vsel %vm2698, %v2488, %v2538
    %v2731 = vsel %vm2699, %v2493, %v2539
    %v2732 = vsel %vm2700, %v2498, %v2540
    %v2733 = vsel %vm2701, %v2503, %v2541
    %v2734 = vsel %vm2702, %v2508, %v2542
    %2735 = vst.msk [vmem:[%s3] sm:$0xff] %vm635, %v2703
    %2736 = vst.msk [vmem:[%s3 + $0x8] sm:$0xff] %vm635, %v2704
    %2737 = vst.msk [vmem:[%s3 + $0x10] sm:$0xff] %vm635, %v2705
    %2738 = vst.msk [vmem:[%s3 + $0x18] sm:$0xff] %vm635, %v2706
    %2739 = vst.msk [vmem:[%s3 + $0x20] sm:$0xff] %vm635, %v2707
    %2740 = vst.msk [vmem:[%s3 + $0x28] sm:$0xff] %vm635, %v2708
    %2741 = vst.msk [vmem:[%s3 + $0x30] sm:$0xff] %vm635, %v2709
    %2742 = vst.msk [vmem:[%s3 + $0x38] sm:$0xff] %vm635, %v2710
    %2743 = vst.msk [vmem:[%s3 + $0x40] sm:$0xff] %vm635, %v2711
    %2744 = vst.msk [vmem:[%s3 + $0x48] sm:$0xff] %vm635, %v2712
    %2745 = vst.msk [vmem:[%s3 + $0x50] sm:$0xff] %vm635, %v2713
    %2746 = vst.msk [vmem:[%s3 + $0x58] sm:$0xff] %vm635, %v2714
    %2747 = vst.msk [vmem:[%s3 + $0x60] sm:$0xff] %vm635, %v2715
    %2748 = vst.msk [vmem:[%s3 + $0x68] sm:$0xff] %vm635, %v2716
    %2749 = vst.msk [vmem:[%s3 + $0x70] sm:$0xff] %vm635, %v2717
    %2750 = vst.msk [vmem:[%s3 + $0x78] sm:$0xff] %vm635, %v2718
    %2751 = vst.msk [vmem:[%s3 + $0x80] sm:$0xff] %vm635, %v2719
    %2752 = vst.msk [vmem:[%s3 + $0x88] sm:$0xff] %vm635, %v2720
    %2753 = vst.msk [vmem:[%s3 + $0x90] sm:$0xff] %vm635, %v2721
    %2754 = vst.msk [vmem:[%s3 + $0x98] sm:$0xff] %vm635, %v2722
    %2755 = vst.msk [vmem:[%s3 + $0xa0] sm:$0xff] %vm635, %v2723
    %2756 = vst.msk [vmem:[%s3 + $0xa8] sm:$0xff] %vm635, %v2724
    %2757 = vst.msk [vmem:[%s3 + $0xb0] sm:$0xff] %vm635, %v2725
    %2758 = vst.msk [vmem:[%s3 + $0xb8] sm:$0xff] %vm635, %v2726
    %2759 = vst.msk [vmem:[%s3 + $0xc0] sm:$0xff] %vm635, %v2727
    %2760 = vst.msk [vmem:[%s3 + $0xc8] sm:$0xff] %vm635, %v2728
    %2761 = vst.msk [vmem:[%s3 + $0xd0] sm:$0xff] %vm635, %v2729
    %2762 = vst.msk [vmem:[%s3 + $0xd8] sm:$0xff] %vm635, %v2730
    %2763 = vst.msk [vmem:[%s3 + $0xe0] sm:$0xff] %vm635, %v2731
    %2764 = vst.msk [vmem:[%s3 + $0xe8] sm:$0xff] %vm635, %v2732
    %2765 = vst.msk [vmem:[%s3 + $0xf0] sm:$0xff] %vm635, %v2733
    %2766 = vst.msk [vmem:[%s3 + $0xf8] sm:$0xff] %vm635, %v2734
    // Predicated region
    $region18: #{tpu_custom_call.1} parent=1 // pred_check
      %p2767 = pneg %p19
    $region19: #{tpu_custom_call.1} parent=1 // pred_check_branch
      %2769 = sbr.rel (%p2767) target = $region21
    $region20: #{tpu_custom_call.1} parent=1 // pred_region
      %v2770 = vlaneseq
      %v2771 = vshrl.u32 %v2770, 7
      %v2772 = vadd.s32 %v2771, 8
      %v2773 = vadd.s32 %v2771, 16
      %v2774 = vadd.s32 %v2771, 24
      %v2775 = vadd.s32 %v2771, 32
      %v2776 = vadd.s32 %v2771, 40
      %v2777 = vadd.s32 %v2771, 48
      %v2778 = vadd.s32 %v2771, 56
      %v2779 = vadd.s32 %v2771, 64
      %v2780 = vadd.s32 %v2771, 72
      %v2781 = vadd.s32 %v2771, 80
      %v2782 = vadd.s32 %v2771, 88
      %v2783 = vadd.s32 %v2771, 96
      %v2784 = vadd.s32 %v2771, 104
      %v2785 = vadd.s32 %v2771, 112
      %v2786 = vadd.s32 %v2771, 120
      %v2787 = vadd.s32 %v2771, 128
      %v2788 = vadd.s32 %v2771, 136
      %v2789 = vadd.s32 %v2771, 144
      %v2790 = vadd.s32 %v2771, 152
      %v2791 = vadd.s32 %v2771, 160
      %v2792 = vadd.s32 %v2771, 168
      %v2793 = vadd.s32 %v2771, 176
      %v2794 = vadd.s32 %v2771, 184
      %v2795 = vadd.s32 %v2771, 192
      %v2796 = vadd.s32 %v2771, 200
      %v2797 = vadd.s32 %v2771, 208
      %v2798 = vadd.s32 %v2771, 216
      %v2799 = vadd.s32 %v2771, 224
      %v2800 = vadd.s32 %v2771, 232
      %v2801 = vadd.s32 %v2771, 240
      %v2802 = vadd.s32 %v2771, 248
      %s2803 = smul.u32 0, 256
      %v2804 = vstv %s2803
      %v2805 = vadd.s32 %v2771, %v2804
      %v2806 = vadd.s32 %v2772, %v2804
      %v2807 = vadd.s32 %v2773, %v2804
      %v2808 = vadd.s32 %v2774, %v2804
      %v2809 = vadd.s32 %v2775, %v2804
      %v2810 = vadd.s32 %v2776, %v2804
      %v2811 = vadd.s32 %v2777, %v2804
      %v2812 = vadd.s32 %v2778, %v2804
      %v2813 = vadd.s32 %v2779, %v2804
      %v2814 = vadd.s32 %v2780, %v2804
      %v2815 = vadd.s32 %v2781, %v2804
      %v2816 = vadd.s32 %v2782, %v2804
      %v2817 = vadd.s32 %v2783, %v2804
      %v2818 = vadd.s32 %v2784, %v2804
      %v2819 = vadd.s32 %v2785, %v2804
      %v2820 = vadd.s32 %v2786, %v2804
      %v2821 = vadd.s32 %v2787, %v2804
      %v2822 = vadd.s32 %v2788, %v2804
      %v2823 = vadd.s32 %v2789, %v2804
      %v2824 = vadd.s32 %v2790, %v2804
      %v2825 = vadd.s32 %v2791, %v2804
      %v2826 = vadd.s32 %v2792, %v2804
      %v2827 = vadd.s32 %v2793, %v2804
      %v2828 = vadd.s32 %v2794, %v2804
      %v2829 = vadd.s32 %v2795, %v2804
      %v2830 = vadd.s32 %v2796, %v2804
      %v2831 = vadd.s32 %v2797, %v2804
      %v2832 = vadd.s32 %v2798, %v2804
      %v2833 = vadd.s32 %v2799, %v2804
      %v2834 = vadd.s32 %v2800, %v2804
      %v2835 = vadd.s32 %v2801, %v2804
      %v2836 = vadd.s32 %v2802, %v2804
      %v2837 = vsub.f32 %v2703, %v538
      %v2838 = vsub.f32 %v2704, %v539
      %v2839 = vsub.f32 %v2705, %v540
      %v2840 = vsub.f32 %v2706, %v541
      %v2841 = vsub.f32 %v2707, %v542
      %v2842 = vsub.f32 %v2708, %v543
      %v2843 = vsub.f32 %v2709, %v544
      %v2844 = vsub.f32 %v2710, %v545
      %v2845 = vsub.f32 %v2711, %v546
      %v2846 = vsub.f32 %v2712, %v547
      %v2847 = vsub.f32 %v2713, %v548
      %v2848 = vsub.f32 %v2714, %v549
      %v2849 = vsub.f32 %v2715, %v550
      %v2850 = vsub.f32 %v2716, %v551
      %v2851 = vsub.f32 %v2717, %v552
      %v2852 = vsub.f32 %v2718, %v553
      %v2853 = vsub.f32 %v2719, %v554
      %v2854 = vsub.f32 %v2720, %v555
      %v2855 = vsub.f32 %v2721, %v556
      %v2856 = vsub.f32 %v2722, %v557
      %v2857 = vsub.f32 %v2723, %v558
      %v2858 = vsub.f32 %v2724, %v559
      %v2859 = vsub.f32 %v2725, %v560
      %v2860 = vsub.f32 %v2726, %v561
      %v2861 = vsub.f32 %v2727, %v562
      %v2862 = vsub.f32 %v2728, %v563
      %v2863 = vsub.f32 %v2729, %v564
      %v2864 = vsub.f32 %v2730, %v565
      %v2865 = vsub.f32 %v2731, %v566
      %v2866 = vsub.f32 %v2732, %v567
      %v2867 = vsub.f32 %v2733, %v568
      %v2868 = vsub.f32 %v2734, %v569
      %vm2869 = vcmp.lt.s32.totalorder %v2805, 16
      %vm2870 = vcmp.lt.s32.totalorder %v2806, 16
      %vm2871 = vcmp.lt.s32.totalorder %v2807, 16
      %vm2872 = vcmp.lt.s32.totalorder %v2808, 16
      %vm2873 = vcmp.lt.s32.totalorder %v2809, 16
      %vm2874 = vcmp.lt.s32.totalorder %v2810, 16
      %vm2875 = vcmp.lt.s32.totalorder %v2811, 16
      %vm2876 = vcmp.lt.s32.totalorder %v2812, 16
      %vm2877 = vcmp.lt.s32.totalorder %v2813, 16
      %vm2878 = vcmp.lt.s32.totalorder %v2814, 16
      %vm2879 = vcmp.lt.s32.totalorder %v2815, 16
      %vm2880 = vcmp.lt.s32.totalorder %v2816, 16
      %vm2881 = vcmp.lt.s32.totalorder %v2817, 16
      %vm2882 = vcmp.lt.s32.totalorder %v2818, 16
      %vm2883 = vcmp.lt.s32.totalorder %v2819, 16
      %vm2884 = vcmp.lt.s32.totalorder %v2820, 16
      %vm2885 = vcmp.lt.s32.totalorder %v2821, 16
      %vm2886 = vcmp.lt.s32.totalorder %v2822, 16
      %vm2887 = vcmp.lt.s32.totalorder %v2823, 16
      %vm2888 = vcmp.lt.s32.totalorder %v2824, 16
      %vm2889 = vcmp.lt.s32.totalorder %v2825, 16
      %vm2890 = vcmp.lt.s32.totalorder %v2826, 16
      %vm2891 = vcmp.lt.s32.totalorder %v2827, 16
      %vm2892 = vcmp.lt.s32.totalorder %v2828, 16
      %vm2893 = vcmp.lt.s32.totalorder %v2829, 16
      %vm2894 = vcmp.lt.s32.totalorder %v2830, 16
      %vm2895 = vcmp.lt.s32.totalorder %v2831, 16
      %vm2896 = vcmp.lt.s32.totalorder %v2832, 16
      %vm2897 = vcmp.lt.s32.totalorder %v2833, 16
      %vm2898 = vcmp.lt.s32.totalorder %v2834, 16
      %vm2899 = vcmp.lt.s32.totalorder %v2835, 16
      %vm2900 = vcmp.lt.s32.totalorder %v2836, 16
      %v2901 = vsel %vm2869, 1, 0
      %v2902 = vsel %vm2870, 1, 0
      %v2903 = vsel %vm2871, 1, 0
      %v2904 = vsel %vm2872, 1, 0
      %v2905 = vsel %vm2873, 1, 0
      %v2906 = vsel %vm2874, 1, 0
      %v2907 = vsel %vm2875, 1, 0
      %v2908 = vsel %vm2876, 1, 0
      %v2909 = vsel %vm2877, 1, 0
      %v2910 = vsel %vm2878, 1, 0
      %v2911 = vsel %vm2879, 1, 0
      %v2912 = vsel %vm2880, 1, 0
      %v2913 = vsel %vm2881, 1, 0
      %v2914 = vsel %vm2882, 1, 0
      %v2915 = vsel %vm2883, 1, 0
      %v2916 = vsel %vm2884, 1, 0
      %v2917 = vsel %vm2885, 1, 0
      %v2918 = vsel %vm2886, 1, 0
      %v2919 = vsel %vm2887, 1, 0
      %v2920 = vsel %vm2888, 1, 0
      %v2921 = vsel %vm2889, 1, 0
      %v2922 = vsel %vm2890, 1, 0
      %v2923 = vsel %vm2891, 1, 0
      %v2924 = vsel %vm2892, 1, 0
      %v2925 = vsel %vm2893, 1, 0
      %v2926 = vsel %vm2894, 1, 0
      %v2927 = vsel %vm2895, 1, 0
      %v2928 = vsel %vm2896, 1, 0
      %v2929 = vsel %vm2897, 1, 0
      %v2930 = vsel %vm2898, 1, 0
      %v2931 = vsel %vm2899, 1, 0
      %v2932 = vsel %vm2900, 1, 0
      %v2933 = vcvt.s32.f32 %v2901
      %v2934 = vcvt.s32.f32 %v2902
      %v2935 = vcvt.s32.f32 %v2903
      %v2936 = vcvt.s32.f32 %v2904
      %v2937 = vcvt.s32.f32 %v2905
      %v2938 = vcvt.s32.f32 %v2906
      %v2939 = vcvt.s32.f32 %v2907
      %v2940 = vcvt.s32.f32 %v2908
      %v2941 = vcvt.s32.f32 %v2909
      %v2942 = vcvt.s32.f32 %v2910
      %v2943 = vcvt.s32.f32 %v2911
      %v2944 = vcvt.s32.f32 %v2912
      %v2945 = vcvt.s32.f32 %v2913
      %v2946 = vcvt.s32.f32 %v2914
      %v2947 = vcvt.s32.f32 %v2915
      %v2948 = vcvt.s32.f32 %v2916
      %v2949 = vcvt.s32.f32 %v2917
      %v2950 = vcvt.s32.f32 %v2918
      %v2951 = vcvt.s32.f32 %v2919
      %v2952 = vcvt.s32.f32 %v2920
      %v2953 = vcvt.s32.f32 %v2921
      %v2954 = vcvt.s32.f32 %v2922
      %v2955 = vcvt.s32.f32 %v2923
      %v2956 = vcvt.s32.f32 %v2924
      %v2957 = vcvt.s32.f32 %v2925
      %v2958 = vcvt.s32.f32 %v2926
      %v2959 = vcvt.s32.f32 %v2927
      %v2960 = vcvt.s32.f32 %v2928
      %v2961 = vcvt.s32.f32 %v2929
      %v2962 = vcvt.s32.f32 %v2930
      %v2963 = vcvt.s32.f32 %v2931
      %v2964 = vcvt.s32.f32 %v2932
      %v2965 = vmul.f32 %v2837, %v2933
      %v2966 = vmul.f32 %v2838, %v2934
      %v2967 = vmul.f32 %v2839, %v2935
      %v2968 = vmul.f32 %v2840, %v2936
      %v2969 = vmul.f32 %v2841, %v2937
      %v2970 = vmul.f32 %v2842, %v2938
      %v2971 = vmul.f32 %v2843, %v2939
      %v2972 = vmul.f32 %v2844, %v2940
      %v2973 = vmul.f32 %v2845, %v2941
      %v2974 = vmul.f32 %v2846, %v2942
      %v2975 = vmul.f32 %v2847, %v2943
      %v2976 = vmul.f32 %v2848, %v2944
      %v2977 = vmul.f32 %v2849, %v2945
      %v2978 = vmul.f32 %v2850, %v2946
      %v2979 = vmul.f32 %v2851, %v2947
      %v2980 = vmul.f32 %v2852, %v2948
      %v2981 = vmul.f32 %v2853, %v2949
      %v2982 = vmul.f32 %v2854, %v2950
      %v2983 = vmul.f32 %v2855, %v2951
      %v2984 = vmul.f32 %v2856, %v2952
      %v2985 = vmul.f32 %v2857, %v2953
      %v2986 = vmul.f32 %v2858, %v2954
      %v2987 = vmul.f32 %v2859, %v2955
      %v2988 = vmul.f32 %v2860, %v2956
      %v2989 = vmul.f32 %v2861, %v2957
      %v2990 = vmul.f32 %v2862, %v2958
      %v2991 = vmul.f32 %v2863, %v2959
      %v2992 = vmul.f32 %v2864, %v2960
      %v2993 = vmul.f32 %v2865, %v2961
      %v2994 = vmul.f32 %v2866, %v2962
      %v2995 = vmul.f32 %v2867, %v2963
      %v2996 = vmul.f32 %v2868, %v2964
      %v2997 = vmul.f32 %v2965, %v2965
      %v2998 = vmul.f32 %v2966, %v2966
      %v2999 = vmul.f32 %v2967, %v2967
      %v3000 = vmul.f32 %v2968, %v2968
      %v3001 = vmul.f32 %v2969, %v2969
      %v3002 = vmul.f32 %v2970, %v2970
      %v3003 = vmul.f32 %v2971, %v2971
      %v3004 = vmul.f32 %v2972, %v2972
      %v3005 = vmul.f32 %v2973, %v2973
      %v3006 = vmul.f32 %v2974, %v2974
      %v3007 = vmul.f32 %v2975, %v2975
      %v3008 = vmul.f32 %v2976, %v2976
      %v3009 = vmul.f32 %v2977, %v2977
      %v3010 = vmul.f32 %v2978, %v2978
      %v3011 = vmul.f32 %v2979, %v2979
      %v3012 = vmul.f32 %v2980, %v2980
      %v3013 = vmul.f32 %v2981, %v2981
      %v3014 = vmul.f32 %v2982, %v2982
      %v3015 = vmul.f32 %v2983, %v2983
      %v3016 = vmul.f32 %v2984, %v2984
      %v3017 = vmul.f32 %v2985, %v2985
      %v3018 = vmul.f32 %v2986, %v2986
      %v3019 = vmul.f32 %v2987, %v2987
      %v3020 = vmul.f32 %v2988, %v2988
      %v3021 = vmul.f32 %v2989, %v2989
      %v3022 = vmul.f32 %v2990, %v2990
      %v3023 = vmul.f32 %v2991, %v2991
      %v3024 = vmul.f32 %v2992, %v2992
      %v3025 = vmul.f32 %v2993, %v2993
      %v3026 = vmul.f32 %v2994, %v2994
      %v3027 = vmul.f32 %v2995, %v2995
      %v3028 = vmul.f32 %v2996, %v2996
      %v3029 = vadd.f32 %v2997, %v2998
      %v3030 = vadd.f32 %v3029, %v2999
      %v3031 = vadd.f32 %v3030, %v3000
      %v3032 = vadd.f32 %v3031, %v3001
      %v3033 = vadd.f32 %v3032, %v3002
      %v3034 = vadd.f32 %v3033, %v3003
      %v3035 = vadd.f32 %v3034, %v3004
      %v3036 = vadd.f32 %v3035, %v3005
      %v3037 = vadd.f32 %v3036, %v3006
      %v3038 = vadd.f32 %v3037, %v3007
      %v3039 = vadd.f32 %v3038, %v3008
      %v3040 = vadd.f32 %v3039, %v3009
      %v3041 = vadd.f32 %v3040, %v3010
      %v3042 = vadd.f32 %v3041, %v3011
      %v3043 = vadd.f32 %v3042, %v3012
      %v3044 = vadd.f32 %v3043, %v3013
      %v3045 = vadd.f32 %v3044, %v3014
      %v3046 = vadd.f32 %v3045, %v3015
      %v3047 = vadd.f32 %v3046, %v3016
      %v3048 = vadd.f32 %v3047, %v3017
      %v3049 = vadd.f32 %v3048, %v3018
      %v3050 = vadd.f32 %v3049, %v3019
      %v3051 = vadd.f32 %v3050, %v3020
      %v3052 = vadd.f32 %v3051, %v3021
      %v3053 = vadd.f32 %v3052, %v3022
      %v3054 = vadd.f32 %v3053, %v3023
      %v3055 = vadd.f32 %v3054, %v3024
      %v3056 = vadd.f32 %v3055, %v3025
      %v3057 = vadd.f32 %v3056, %v3026
      %v3058 = vadd.f32 %v3057, %v3027
      %v3059 = vadd.f32 %v3058, %v3028
      %3060 = vst.msk [vmem:[#allocation4] sm:$0xff] %vm635, %v3059
    $region21: #{tpu_custom_call.1} parent=1 // pred_fallthru
      _
    // Predicated region
    $region22: #{tpu_custom_call.1} parent=1 // pred_check
      _
    $region23: #{tpu_custom_call.1} parent=1 // pred_check_branch
      %3062 = sbr.rel (0) target = $region25
    $region24: #{tpu_custom_call.1} parent=1 // pred_region
      _
    $region25: #{tpu_custom_call.1} parent=1 // pred_fallthru
      _
    // Predicated region
    $region26: #{tpu_custom_call.1} parent=1 // pred_check
      _
    $region27: #{tpu_custom_call.1} parent=1 // pred_check_branch
      %3064 = sbr.rel (0) target = $region29
    $region28: #{tpu_custom_call.1} parent=1 // pred_region
      _
    $region29: #{tpu_custom_call.1} parent=1 // pred_fallthru
      _
    // Predicated region
    $region30: #{tpu_custom_call.1} parent=1 // pred_check
      _
    $region31: #{tpu_custom_call.1} parent=1 // pred_check_branch
      %3066 = sbr.rel (0) target = $region33
    $region32: #{tpu_custom_call.1} parent=1 // pred_region
      %s3068 = ssub.s32 128, 128
      %3069 = vsyncadd [#allocation5], %s3068
      %s3071 = sshll.u32 [#allocation4], 4
      %s3072 = int_to_ptr.vmem [resolvable:$true] %s3071
      %3074 = dma.vmem_to_hbm [thread:$0]  %s3072, 128, %s5, [#allocation5]
    $region33: #{tpu_custom_call.1} parent=1 // pred_fallthru
      _
    // Predicated region
    $region34: #{tpu_custom_call.1} parent=1 // pred_check
      _
    $region35: #{tpu_custom_call.1} parent=1 // pred_check_branch
      %3076 = sbr.rel (0) target = $region37
    $region36: #{tpu_custom_call.1} parent=1 // pred_region
      _
    $region37: #{tpu_custom_call.1} parent=1 // pred_fallthru
      _
    // Predicated region
    $region38: #{tpu_custom_call.1} parent=1 // pred_check
      _
    $region39: #{tpu_custom_call.1} parent=1 // pred_check_branch
      %3078 = sbr.rel (0) target = $region41
    $region40: #{tpu_custom_call.1} parent=1 // pred_region
      _
    $region41: #{tpu_custom_call.1} parent=1 // pred_fallthru
      _
    // Predicated region
    $region42: #{tpu_custom_call.1} parent=1 // pred_check
      _
    $region43: #{tpu_custom_call.1} parent=1 // pred_check_branch
      %3080 = sbr.rel (0) target = $region45
    $region44: #{tpu_custom_call.1} parent=1 // pred_region
      %3081 = dma.done [#allocation5], 128
    $region45: #{tpu_custom_call.1} parent=1 // pred_fallthru
      _
    %3082 = vsyncpa [#allocation5], 1

</llo_original>
